<compile_context>
chip_gen: v7x
topology: tpu7x:2x2x1
jax: 0.10.0
libtpu: 0.0.40
codegen_flags: <defaults>
</compile_context>

<pallas_src>
import math
import jax
import jax.numpy as jnp
from jax import lax
from jax.experimental import pallas as pl
from jax.experimental.pallas import tpu as pltpu  # noqa: F401  (kept for TPU-specific tuning)

# ----------------------------- config ------------------------------------
D_MODEL = 32
D_FF = 64
NUM_HEADS = 4
D_HEAD = D_MODEL // NUM_HEADS        # 8 (d_q_k == d_v)
NUM_ENCODER_LAYERS = 1
NUM_DECODER_LAYERS = 1
SRC_VOCAB = 64
TGT_VOCAB = 64
MAX_SEQ_LEN = 8
EPS = 1e-6
NEG_INF = -1e9
VOCAB_PAD = 128                      # lane-dense projection width (>= TGT_VOCAB, mult of 128)
SLAB_W = 128                         # lane width of the packed parameter slabs


# --------------------------- param packing --------------------------------
def _pack(entries, dtype):
    """Pack a list of (name, 2-D array) into one (rows, SLAB_W) slab + static offsets."""
    offsets, blocks, r = {}, [], 0
    for name, a in entries:
        a = jnp.asarray(a, jnp.float32)
        h, w = a.shape
        blocks.append(jnp.zeros((h, SLAB_W), jnp.float32).at[:, :w].set(a))
        offsets[name] = (r, h, w)
        r += h
    return jnp.concatenate(blocks, axis=0).astype(dtype), offsets


# ----------------------------- fused kernel -------------------------------
def _make_kernel(batch, seq, w_off, p_off, num_enc, num_dec):
    rows = batch * seq

    def kernel(src_tok_ref, tgt_tok_ref, src_bias_ref, tgt_bias_ref, pe_ref,
               w_ref, p_ref, out_ref):

        def W(name):                           # bf16 weight slice (static offsets)
            r0, h, w = w_off[name]
            return w_ref[r0:r0 + h, 0:w]

        def P(name):                           # f32 small-param slice
            r0, h, w = p_off[name]
            return p_ref[r0:r0 + h, 0:w]

        # Precomputed additive mask biases (0 keep / -1e9 drop), block-diagonal over batch.
        src_bias = src_bias_ref[...]           # (rows, rows): key padding (enc self + cross)
        tgt_bias = tgt_bias_ref[...]           # (rows, rows): causal (dec self)
        # Positional encoding replicated once for all batches (hoisted, reused twice).
        pe = jnp.concatenate([pe_ref[...]] * batch, axis=0)          # (rows, D)

        def layer_norm(x, pre):
            # Reference LayerNormalization: alpha*(x-mean)/sqrt(std^2+eps)+bias with
            # torch.std unbiased (ddof=1).
            d = x.shape[-1]
            mean = jnp.mean(x, axis=-1, keepdims=True)
            var = jnp.sum((x - mean) ** 2, axis=-1, keepdims=True) * (1.0 / (d - 1))
            return P(pre + "a") * (x - mean) * lax.rsqrt(var + EPS) + P(pre + "b")

        def embed(tok_ref, emb_name):
            # Embedding lookup as a one-hot MXU matmul (table pre-scaled by sqrt(d_model)).
            emb = W(emb_name)
            vocab = emb.shape[0]
            onehot = (lax.broadcasted_iota(jnp.int32, (rows, vocab), 1) == tok_ref[...])
            x = jnp.dot(onehot.astype(jnp.bfloat16), emb,
                        preferred_element_type=jnp.float32)
            return x + pe

        def mha(x_q, x_kv, pre, bias):
            # Full-width fused Q/K/V projections (1/sqrt(d_k) folded into Wq).
            xq = x_q.astype(jnp.bfloat16)
            xk = xq if x_q is x_kv else x_kv.astype(jnp.bfloat16)
            q = jnp.dot(xq, W(pre + "wq"), preferred_element_type=jnp.float32)
            k = jnp.dot(xk, W(pre + "wk"), preferred_element_type=jnp.float32)
            v = jnp.dot(xk, W(pre + "wv"), preferred_element_type=jnp.float32)
            heads = []
            for h in range(NUM_HEADS):
                lo, hi = h * D_HEAD, (h + 1) * D_HEAD
                # One (rows, rows) score matmul per head over the whole batch slab;
                # cross-batch / masked entries get -1e9 and softmax to exactly 0.
                s = lax.dot_general(q[:, lo:hi], k[:, lo:hi],
                                    (((1,), (1,)), ((), ())),
                                    preferred_element_type=jnp.float32) + bias
                m = jnp.max(s, axis=-1, keepdims=True)
                e = jnp.exp(s - m)
                probs = e / jnp.sum(e, axis=-1, keepdims=True)
                heads.append(jnp.dot(probs, v[:, lo:hi],
                                     preferred_element_type=jnp.float32))
            # Lane-concat the head outputs and apply one full-width output projection.
            cat = jnp.concatenate(heads, axis=-1)                     # (rows, H*d_v)
            out = jnp.dot(cat.astype(jnp.bfloat16), W(pre + "wo"),
                          preferred_element_type=jnp.float32)
            return out + P(pre + "bo")

        def ffn(x, pre):
            hdn = jnp.dot(x.astype(jnp.bfloat16), W(pre + "w1"),
                          preferred_element_type=jnp.float32) + P(pre + "b1")
            hdn = jnp.maximum(hdn, 0.0)
            return jnp.dot(hdn.astype(jnp.bfloat16), W(pre + "w2"),
                           preferred_element_type=jnp.float32) + P(pre + "b2")

        # ------------------------------ encoder ------------------------------
        x = embed(src_tok_ref, "src_emb")
        for i in range(num_enc):
            pre = f"enc{i}_"
            x = x + layer_norm(mha(x, x, pre + "sa_", src_bias), pre + "n0_")
            x = x + layer_norm(ffn(x, pre + "ff_"), pre + "n1_")
        enc_out = layer_norm(x, "enc_norm_")

        # ------------------------------ decoder ------------------------------
        y = embed(tgt_tok_ref, "tgt_emb")
        for i in range(num_dec):
            pre = f"dec{i}_"
            y = y + layer_norm(mha(y, y, pre + "sa_", tgt_bias), pre + "n0_")
            y = y + layer_norm(mha(y, enc_out, pre + "ca_", src_bias), pre + "n1_")
            y = y + layer_norm(ffn(y, pre + "ff_"), pre + "n2_")
        y = layer_norm(y, "dec_norm_")

        # --------------------- projection + log_softmax ----------------------
        # proj_w / proj_b padded to VOCAB_PAD lanes (pad bias = -1e9 -> exp == 0),
        # so the log-softmax over the real vocab is exact and stores are lane-dense.
        logits = jnp.dot(y.astype(jnp.bfloat16), W("proj_w"),
                         preferred_element_type=jnp.float32) + P("proj_b")
        m = jnp.max(logits, axis=-1, keepdims=True)
        lse = m + jnp.log(jnp.sum(jnp.exp(logits - m), axis=-1, keepdims=True))
        out_ref[...] = logits - lse

    return kernel


# ----------------------------- wrapper -------------------------------------
def make_forward(w_off, p_off):
    """Build the jitted forward; offset tables are static (closed over)."""

    @jax.jit
    def forward(w_slab, p_slab, pe, tgt, tgt_mask, src, src_mask):
        B, S = src.shape
        rows = B * S

        # Additive attention-bias matrices (0 = keep, -1e9 = drop), computed once.
        # Block-diagonal over batch so the whole (B*S, B*S) score matrix can be used.
        eye = jnp.eye(B, dtype=bool)
        src_keep = src_mask.reshape(B, S) != 0                         # key padding
        keep_src = eye[:, None, :, None] & src_keep[None, None, :, :]  # (B,1,B,S)
        keep_src = jnp.broadcast_to(keep_src, (B, S, B, S)).reshape(rows, rows)
        tgt_keep = tgt_mask.reshape(S, S) != 0                         # causal
        keep_tgt = (eye[:, None, :, None] & tgt_keep[None, :, None, :]).reshape(rows, rows)
        src_bias = jnp.where(keep_src, 0.0, NEG_INF).astype(jnp.float32)
        tgt_bias = jnp.where(keep_tgt, 0.0, NEG_INF).astype(jnp.float32)

        kernel = _make_kernel(B, S, w_off, p_off,
                              NUM_ENCODER_LAYERS, NUM_DECODER_LAYERS)
        # Single gridless invocation: 7 operands (2 packed slabs), everything in VMEM.
        out = pl.pallas_call(
            kernel,
            out_shape=jax.ShapeDtypeStruct((rows, VOCAB_PAD), jnp.float32),
        )(src.reshape(rows, 1).astype(jnp.int32),
          tgt.reshape(rows, 1).astype(jnp.int32),
          src_bias, tgt_bias,
          pe[:S],
          w_slab, p_slab)
        return out[:, :TGT_VOCAB].reshape(B, S, TGT_VOCAB)

    return forward


# ----------------------------- init ----------------------------------------
def xavier(key, shape):
    limit = math.sqrt(6.0 / (shape[0] + shape[1]))
    return jax.random.uniform(key, shape, jnp.float32, -limit, limit)


def _init_mha(key, pre, w_entries, p_entries):
    kq, kk, kv, ko = jax.random.split(key, 4)
    # Fold 1/sqrt(d_k) into Wq; columns are head-major (matches reference split_heads).
    w_entries += [
        (pre + "wq", xavier(kq, (D_MODEL, D_MODEL)) * (1.0 / math.sqrt(D_HEAD))),
        (pre + "wk", xavier(kk, (D_MODEL, D_MODEL))),
        (pre + "wv", xavier(kv, (D_MODEL, D_MODEL))),
        (pre + "wo", xavier(ko, (D_MODEL, D_MODEL))),
    ]
    p_entries += [(pre + "bo", jnp.zeros((1, D_MODEL), jnp.float32))]


def _init_ffn(key, pre, w_entries, p_entries):
    k1, k2 = jax.random.split(key)
    w_entries += [(pre + "w1", xavier(k1, (D_MODEL, D_FF))),
                  (pre + "w2", xavier(k2, (D_FF, D_MODEL)))]
    p_entries += [(pre + "b1", jnp.zeros((1, D_FF), jnp.float32)),
                  (pre + "b2", jnp.zeros((1, D_MODEL), jnp.float32))]


def _init_norm(pre, p_entries):
    p_entries += [(pre + "a", jnp.ones((1, 1), jnp.float32)),
                  (pre + "b", jnp.zeros((1, 1), jnp.float32))]


def build_pe():
    position = jnp.arange(MAX_SEQ_LEN, dtype=jnp.float32)[:, None]
    div_term = jnp.exp(jnp.arange(0, D_MODEL, 2, dtype=jnp.float32)
                       * (-math.log(10000.0) / D_MODEL))
    pe = jnp.zeros((MAX_SEQ_LEN, D_MODEL), jnp.float32)
    pe = pe.at[:, 0::2].set(jnp.sin(position * div_term))
    pe = pe.at[:, 1::2].set(jnp.cos(position * div_term))
    return pe


def init_params(key):
    keys = jax.random.split(key, NUM_ENCODER_LAYERS + NUM_DECODER_LAYERS + 3)
    k_src, k_tgt, k_proj = keys[-3], keys[-2], keys[-1]
    w_entries, p_entries = [], []
    scale = math.sqrt(D_MODEL)             # fold sqrt(d_model) into embedding tables
    w_entries.append(("src_emb", xavier(k_src, (SRC_VOCAB, D_MODEL)) * scale))
    w_entries.append(("tgt_emb", xavier(k_tgt, (TGT_VOCAB, D_MODEL)) * scale))
    for i in range(NUM_ENCODER_LAYERS):
        ks, kf = jax.random.split(keys[i])
        pre = f"enc{i}_"
        _init_mha(ks, pre + "sa_", w_entries, p_entries)
        _init_ffn(kf, pre + "ff_", w_entries, p_entries)
        _init_norm(pre + "n0_", p_entries)
        _init_norm(pre + "n1_", p_entries)
    for i in range(NUM_DECODER_LAYERS):
        ks, kc, kf = jax.random.split(keys[NUM_ENCODER_LAYERS + i], 3)
        pre = f"dec{i}_"
        _init_mha(ks, pre + "sa_", w_entries, p_entries)
        _init_mha(kc, pre + "ca_", w_entries, p_entries)
        _init_ffn(kf, pre + "ff_", w_entries, p_entries)
        _init_norm(pre + "n0_", p_entries)
        _init_norm(pre + "n1_", p_entries)
        _init_norm(pre + "n2_", p_entries)
    _init_norm("enc_norm_", p_entries)
    _init_norm("dec_norm_", p_entries)
    # Projection padded to VOCAB_PAD lanes; padding bias = -1e9 so exp() == 0 exactly.
    proj_w = jnp.zeros((D_MODEL, VOCAB_PAD), jnp.float32).at[:, :TGT_VOCAB].set(
        xavier(k_proj, (D_MODEL, TGT_VOCAB)))
    proj_b = jnp.full((1, VOCAB_PAD), NEG_INF, jnp.float32).at[:, :TGT_VOCAB].set(0.0)
    w_entries.append(("proj_w", proj_w))
    p_entries.append(("proj_b", proj_b))

    w_slab, w_off = _pack(w_entries, jnp.bfloat16)   # all matmul weights, one operand
    p_slab, p_off = _pack(p_entries, jnp.float32)    # all biases / norm scalars, one operand
    return dict(w_slab=w_slab, w_off=w_off, p_slab=p_slab, p_off=p_off, pe=build_pe())


# ----------------------------- main ---------------------------------------
if __name__ == "__main__":
    key = jax.random.PRNGKey(0)
    k_params, k_src, k_tgt = jax.random.split(key, 3)
    params = init_params(k_params)

    B, S = 2, MAX_SEQ_LEN
    src = jax.random.randint(k_src, (B, S), 0, SRC_VOCAB, dtype=jnp.int32)
    tgt = jax.random.randint(k_tgt, (B, S), 0, TGT_VOCAB, dtype=jnp.int32)
    src_mask = jnp.ones((B, 1, 1, S), jnp.int32)                      # all valid
    tgt_mask = jnp.tril(jnp.ones((S, S), jnp.int32))[None, None]      # causal

    fwd = make_forward(params['w_off'], params['p_off'])
    out = fwd(params['w_slab'], params['p_slab'], params['pe'],
              tgt, tgt_mask, src, src_mask)
    out = jax.block_until_ready(out)
    assert out.shape == (B, S, TGT_VOCAB), out.shape
    assert bool(jnp.all(jnp.isfinite(out)))
    print("KERNEL_OK")
</pallas_src>

<mosaic_0001>
module attributes {stable_mosaic.version = 11 : i64} {
  func.func @kernel(%arg0: memref<16x1xi32, #tpu.memory_space<vmem>>, %arg1: memref<16x1xi32, #tpu.memory_space<vmem>>, %arg2: memref<16x16xf32, #tpu.memory_space<vmem>>, %arg3: memref<16x16xf32, #tpu.memory_space<vmem>>, %arg4: memref<8x32xf32, #tpu.memory_space<vmem>>, %arg5: memref<736x128xbf16, #tpu.memory_space<vmem>>, %arg6: memref<22x128xf32, #tpu.memory_space<vmem>>, %arg7: memref<16x128xf32, #tpu.memory_space<vmem>>) attributes {dimension_semantics = [], scalar_prefetch = 0 : i64, scratch_operands = 0 : i64, tpu.core_type = #tpu.core_type<tc>} {
    %c0 = arith.constant 0 : index
    %c0_0 = arith.constant 0 : index
    %0 = vector.load %arg2[%c0, %c0_0] : memref<16x16xf32, #tpu.memory_space<vmem>>, vector<16x16xf32>
    %c0_1 = arith.constant 0 : index
    %c0_2 = arith.constant 0 : index
    %1 = vector.load %arg3[%c0_1, %c0_2] : memref<16x16xf32, #tpu.memory_space<vmem>>, vector<16x16xf32>
    %c0_3 = arith.constant 0 : index
    %c0_4 = arith.constant 0 : index
    %2 = vector.load %arg4[%c0_3, %c0_4] : memref<8x32xf32, #tpu.memory_space<vmem>>, vector<8x32xf32>
    %3 = tpu.concatenate %2, %2 in 0 : vector<8x32xf32>, vector<8x32xf32> -> vector<16x32xf32>
    %c0_5 = arith.constant 0 : index
    %c0_6 = arith.constant 0 : index
    %4 = vector.load %arg5[%c0_5, %c0_6] : memref<736x128xbf16, #tpu.memory_space<vmem>>, vector<64x32xbf16>
    %5 = tpu.iota {dimensions = array<i32: 1>} : vector<16x64xi32>
    %c0_7 = arith.constant 0 : index
    %c0_8 = arith.constant 0 : index
    %6 = vector.load %arg0[%c0_7, %c0_8] : memref<16x1xi32, #tpu.memory_space<vmem>>, vector<16x1xi32>
    %7 = vector.broadcast %6 : vector<16x1xi32> to vector<16x64xi32>
    %8 = arith.cmpi eq, %5, %7 : vector<16x64xi32>
    %9 = arith.extui %8 : vector<16x64xi1> to vector<16x64xi32>
    %10 = arith.sitofp %9 : vector<16x64xi32> to vector<16x64xf32>
    %11 = arith.truncf %10 : vector<16x64xf32> to vector<16x64xbf16>
    %cst = arith.constant dense<0.000000e+00> : vector<16x32xf32>
    %12 = tpu.matmul %11, %4, %cst {dimension_numbers = #tpu.dot_dimension_numbers<[1], [0], [0], [1], [0, 0, 1, 1], [], []>} : vector<16x64xbf16>, vector<64x32xbf16>, vector<16x32xf32> -> vector<16x32xf32>
    %13 = arith.addf %12, %3 : vector<16x32xf32>
    %14 = arith.truncf %13 : vector<16x32xf32> to vector<16x32xbf16>
    %c128 = arith.constant 128 : index
    %c0_9 = arith.constant 0 : index
    %15 = vector.load %arg5[%c128, %c0_9] : memref<736x128xbf16, #tpu.memory_space<vmem>>, vector<32x32xbf16>
    %cst_10 = arith.constant dense<0.000000e+00> : vector<16x32xf32>
    %16 = tpu.matmul %14, %15, %cst_10 {dimension_numbers = #tpu.dot_dimension_numbers<[1], [0], [0], [1], [0, 0, 1, 1], [], []>} : vector<16x32xbf16>, vector<32x32xbf16>, vector<16x32xf32> -> vector<16x32xf32>
    %c160 = arith.constant 160 : index
    %c0_11 = arith.constant 0 : index
    %17 = vector.load %arg5[%c160, %c0_11] : memref<736x128xbf16, #tpu.memory_space<vmem>>, vector<32x32xbf16>
    %cst_12 = arith.constant dense<0.000000e+00> : vector<16x32xf32>
    %18 = tpu.matmul %14, %17, %cst_12 {dimension_numbers = #tpu.dot_dimension_numbers<[1], [0], [0], [1], [0, 0, 1, 1], [], []>} : vector<16x32xbf16>, vector<32x32xbf16>, vector<16x32xf32> -> vector<16x32xf32>
    %c192 = arith.constant 192 : index
    %c0_13 = arith.constant 0 : index
    %19 = vector.load %arg5[%c192, %c0_13] : memref<736x128xbf16, #tpu.memory_space<vmem>>, vector<32x32xbf16>
    %cst_14 = arith.constant dense<0.000000e+00> : vector<16x32xf32>
    %20 = tpu.matmul %14, %19, %cst_14 {dimension_numbers = #tpu.dot_dimension_numbers<[1], [0], [0], [1], [0, 0, 1, 1], [], []>} : vector<16x32xbf16>, vector<32x32xbf16>, vector<16x32xf32> -> vector<16x32xf32>
    %21 = vector.extract_strided_slice %16 {offsets = [0, 0], sizes = [16, 8], strides = [1, 1]} : vector<16x32xf32> to vector<16x8xf32>
    %22 = vector.extract_strided_slice %18 {offsets = [0, 0], sizes = [16, 8], strides = [1, 1]} : vector<16x32xf32> to vector<16x8xf32>
    %cst_15 = arith.constant dense<0.000000e+00> : vector<16x16xf32>
    %23 = tpu.matmul %21, %22, %cst_15 {dimension_numbers = #tpu.dot_dimension_numbers<[1], [1], [0], [0], [0, 0, 1, 0], [], []>} : vector<16x8xf32>, vector<16x8xf32>, vector<16x16xf32> -> vector<16x16xf32>
    %24 = arith.addf %23, %0 : vector<16x16xf32>
    %cst_16 = arith.constant dense<0xFF800000> : vector<16xf32>
    %25 = vector.multi_reduction <maximumf>, %24, %cst_16 [1] : vector<16x16xf32> to vector<16xf32>
    %26 = vector.shape_cast %25 : vector<16xf32> to vector<16x1xf32>
    %27 = vector.broadcast %26 : vector<16x1xf32> to vector<16x16xf32>
    %28 = arith.subf %24, %27 : vector<16x16xf32>
    %29 = math.exp %28 : vector<16x16xf32>
    %cst_17 = arith.constant dense<0.000000e+00> : vector<16xf32>
    %30 = vector.multi_reduction <add>, %29, %cst_17 [1] : vector<16x16xf32> to vector<16xf32>
    %31 = vector.shape_cast %30 : vector<16xf32> to vector<16x1xf32>
    %32 = vector.broadcast %31 : vector<16x1xf32> to vector<16x16xf32>
    %33 = arith.divf %29, %32 : vector<16x16xf32>
    %34 = vector.extract_strided_slice %20 {offsets = [0, 0], sizes = [16, 8], strides = [1, 1]} : vector<16x32xf32> to vector<16x8xf32>
    %cst_18 = arith.constant dense<0.000000e+00> : vector<16x8xf32>
    %35 = tpu.matmul %33, %34, %cst_18 {dimension_numbers = #tpu.dot_dimension_numbers<[1], [0], [0], [1], [0, 0, 1, 1], [], []>} : vector<16x16xf32>, vector<16x8xf32>, vector<16x8xf32> -> vector<16x8xf32>
    %36 = vector.extract_strided_slice %16 {offsets = [0, 8], sizes = [16, 8], strides = [1, 1]} : vector<16x32xf32> to vector<16x8xf32>
    %37 = vector.extract_strided_slice %18 {offsets = [0, 8], sizes = [16, 8], strides = [1, 1]} : vector<16x32xf32> to vector<16x8xf32>
    %cst_19 = arith.constant dense<0.000000e+00> : vector<16x16xf32>
    %38 = tpu.matmul %36, %37, %cst_19 {dimension_numbers = #tpu.dot_dimension_numbers<[1], [1], [0], [0], [0, 0, 1, 0], [], []>} : vector<16x8xf32>, vector<16x8xf32>, vector<16x16xf32> -> vector<16x16xf32>
    %39 = arith.addf %38, %0 : vector<16x16xf32>
    %cst_20 = arith.constant dense<0xFF800000> : vector<16xf32>
    %40 = vector.multi_reduction <maximumf>, %39, %cst_20 [1] : vector<16x16xf32> to vector<16xf32>
    %41 = vector.shape_cast %40 : vector<16xf32> to vector<16x1xf32>
    %42 = vector.broadcast %41 : vector<16x1xf32> to vector<16x16xf32>
    %43 = arith.subf %39, %42 : vector<16x16xf32>
    %44 = math.exp %43 : vector<16x16xf32>
    %cst_21 = arith.constant dense<0.000000e+00> : vector<16xf32>
    %45 = vector.multi_reduction <add>, %44, %cst_21 [1] : vector<16x16xf32> to vector<16xf32>
    %46 = vector.shape_cast %45 : vector<16xf32> to vector<16x1xf32>
    %47 = vector.broadcast %46 : vector<16x1xf32> to vector<16x16xf32>
    %48 = arith.divf %44, %47 : vector<16x16xf32>
    %49 = vector.extract_strided_slice %20 {offsets = [0, 8], sizes = [16, 8], strides = [1, 1]} : vector<16x32xf32> to vector<16x8xf32>
    %cst_22 = arith.constant dense<0.000000e+00> : vector<16x8xf32>
    %50 = tpu.matmul %48, %49, %cst_22 {dimension_numbers = #tpu.dot_dimension_numbers<[1], [0], [0], [1], [0, 0, 1, 1], [], []>} : vector<16x16xf32>, vector<16x8xf32>, vector<16x8xf32> -> vector<16x8xf32>
    %51 = vector.extract_strided_slice %16 {offsets = [0, 16], sizes = [16, 8], strides = [1, 1]} : vector<16x32xf32> to vector<16x8xf32>
    %52 = vector.extract_strided_slice %18 {offsets = [0, 16], sizes = [16, 8], strides = [1, 1]} : vector<16x32xf32> to vector<16x8xf32>
    %cst_23 = arith.constant dense<0.000000e+00> : vector<16x16xf32>
    %53 = tpu.matmul %51, %52, %cst_23 {dimension_numbers = #tpu.dot_dimension_numbers<[1], [1], [0], [0], [0, 0, 1, 0], [], []>} : vector<16x8xf32>, vector<16x8xf32>, vector<16x16xf32> -> vector<16x16xf32>
    %54 = arith.addf %53, %0 : vector<16x16xf32>
    %cst_24 = arith.constant dense<0xFF800000> : vector<16xf32>
    %55 = vector.multi_reduction <maximumf>, %54, %cst_24 [1] : vector<16x16xf32> to vector<16xf32>
    %56 = vector.shape_cast %55 : vector<16xf32> to vector<16x1xf32>
    %57 = vector.broadcast %56 : vector<16x1xf32> to vector<16x16xf32>
    %58 = arith.subf %54, %57 : vector<16x16xf32>
    %59 = math.exp %58 : vector<16x16xf32>
    %cst_25 = arith.constant dense<0.000000e+00> : vector<16xf32>
    %60 = vector.multi_reduction <add>, %59, %cst_25 [1] : vector<16x16xf32> to vector<16xf32>
    %61 = vector.shape_cast %60 : vector<16xf32> to vector<16x1xf32>
    %62 = vector.broadcast %61 : vector<16x1xf32> to vector<16x16xf32>
    %63 = arith.divf %59, %62 : vector<16x16xf32>
    %64 = vector.extract_strided_slice %20 {offsets = [0, 16], sizes = [16, 8], strides = [1, 1]} : vector<16x32xf32> to vector<16x8xf32>
    %cst_26 = arith.constant dense<0.000000e+00> : vector<16x8xf32>
    %65 = tpu.matmul %63, %64, %cst_26 {dimension_numbers = #tpu.dot_dimension_numbers<[1], [0], [0], [1], [0, 0, 1, 1], [], []>} : vector<16x16xf32>, vector<16x8xf32>, vector<16x8xf32> -> vector<16x8xf32>
    %66 = vector.extract_strided_slice %16 {offsets = [0, 24], sizes = [16, 8], strides = [1, 1]} : vector<16x32xf32> to vector<16x8xf32>
    %67 = vector.extract_strided_slice %18 {offsets = [0, 24], sizes = [16, 8], strides = [1, 1]} : vector<16x32xf32> to vector<16x8xf32>
    %cst_27 = arith.constant dense<0.000000e+00> : vector<16x16xf32>
    %68 = tpu.matmul %66, %67, %cst_27 {dimension_numbers = #tpu.dot_dimension_numbers<[1], [1], [0], [0], [0, 0, 1, 0], [], []>} : vector<16x8xf32>, vector<16x8xf32>, vector<16x16xf32> -> vector<16x16xf32>
    %69 = arith.addf %68, %0 : vector<16x16xf32>
    %cst_28 = arith.constant dense<0xFF800000> : vector<16xf32>
    %70 = vector.multi_reduction <maximumf>, %69, %cst_28 [1] : vector<16x16xf32> to vector<16xf32>
    %71 = vector.shape_cast %70 : vector<16xf32> to vector<16x1xf32>
    %72 = vector.broadcast %71 : vector<16x1xf32> to vector<16x16xf32>
    %73 = arith.subf %69, %72 : vector<16x16xf32>
    %74 = math.exp %73 : vector<16x16xf32>
    %cst_29 = arith.constant dense<0.000000e+00> : vector<16xf32>
    %75 = vector.multi_reduction <add>, %74, %cst_29 [1] : vector<16x16xf32> to vector<16xf32>
    %76 = vector.shape_cast %75 : vector<16xf32> to vector<16x1xf32>
    %77 = vector.broadcast %76 : vector<16x1xf32> to vector<16x16xf32>
    %78 = arith.divf %74, %77 : vector<16x16xf32>
    %79 = vector.extract_strided_slice %20 {offsets = [0, 24], sizes = [16, 8], strides = [1, 1]} : vector<16x32xf32> to vector<16x8xf32>
    %cst_30 = arith.constant dense<0.000000e+00> : vector<16x8xf32>
    %80 = tpu.matmul %78, %79, %cst_30 {dimension_numbers = #tpu.dot_dimension_numbers<[1], [0], [0], [1], [0, 0, 1, 1], [], []>} : vector<16x16xf32>, vector<16x8xf32>, vector<16x8xf32> -> vector<16x8xf32>
    %81 = tpu.concatenate %35, %50, %65, %80 in 1 : vector<16x8xf32>, vector<16x8xf32>, vector<16x8xf32>, vector<16x8xf32> -> vector<16x32xf32>
    %82 = arith.truncf %81 : vector<16x32xf32> to vector<16x32xbf16>
    %c224 = arith.constant 224 : index
    %c0_31 = arith.constant 0 : index
    %83 = vector.load %arg5[%c224, %c0_31] : memref<736x128xbf16, #tpu.memory_space<vmem>>, vector<32x32xbf16>
    %cst_32 = arith.constant dense<0.000000e+00> : vector<16x32xf32>
    %84 = tpu.matmul %82, %83, %cst_32 {dimension_numbers = #tpu.dot_dimension_numbers<[1], [0], [0], [1], [0, 0, 1, 1], [], []>} : vector<16x32xbf16>, vector<32x32xbf16>, vector<16x32xf32> -> vector<16x32xf32>
    %c0_33 = arith.constant 0 : index
    %c0_34 = arith.constant 0 : index
    %85 = vector.load %arg6[%c0_33, %c0_34] : memref<22x128xf32, #tpu.memory_space<vmem>>, vector<1x32xf32>
    %86 = vector.broadcast %85 : vector<1x32xf32> to vector<16x32xf32>
    %87 = arith.addf %84, %86 : vector<16x32xf32>
    %cst_35 = arith.constant dense<0.000000e+00> : vector<16xf32>
    %88 = vector.multi_reduction <add>, %87, %cst_35 [1] : vector<16x32xf32> to vector<16xf32>
    %89 = vector.shape_cast %88 : vector<16xf32> to vector<16x1xf32>
    %cst_36 = arith.constant 3.200000e+01 : f32
    %90 = vector.broadcast %cst_36 : f32 to vector<16x1xf32>
    %91 = arith.divf %89, %90 : vector<16x1xf32>
    %92 = vector.broadcast %91 : vector<16x1xf32> to vector<16x32xf32>
    %93 = arith.subf %87, %92 : vector<16x32xf32>
    %94 = arith.mulf %93, %93 : vector<16x32xf32>
    %cst_37 = arith.constant dense<0.000000e+00> : vector<16xf32>
    %95 = vector.multi_reduction <add>, %94, %cst_37 [1] : vector<16x32xf32> to vector<16xf32>
    %96 = vector.shape_cast %95 : vector<16xf32> to vector<16x1xf32>
    %cst_38 = arith.constant 0.0322580636 : f32
    %97 = vector.broadcast %cst_38 : f32 to vector<16x1xf32>
    %98 = arith.mulf %96, %97 : vector<16x1xf32>
    %c3 = arith.constant 3 : index
    %c0_39 = arith.constant 0 : index
    %99 = vector.load %arg6[%c3, %c0_39] : memref<22x128xf32, #tpu.memory_space<vmem>>, vector<1x1xf32>
    %100 = vector.broadcast %91 : vector<16x1xf32> to vector<16x32xf32>
    %101 = arith.subf %87, %100 : vector<16x32xf32>
    %102 = vector.broadcast %99 : vector<1x1xf32> to vector<16x32xf32>
    %103 = arith.mulf %102, %101 : vector<16x32xf32>
    %cst_40 = arith.constant 9.99999997E-7 : f32
    %104 = vector.broadcast %cst_40 : f32 to vector<16x1xf32>
    %105 = arith.addf %98, %104 : vector<16x1xf32>
    %106 = math.rsqrt %105 : vector<16x1xf32>
    %107 = vector.broadcast %106 : vector<16x1xf32> to vector<16x32xf32>
    %108 = arith.mulf %103, %107 : vector<16x32xf32>
    %c4 = arith.constant 4 : index
    %c0_41 = arith.constant 0 : index
    %109 = vector.load %arg6[%c4, %c0_41] : memref<22x128xf32, #tpu.memory_space<vmem>>, vector<1x1xf32>
    %110 = vector.broadcast %109 : vector<1x1xf32> to vector<16x32xf32>
    %111 = arith.addf %108, %110 : vector<16x32xf32>
    %112 = arith.addf %13, %111 : vector<16x32xf32>
    %113 = arith.truncf %112 : vector<16x32xf32> to vector<16x32xbf16>
    %c256 = arith.constant 256 : index
    %c0_42 = arith.constant 0 : index
    %114 = vector.load %arg5[%c256, %c0_42] : memref<736x128xbf16, #tpu.memory_space<vmem>>, vector<32x64xbf16>
    %cst_43 = arith.constant dense<0.000000e+00> : vector<16x64xf32>
    %115 = tpu.matmul %113, %114, %cst_43 {dimension_numbers = #tpu.dot_dimension_numbers<[1], [0], [0], [1], [0, 0, 1, 1], [], []>} : vector<16x32xbf16>, vector<32x64xbf16>, vector<16x64xf32> -> vector<16x64xf32>
    %c1 = arith.constant 1 : index
    %c0_44 = arith.constant 0 : index
    %116 = vector.load %arg6[%c1, %c0_44] : memref<22x128xf32, #tpu.memory_space<vmem>>, vector<1x64xf32>
    %117 = vector.broadcast %116 : vector<1x64xf32> to vector<16x64xf32>
    %118 = arith.addf %115, %117 : vector<16x64xf32>
    %cst_45 = arith.constant 0.000000e+00 : f32
    %119 = vector.broadcast %cst_45 : f32 to vector<16x64xf32>
    %120 = arith.maximumf %118, %119 : vector<16x64xf32>
    %121 = arith.truncf %120 : vector<16x64xf32> to vector<16x64xbf16>
    %c288 = arith.constant 288 : index
    %c0_46 = arith.constant 0 : index
    %122 = vector.load %arg5[%c288, %c0_46] : memref<736x128xbf16, #tpu.memory_space<vmem>>, vector<64x32xbf16>
    %cst_47 = arith.constant dense<0.000000e+00> : vector<16x32xf32>
    %123 = tpu.matmul %121, %122, %cst_47 {dimension_numbers = #tpu.dot_dimension_numbers<[1], [0], [0], [1], [0, 0, 1, 1], [], []>} : vector<16x64xbf16>, vector<64x32xbf16>, vector<16x32xf32> -> vector<16x32xf32>
    %c2 = arith.constant 2 : index
    %c0_48 = arith.constant 0 : index
    %124 = vector.load %arg6[%c2, %c0_48] : memref<22x128xf32, #tpu.memory_space<vmem>>, vector<1x32xf32>
    %125 = vector.broadcast %124 : vector<1x32xf32> to vector<16x32xf32>
    %126 = arith.addf %123, %125 : vector<16x32xf32>
    %cst_49 = arith.constant dense<0.000000e+00> : vector<16xf32>
    %127 = vector.multi_reduction <add>, %126, %cst_49 [1] : vector<16x32xf32> to vector<16xf32>
    %128 = vector.shape_cast %127 : vector<16xf32> to vector<16x1xf32>
    %cst_50 = arith.constant 3.200000e+01 : f32
    %129 = vector.broadcast %cst_50 : f32 to vector<16x1xf32>
    %130 = arith.divf %128, %129 : vector<16x1xf32>
    %131 = vector.broadcast %130 : vector<16x1xf32> to vector<16x32xf32>
    %132 = arith.subf %126, %131 : vector<16x32xf32>
    %133 = arith.mulf %132, %132 : vector<16x32xf32>
    %cst_51 = arith.constant dense<0.000000e+00> : vector<16xf32>
    %134 = vector.multi_reduction <add>, %133, %cst_51 [1] : vector<16x32xf32> to vector<16xf32>
    %135 = vector.shape_cast %134 : vector<16xf32> to vector<16x1xf32>
    %cst_52 = arith.constant 0.0322580636 : f32
    %136 = vector.broadcast %cst_52 : f32 to vector<16x1xf32>
    %137 = arith.mulf %135, %136 : vector<16x1xf32>
    %c5 = arith.constant 5 : index
    %c0_53 = arith.constant 0 : index
    %138 = vector.load %arg6[%c5, %c0_53] : memref<22x128xf32, #tpu.memory_space<vmem>>, vector<1x1xf32>
    %139 = vector.broadcast %130 : vector<16x1xf32> to vector<16x32xf32>
    %140 = arith.subf %126, %139 : vector<16x32xf32>
    %141 = vector.broadcast %138 : vector<1x1xf32> to vector<16x32xf32>
    %142 = arith.mulf %141, %140 : vector<16x32xf32>
    %cst_54 = arith.constant 9.99999997E-7 : f32
    %143 = vector.broadcast %cst_54 : f32 to vector<16x1xf32>
    %144 = arith.addf %137, %143 : vector<16x1xf32>
    %145 = math.rsqrt %144 : vector<16x1xf32>
    %146 = vector.broadcast %145 : vector<16x1xf32> to vector<16x32xf32>
    %147 = arith.mulf %142, %146 : vector<16x32xf32>
    %c6 = arith.constant 6 : index
    %c0_55 = arith.constant 0 : index
    %148 = vector.load %arg6[%c6, %c0_55] : memref<22x128xf32, #tpu.memory_space<vmem>>, vector<1x1xf32>
    %149 = vector.broadcast %148 : vector<1x1xf32> to vector<16x32xf32>
    %150 = arith.addf %147, %149 : vector<16x32xf32>
    %151 = arith.addf %112, %150 : vector<16x32xf32>
    %cst_56 = arith.constant dense<0.000000e+00> : vector<16xf32>
    %152 = vector.multi_reduction <add>, %151, %cst_56 [1] : vector<16x32xf32> to vector<16xf32>
    %153 = vector.shape_cast %152 : vector<16xf32> to vector<16x1xf32>
    %cst_57 = arith.constant 3.200000e+01 : f32
    %154 = vector.broadcast %cst_57 : f32 to vector<16x1xf32>
    %155 = arith.divf %153, %154 : vector<16x1xf32>
    %156 = vector.broadcast %155 : vector<16x1xf32> to vector<16x32xf32>
    %157 = arith.subf %151, %156 : vector<16x32xf32>
    %158 = arith.mulf %157, %157 : vector<16x32xf32>
    %cst_58 = arith.constant dense<0.000000e+00> : vector<16xf32>
    %159 = vector.multi_reduction <add>, %158, %cst_58 [1] : vector<16x32xf32> to vector<16xf32>
    %160 = vector.shape_cast %159 : vector<16xf32> to vector<16x1xf32>
    %cst_59 = arith.constant 0.0322580636 : f32
    %161 = vector.broadcast %cst_59 : f32 to vector<16x1xf32>
    %162 = arith.mulf %160, %161 : vector<16x1xf32>
    %c17 = arith.constant 17 : index
    %c0_60 = arith.constant 0 : index
    %163 = vector.load %arg6[%c17, %c0_60] : memref<22x128xf32, #tpu.memory_space<vmem>>, vector<1x1xf32>
    %164 = vector.broadcast %155 : vector<16x1xf32> to vector<16x32xf32>
    %165 = arith.subf %151, %164 : vector<16x32xf32>
    %166 = vector.broadcast %163 : vector<1x1xf32> to vector<16x32xf32>
    %167 = arith.mulf %166, %165 : vector<16x32xf32>
    %cst_61 = arith.constant 9.99999997E-7 : f32
    %168 = vector.broadcast %cst_61 : f32 to vector<16x1xf32>
    %169 = arith.addf %162, %168 : vector<16x1xf32>
    %170 = math.rsqrt %169 : vector<16x1xf32>
    %171 = vector.broadcast %170 : vector<16x1xf32> to vector<16x32xf32>
    %172 = arith.mulf %167, %171 : vector<16x32xf32>
    %c18 = arith.constant 18 : index
    %c0_62 = arith.constant 0 : index
    %173 = vector.load %arg6[%c18, %c0_62] : memref<22x128xf32, #tpu.memory_space<vmem>>, vector<1x1xf32>
    %174 = vector.broadcast %173 : vector<1x1xf32> to vector<16x32xf32>
    %175 = arith.addf %172, %174 : vector<16x32xf32>
    %c64 = arith.constant 64 : index
    %c0_63 = arith.constant 0 : index
    %176 = vector.load %arg5[%c64, %c0_63] : memref<736x128xbf16, #tpu.memory_space<vmem>>, vector<64x32xbf16>
    %177 = tpu.iota {dimensions = array<i32: 1>} : vector<16x64xi32>
    %c0_64 = arith.constant 0 : index
    %c0_65 = arith.constant 0 : index
    %178 = vector.load %arg1[%c0_64, %c0_65] : memref<16x1xi32, #tpu.memory_space<vmem>>, vector<16x1xi32>
    %179 = vector.broadcast %178 : vector<16x1xi32> to vector<16x64xi32>
    %180 = arith.cmpi eq, %177, %179 : vector<16x64xi32>
    %181 = arith.extui %180 : vector<16x64xi1> to vector<16x64xi32>
    %182 = arith.sitofp %181 : vector<16x64xi32> to vector<16x64xf32>
    %183 = arith.truncf %182 : vector<16x64xf32> to vector<16x64xbf16>
    %cst_66 = arith.constant dense<0.000000e+00> : vector<16x32xf32>
    %184 = tpu.matmul %183, %176, %cst_66 {dimension_numbers = #tpu.dot_dimension_numbers<[1], [0], [0], [1], [0, 0, 1, 1], [], []>} : vector<16x64xbf16>, vector<64x32xbf16>, vector<16x32xf32> -> vector<16x32xf32>
    %185 = arith.addf %184, %3 : vector<16x32xf32>
    %186 = arith.truncf %185 : vector<16x32xf32> to vector<16x32xbf16>
    %c352 = arith.constant 352 : index
    %c0_67 = arith.constant 0 : index
    %187 = vector.load %arg5[%c352, %c0_67] : memref<736x128xbf16, #tpu.memory_space<vmem>>, vector<32x32xbf16>
    %cst_68 = arith.constant dense<0.000000e+00> : vector<16x32xf32>
    %188 = tpu.matmul %186, %187, %cst_68 {dimension_numbers = #tpu.dot_dimension_numbers<[1], [0], [0], [1], [0, 0, 1, 1], [], []>} : vector<16x32xbf16>, vector<32x32xbf16>, vector<16x32xf32> -> vector<16x32xf32>
    %c384 = arith.constant 384 : index
    %c0_69 = arith.constant 0 : index
    %189 = vector.load %arg5[%c384, %c0_69] : memref<736x128xbf16, #tpu.memory_space<vmem>>, vector<32x32xbf16>
    %cst_70 = arith.constant dense<0.000000e+00> : vector<16x32xf32>
    %190 = tpu.matmul %186, %189, %cst_70 {dimension_numbers = #tpu.dot_dimension_numbers<[1], [0], [0], [1], [0, 0, 1, 1], [], []>} : vector<16x32xbf16>, vector<32x32xbf16>, vector<16x32xf32> -> vector<16x32xf32>
    %c416 = arith.constant 416 : index
    %c0_71 = arith.constant 0 : index
    %191 = vector.load %arg5[%c416, %c0_71] : memref<736x128xbf16, #tpu.memory_space<vmem>>, vector<32x32xbf16>
    %cst_72 = arith.constant dense<0.000000e+00> : vector<16x32xf32>
    %192 = tpu.matmul %186, %191, %cst_72 {dimension_numbers = #tpu.dot_dimension_numbers<[1], [0], [0], [1], [0, 0, 1, 1], [], []>} : vector<16x32xbf16>, vector<32x32xbf16>, vector<16x32xf32> -> vector<16x32xf32>
    %193 = vector.extract_strided_slice %188 {offsets = [0, 0], sizes = [16, 8], strides = [1, 1]} : vector<16x32xf32> to vector<16x8xf32>
    %194 = vector.extract_strided_slice %190 {offsets = [0, 0], sizes = [16, 8], strides = [1, 1]} : vector<16x32xf32> to vector<16x8xf32>
    %cst_73 = arith.constant dense<0.000000e+00> : vector<16x16xf32>
    %195 = tpu.matmul %193, %194, %cst_73 {dimension_numbers = #tpu.dot_dimension_numbers<[1], [1], [0], [0], [0, 0, 1, 0], [], []>} : vector<16x8xf32>, vector<16x8xf32>, vector<16x16xf32> -> vector<16x16xf32>
    %196 = arith.addf %195, %1 : vector<16x16xf32>
    %cst_74 = arith.constant dense<0xFF800000> : vector<16xf32>
    %197 = vector.multi_reduction <maximumf>, %196, %cst_74 [1] : vector<16x16xf32> to vector<16xf32>
    %198 = vector.shape_cast %197 : vector<16xf32> to vector<16x1xf32>
    %199 = vector.broadcast %198 : vector<16x1xf32> to vector<16x16xf32>
    %200 = arith.subf %196, %199 : vector<16x16xf32>
    %201 = math.exp %200 : vector<16x16xf32>
    %cst_75 = arith.constant dense<0.000000e+00> : vector<16xf32>
    %202 = vector.multi_reduction <add>, %201, %cst_75 [1] : vector<16x16xf32> to vector<16xf32>
    %203 = vector.shape_cast %202 : vector<16xf32> to vector<16x1xf32>
    %204 = vector.broadcast %203 : vector<16x1xf32> to vector<16x16xf32>
    %205 = arith.divf %201, %204 : vector<16x16xf32>
    %206 = vector.extract_strided_slice %192 {offsets = [0, 0], sizes = [16, 8], strides = [1, 1]} : vector<16x32xf32> to vector<16x8xf32>
    %cst_76 = arith.constant dense<0.000000e+00> : vector<16x8xf32>
    %207 = tpu.matmul %205, %206, %cst_76 {dimension_numbers = #tpu.dot_dimension_numbers<[1], [0], [0], [1], [0, 0, 1, 1], [], []>} : vector<16x16xf32>, vector<16x8xf32>, vector<16x8xf32> -> vector<16x8xf32>
    %208 = vector.extract_strided_slice %188 {offsets = [0, 8], sizes = [16, 8], strides = [1, 1]} : vector<16x32xf32> to vector<16x8xf32>
    %209 = vector.extract_strided_slice %190 {offsets = [0, 8], sizes = [16, 8], strides = [1, 1]} : vector<16x32xf32> to vector<16x8xf32>
    %cst_77 = arith.constant dense<0.000000e+00> : vector<16x16xf32>
    %210 = tpu.matmul %208, %209, %cst_77 {dimension_numbers = #tpu.dot_dimension_numbers<[1], [1], [0], [0], [0, 0, 1, 0], [], []>} : vector<16x8xf32>, vector<16x8xf32>, vector<16x16xf32> -> vector<16x16xf32>
    %211 = arith.addf %210, %1 : vector<16x16xf32>
    %cst_78 = arith.constant dense<0xFF800000> : vector<16xf32>
    %212 = vector.multi_reduction <maximumf>, %211, %cst_78 [1] : vector<16x16xf32> to vector<16xf32>
    %213 = vector.shape_cast %212 : vector<16xf32> to vector<16x1xf32>
    %214 = vector.broadcast %213 : vector<16x1xf32> to vector<16x16xf32>
    %215 = arith.subf %211, %214 : vector<16x16xf32>
    %216 = math.exp %215 : vector<16x16xf32>
    %cst_79 = arith.constant dense<0.000000e+00> : vector<16xf32>
    %217 = vector.multi_reduction <add>, %216, %cst_79 [1] : vector<16x16xf32> to vector<16xf32>
    %218 = vector.shape_cast %217 : vector<16xf32> to vector<16x1xf32>
    %219 = vector.broadcast %218 : vector<16x1xf32> to vector<16x16xf32>
    %220 = arith.divf %216, %219 : vector<16x16xf32>
    %221 = vector.extract_strided_slice %192 {offsets = [0, 8], sizes = [16, 8], strides = [1, 1]} : vector<16x32xf32> to vector<16x8xf32>
    %cst_80 = arith.constant dense<0.000000e+00> : vector<16x8xf32>
    %222 = tpu.matmul %220, %221, %cst_80 {dimension_numbers = #tpu.dot_dimension_numbers<[1], [0], [0], [1], [0, 0, 1, 1], [], []>} : vector<16x16xf32>, vector<16x8xf32>, vector<16x8xf32> -> vector<16x8xf32>
    %223 = vector.extract_strided_slice %188 {offsets = [0, 16], sizes = [16, 8], strides = [1, 1]} : vector<16x32xf32> to vector<16x8xf32>
    %224 = vector.extract_strided_slice %190 {offsets = [0, 16], sizes = [16, 8], strides = [1, 1]} : vector<16x32xf32> to vector<16x8xf32>
    %cst_81 = arith.constant dense<0.000000e+00> : vector<16x16xf32>
    %225 = tpu.matmul %223, %224, %cst_81 {dimension_numbers = #tpu.dot_dimension_numbers<[1], [1], [0], [0], [0, 0, 1, 0], [], []>} : vector<16x8xf32>, vector<16x8xf32>, vector<16x16xf32> -> vector<16x16xf32>
    %226 = arith.addf %225, %1 : vector<16x16xf32>
    %cst_82 = arith.constant dense<0xFF800000> : vector<16xf32>
    %227 = vector.multi_reduction <maximumf>, %226, %cst_82 [1] : vector<16x16xf32> to vector<16xf32>
    %228 = vector.shape_cast %227 : vector<16xf32> to vector<16x1xf32>
    %229 = vector.broadcast %228 : vector<16x1xf32> to vector<16x16xf32>
    %230 = arith.subf %226, %229 : vector<16x16xf32>
    %231 = math.exp %230 : vector<16x16xf32>
    %cst_83 = arith.constant dense<0.000000e+00> : vector<16xf32>
    %232 = vector.multi_reduction <add>, %231, %cst_83 [1] : vector<16x16xf32> to vector<16xf32>
    %233 = vector.shape_cast %232 : vector<16xf32> to vector<16x1xf32>
    %234 = vector.broadcast %233 : vector<16x1xf32> to vector<16x16xf32>
    %235 = arith.divf %231, %234 : vector<16x16xf32>
    %236 = vector.extract_strided_slice %192 {offsets = [0, 16], sizes = [16, 8], strides = [1, 1]} : vector<16x32xf32> to vector<16x8xf32>
    %cst_84 = arith.constant dense<0.000000e+00> : vector<16x8xf32>
    %237 = tpu.matmul %235, %236, %cst_84 {dimension_numbers = #tpu.dot_dimension_numbers<[1], [0], [0], [1], [0, 0, 1, 1], [], []>} : vector<16x16xf32>, vector<16x8xf32>, vector<16x8xf32> -> vector<16x8xf32>
    %238 = vector.extract_strided_slice %188 {offsets = [0, 24], sizes = [16, 8], strides = [1, 1]} : vector<16x32xf32> to vector<16x8xf32>
    %239 = vector.extract_strided_slice %190 {offsets = [0, 24], sizes = [16, 8], strides = [1, 1]} : vector<16x32xf32> to vector<16x8xf32>
    %cst_85 = arith.constant dense<0.000000e+00> : vector<16x16xf32>
    %240 = tpu.matmul %238, %239, %cst_85 {dimension_numbers = #tpu.dot_dimension_numbers<[1], [1], [0], [0], [0, 0, 1, 0], [], []>} : vector<16x8xf32>, vector<16x8xf32>, vector<16x16xf32> -> vector<16x16xf32>
    %241 = arith.addf %240, %1 : vector<16x16xf32>
    %cst_86 = arith.constant dense<0xFF800000> : vector<16xf32>
    %242 = vector.multi_reduction <maximumf>, %241, %cst_86 [1] : vector<16x16xf32> to vector<16xf32>
    %243 = vector.shape_cast %242 : vector<16xf32> to vector<16x1xf32>
    %244 = vector.broadcast %243 : vector<16x1xf32> to vector<16x16xf32>
    %245 = arith.subf %241, %244 : vector<16x16xf32>
    %246 = math.exp %245 : vector<16x16xf32>
    %cst_87 = arith.constant dense<0.000000e+00> : vector<16xf32>
    %247 = vector.multi_reduction <add>, %246, %cst_87 [1] : vector<16x16xf32> to vector<16xf32>
    %248 = vector.shape_cast %247 : vector<16xf32> to vector<16x1xf32>
    %249 = vector.broadcast %248 : vector<16x1xf32> to vector<16x16xf32>
    %250 = arith.divf %246, %249 : vector<16x16xf32>
    %251 = vector.extract_strided_slice %192 {offsets = [0, 24], sizes = [16, 8], strides = [1, 1]} : vector<16x32xf32> to vector<16x8xf32>
    %cst_88 = arith.constant dense<0.000000e+00> : vector<16x8xf32>
    %252 = tpu.matmul %250, %251, %cst_88 {dimension_numbers = #tpu.dot_dimension_numbers<[1], [0], [0], [1], [0, 0, 1, 1], [], []>} : vector<16x16xf32>, vector<16x8xf32>, vector<16x8xf32> -> vector<16x8xf32>
    %253 = tpu.concatenate %207, %222, %237, %252 in 1 : vector<16x8xf32>, vector<16x8xf32>, vector<16x8xf32>, vector<16x8xf32> -> vector<16x32xf32>
    %254 = arith.truncf %253 : vector<16x32xf32> to vector<16x32xbf16>
    %c448 = arith.constant 448 : index
    %c0_89 = arith.constant 0 : index
    %255 = vector.load %arg5[%c448, %c0_89] : memref<736x128xbf16, #tpu.memory_space<vmem>>, vector<32x32xbf16>
    %cst_90 = arith.constant dense<0.000000e+00> : vector<16x32xf32>
    %256 = tpu.matmul %254, %255, %cst_90 {dimension_numbers = #tpu.dot_dimension_numbers<[1], [0], [0], [1], [0, 0, 1, 1], [], []>} : vector<16x32xbf16>, vector<32x32xbf16>, vector<16x32xf32> -> vector<16x32xf32>
    %c7 = arith.constant 7 : index
    %c0_91 = arith.constant 0 : index
    %257 = vector.load %arg6[%c7, %c0_91] : memref<22x128xf32, #tpu.memory_space<vmem>>, vector<1x32xf32>
    %258 = vector.broadcast %257 : vector<1x32xf32> to vector<16x32xf32>
    %259 = arith.addf %256, %258 : vector<16x32xf32>
    %cst_92 = arith.constant dense<0.000000e+00> : vector<16xf32>
    %260 = vector.multi_reduction <add>, %259, %cst_92 [1] : vector<16x32xf32> to vector<16xf32>
    %261 = vector.shape_cast %260 : vector<16xf32> to vector<16x1xf32>
    %cst_93 = arith.constant 3.200000e+01 : f32
    %262 = vector.broadcast %cst_93 : f32 to vector<16x1xf32>
    %263 = arith.divf %261, %262 : vector<16x1xf32>
    %264 = vector.broadcast %263 : vector<16x1xf32> to vector<16x32xf32>
    %265 = arith.subf %259, %264 : vector<16x32xf32>
    %266 = arith.mulf %265, %265 : vector<16x32xf32>
    %cst_94 = arith.constant dense<0.000000e+00> : vector<16xf32>
    %267 = vector.multi_reduction <add>, %266, %cst_94 [1] : vector<16x32xf32> to vector<16xf32>
    %268 = vector.shape_cast %267 : vector<16xf32> to vector<16x1xf32>
    %cst_95 = arith.constant 0.0322580636 : f32
    %269 = vector.broadcast %cst_95 : f32 to vector<16x1xf32>
    %270 = arith.mulf %268, %269 : vector<16x1xf32>
    %c11 = arith.constant 11 : index
    %c0_96 = arith.constant 0 : index
    %271 = vector.load %arg6[%c11, %c0_96] : memref<22x128xf32, #tpu.memory_space<vmem>>, vector<1x1xf32>
    %272 = vector.broadcast %263 : vector<16x1xf32> to vector<16x32xf32>
    %273 = arith.subf %259, %272 : vector<16x32xf32>
    %274 = vector.broadcast %271 : vector<1x1xf32> to vector<16x32xf32>
    %275 = arith.mulf %274, %273 : vector<16x32xf32>
    %cst_97 = arith.constant 9.99999997E-7 : f32
    %276 = vector.broadcast %cst_97 : f32 to vector<16x1xf32>
    %277 = arith.addf %270, %276 : vector<16x1xf32>
    %278 = math.rsqrt %277 : vector<16x1xf32>
    %279 = vector.broadcast %278 : vector<16x1xf32> to vector<16x32xf32>
    %280 = arith.mulf %275, %279 : vector<16x32xf32>
    %c12 = arith.constant 12 : index
    %c0_98 = arith.constant 0 : index
    %281 = vector.load %arg6[%c12, %c0_98] : memref<22x128xf32, #tpu.memory_space<vmem>>, vector<1x1xf32>
    %282 = vector.broadcast %281 : vector<1x1xf32> to vector<16x32xf32>
    %283 = arith.addf %280, %282 : vector<16x32xf32>
    %284 = arith.addf %185, %283 : vector<16x32xf32>
    %285 = arith.truncf %284 : vector<16x32xf32> to vector<16x32xbf16>
    %286 = arith.truncf %175 : vector<16x32xf32> to vector<16x32xbf16>
    %c480 = arith.constant 480 : index
    %c0_99 = arith.constant 0 : index
    %287 = vector.load %arg5[%c480, %c0_99] : memref<736x128xbf16, #tpu.memory_space<vmem>>, vector<32x32xbf16>
    %cst_100 = arith.constant dense<0.000000e+00> : vector<16x32xf32>
    %288 = tpu.matmul %285, %287, %cst_100 {dimension_numbers = #tpu.dot_dimension_numbers<[1], [0], [0], [1], [0, 0, 1, 1], [], []>} : vector<16x32xbf16>, vector<32x32xbf16>, vector<16x32xf32> -> vector<16x32xf32>
    %c512 = arith.constant 512 : index
    %c0_101 = arith.constant 0 : index
    %289 = vector.load %arg5[%c512, %c0_101] : memref<736x128xbf16, #tpu.memory_space<vmem>>, vector<32x32xbf16>
    %cst_102 = arith.constant dense<0.000000e+00> : vector<16x32xf32>
    %290 = tpu.matmul %286, %289, %cst_102 {dimension_numbers = #tpu.dot_dimension_numbers<[1], [0], [0], [1], [0, 0, 1, 1], [], []>} : vector<16x32xbf16>, vector<32x32xbf16>, vector<16x32xf32> -> vector<16x32xf32>
    %c544 = arith.constant 544 : index
    %c0_103 = arith.constant 0 : index
    %291 = vector.load %arg5[%c544, %c0_103] : memref<736x128xbf16, #tpu.memory_space<vmem>>, vector<32x32xbf16>
    %cst_104 = arith.constant dense<0.000000e+00> : vector<16x32xf32>
    %292 = tpu.matmul %286, %291, %cst_104 {dimension_numbers = #tpu.dot_dimension_numbers<[1], [0], [0], [1], [0, 0, 1, 1], [], []>} : vector<16x32xbf16>, vector<32x32xbf16>, vector<16x32xf32> -> vector<16x32xf32>
    %293 = vector.extract_strided_slice %288 {offsets = [0, 0], sizes = [16, 8], strides = [1, 1]} : vector<16x32xf32> to vector<16x8xf32>
    %294 = vector.extract_strided_slice %290 {offsets = [0, 0], sizes = [16, 8], strides = [1, 1]} : vector<16x32xf32> to vector<16x8xf32>
    %cst_105 = arith.constant dense<0.000000e+00> : vector<16x16xf32>
    %295 = tpu.matmul %293, %294, %cst_105 {dimension_numbers = #tpu.dot_dimension_numbers<[1], [1], [0], [0], [0, 0, 1, 0], [], []>} : vector<16x8xf32>, vector<16x8xf32>, vector<16x16xf32> -> vector<16x16xf32>
    %296 = arith.addf %295, %0 : vector<16x16xf32>
    %cst_106 = arith.constant dense<0xFF800000> : vector<16xf32>
    %297 = vector.multi_reduction <maximumf>, %296, %cst_106 [1] : vector<16x16xf32> to vector<16xf32>
    %298 = vector.shape_cast %297 : vector<16xf32> to vector<16x1xf32>
    %299 = vector.broadcast %298 : vector<16x1xf32> to vector<16x16xf32>
    %300 = arith.subf %296, %299 : vector<16x16xf32>
    %301 = math.exp %300 : vector<16x16xf32>
    %cst_107 = arith.constant dense<0.000000e+00> : vector<16xf32>
    %302 = vector.multi_reduction <add>, %301, %cst_107 [1] : vector<16x16xf32> to vector<16xf32>
    %303 = vector.shape_cast %302 : vector<16xf32> to vector<16x1xf32>
    %304 = vector.broadcast %303 : vector<16x1xf32> to vector<16x16xf32>
    %305 = arith.divf %301, %304 : vector<16x16xf32>
    %306 = vector.extract_strided_slice %292 {offsets = [0, 0], sizes = [16, 8], strides = [1, 1]} : vector<16x32xf32> to vector<16x8xf32>
    %cst_108 = arith.constant dense<0.000000e+00> : vector<16x8xf32>
    %307 = tpu.matmul %305, %306, %cst_108 {dimension_numbers = #tpu.dot_dimension_numbers<[1], [0], [0], [1], [0, 0, 1, 1], [], []>} : vector<16x16xf32>, vector<16x8xf32>, vector<16x8xf32> -> vector<16x8xf32>
    %308 = vector.extract_strided_slice %288 {offsets = [0, 8], sizes = [16, 8], strides = [1, 1]} : vector<16x32xf32> to vector<16x8xf32>
    %309 = vector.extract_strided_slice %290 {offsets = [0, 8], sizes = [16, 8], strides = [1, 1]} : vector<16x32xf32> to vector<16x8xf32>
    %cst_109 = arith.constant dense<0.000000e+00> : vector<16x16xf32>
    %310 = tpu.matmul %308, %309, %cst_109 {dimension_numbers = #tpu.dot_dimension_numbers<[1], [1], [0], [0], [0, 0, 1, 0], [], []>} : vector<16x8xf32>, vector<16x8xf32>, vector<16x16xf32> -> vector<16x16xf32>
    %311 = arith.addf %310, %0 : vector<16x16xf32>
    %cst_110 = arith.constant dense<0xFF800000> : vector<16xf32>
    %312 = vector.multi_reduction <maximumf>, %311, %cst_110 [1] : vector<16x16xf32> to vector<16xf32>
    %313 = vector.shape_cast %312 : vector<16xf32> to vector<16x1xf32>
    %314 = vector.broadcast %313 : vector<16x1xf32> to vector<16x16xf32>
    %315 = arith.subf %311, %314 : vector<16x16xf32>
    %316 = math.exp %315 : vector<16x16xf32>
    %cst_111 = arith.constant dense<0.000000e+00> : vector<16xf32>
    %317 = vector.multi_reduction <add>, %316, %cst_111 [1] : vector<16x16xf32> to vector<16xf32>
    %318 = vector.shape_cast %317 : vector<16xf32> to vector<16x1xf32>
    %319 = vector.broadcast %318 : vector<16x1xf32> to vector<16x16xf32>
    %320 = arith.divf %316, %319 : vector<16x16xf32>
    %321 = vector.extract_strided_slice %292 {offsets = [0, 8], sizes = [16, 8], strides = [1, 1]} : vector<16x32xf32> to vector<16x8xf32>
    %cst_112 = arith.constant dense<0.000000e+00> : vector<16x8xf32>
    %322 = tpu.matmul %320, %321, %cst_112 {dimension_numbers = #tpu.dot_dimension_numbers<[1], [0], [0], [1], [0, 0, 1, 1], [], []>} : vector<16x16xf32>, vector<16x8xf32>, vector<16x8xf32> -> vector<16x8xf32>
    %323 = vector.extract_strided_slice %288 {offsets = [0, 16], sizes = [16, 8], strides = [1, 1]} : vector<16x32xf32> to vector<16x8xf32>
    %324 = vector.extract_strided_slice %290 {offsets = [0, 16], sizes = [16, 8], strides = [1, 1]} : vector<16x32xf32> to vector<16x8xf32>
    %cst_113 = arith.constant dense<0.000000e+00> : vector<16x16xf32>
    %325 = tpu.matmul %323, %324, %cst_113 {dimension_numbers = #tpu.dot_dimension_numbers<[1], [1], [0], [0], [0, 0, 1, 0], [], []>} : vector<16x8xf32>, vector<16x8xf32>, vector<16x16xf32> -> vector<16x16xf32>
    %326 = arith.addf %325, %0 : vector<16x16xf32>
    %cst_114 = arith.constant dense<0xFF800000> : vector<16xf32>
    %327 = vector.multi_reduction <maximumf>, %326, %cst_114 [1] : vector<16x16xf32> to vector<16xf32>
    %328 = vector.shape_cast %327 : vector<16xf32> to vector<16x1xf32>
    %329 = vector.broadcast %328 : vector<16x1xf32> to vector<16x16xf32>
    %330 = arith.subf %326, %329 : vector<16x16xf32>
    %331 = math.exp %330 : vector<16x16xf32>
    %cst_115 = arith.constant dense<0.000000e+00> : vector<16xf32>
    %332 = vector.multi_reduction <add>, %331, %cst_115 [1] : vector<16x16xf32> to vector<16xf32>
    %333 = vector.shape_cast %332 : vector<16xf32> to vector<16x1xf32>
    %334 = vector.broadcast %333 : vector<16x1xf32> to vector<16x16xf32>
    %335 = arith.divf %331, %334 : vector<16x16xf32>
    %336 = vector.extract_strided_slice %292 {offsets = [0, 16], sizes = [16, 8], strides = [1, 1]} : vector<16x32xf32> to vector<16x8xf32>
    %cst_116 = arith.constant dense<0.000000e+00> : vector<16x8xf32>
    %337 = tpu.matmul %335, %336, %cst_116 {dimension_numbers = #tpu.dot_dimension_numbers<[1], [0], [0], [1], [0, 0, 1, 1], [], []>} : vector<16x16xf32>, vector<16x8xf32>, vector<16x8xf32> -> vector<16x8xf32>
    %338 = vector.extract_strided_slice %288 {offsets = [0, 24], sizes = [16, 8], strides = [1, 1]} : vector<16x32xf32> to vector<16x8xf32>
    %339 = vector.extract_strided_slice %290 {offsets = [0, 24], sizes = [16, 8], strides = [1, 1]} : vector<16x32xf32> to vector<16x8xf32>
    %cst_117 = arith.constant dense<0.000000e+00> : vector<16x16xf32>
    %340 = tpu.matmul %338, %339, %cst_117 {dimension_numbers = #tpu.dot_dimension_numbers<[1], [1], [0], [0], [0, 0, 1, 0], [], []>} : vector<16x8xf32>, vector<16x8xf32>, vector<16x16xf32> -> vector<16x16xf32>
    %341 = arith.addf %340, %0 : vector<16x16xf32>
    %cst_118 = arith.constant dense<0xFF800000> : vector<16xf32>
    %342 = vector.multi_reduction <maximumf>, %341, %cst_118 [1] : vector<16x16xf32> to vector<16xf32>
    %343 = vector.shape_cast %342 : vector<16xf32> to vector<16x1xf32>
    %344 = vector.broadcast %343 : vector<16x1xf32> to vector<16x16xf32>
    %345 = arith.subf %341, %344 : vector<16x16xf32>
    %346 = math.exp %345 : vector<16x16xf32>
    %cst_119 = arith.constant dense<0.000000e+00> : vector<16xf32>
    %347 = vector.multi_reduction <add>, %346, %cst_119 [1] : vector<16x16xf32> to vector<16xf32>
    %348 = vector.shape_cast %347 : vector<16xf32> to vector<16x1xf32>
    %349 = vector.broadcast %348 : vector<16x1xf32> to vector<16x16xf32>
    %350 = arith.divf %346, %349 : vector<16x16xf32>
    %351 = vector.extract_strided_slice %292 {offsets = [0, 24], sizes = [16, 8], strides = [1, 1]} : vector<16x32xf32> to vector<16x8xf32>
    %cst_120 = arith.constant dense<0.000000e+00> : vector<16x8xf32>
    %352 = tpu.matmul %350, %351, %cst_120 {dimension_numbers = #tpu.dot_dimension_numbers<[1], [0], [0], [1], [0, 0, 1, 1], [], []>} : vector<16x16xf32>, vector<16x8xf32>, vector<16x8xf32> -> vector<16x8xf32>
    %353 = tpu.concatenate %307, %322, %337, %352 in 1 : vector<16x8xf32>, vector<16x8xf32>, vector<16x8xf32>, vector<16x8xf32> -> vector<16x32xf32>
    %354 = arith.truncf %353 : vector<16x32xf32> to vector<16x32xbf16>
    %c576 = arith.constant 576 : index
    %c0_121 = arith.constant 0 : index
    %355 = vector.load %arg5[%c576, %c0_121] : memref<736x128xbf16, #tpu.memory_space<vmem>>, vector<32x32xbf16>
    %cst_122 = arith.constant dense<0.000000e+00> : vector<16x32xf32>
    %356 = tpu.matmul %354, %355, %cst_122 {dimension_numbers = #tpu.dot_dimension_numbers<[1], [0], [0], [1], [0, 0, 1, 1], [], []>} : vector<16x32xbf16>, vector<32x32xbf16>, vector<16x32xf32> -> vector<16x32xf32>
    %c8 = arith.constant 8 : index
    %c0_123 = arith.constant 0 : index
    %357 = vector.load %arg6[%c8, %c0_123] : memref<22x128xf32, #tpu.memory_space<vmem>>, vector<1x32xf32>
    %358 = vector.broadcast %357 : vector<1x32xf32> to vector<16x32xf32>
    %359 = arith.addf %356, %358 : vector<16x32xf32>
    %cst_124 = arith.constant dense<0.000000e+00> : vector<16xf32>
    %360 = vector.multi_reduction <add>, %359, %cst_124 [1] : vector<16x32xf32> to vector<16xf32>
    %361 = vector.shape_cast %360 : vector<16xf32> to vector<16x1xf32>
    %cst_125 = arith.constant 3.200000e+01 : f32
    %362 = vector.broadcast %cst_125 : f32 to vector<16x1xf32>
    %363 = arith.divf %361, %362 : vector<16x1xf32>
    %364 = vector.broadcast %363 : vector<16x1xf32> to vector<16x32xf32>
    %365 = arith.subf %359, %364 : vector<16x32xf32>
    %366 = arith.mulf %365, %365 : vector<16x32xf32>
    %cst_126 = arith.constant dense<0.000000e+00> : vector<16xf32>
    %367 = vector.multi_reduction <add>, %366, %cst_126 [1] : vector<16x32xf32> to vector<16xf32>
    %368 = vector.shape_cast %367 : vector<16xf32> to vector<16x1xf32>
    %cst_127 = arith.constant 0.0322580636 : f32
    %369 = vector.broadcast %cst_127 : f32 to vector<16x1xf32>
    %370 = arith.mulf %368, %369 : vector<16x1xf32>
    %c13 = arith.constant 13 : index
    %c0_128 = arith.constant 0 : index
    %371 = vector.load %arg6[%c13, %c0_128] : memref<22x128xf32, #tpu.memory_space<vmem>>, vector<1x1xf32>
    %372 = vector.broadcast %363 : vector<16x1xf32> to vector<16x32xf32>
    %373 = arith.subf %359, %372 : vector<16x32xf32>
    %374 = vector.broadcast %371 : vector<1x1xf32> to vector<16x32xf32>
    %375 = arith.mulf %374, %373 : vector<16x32xf32>
    %cst_129 = arith.constant 9.99999997E-7 : f32
    %376 = vector.broadcast %cst_129 : f32 to vector<16x1xf32>
    %377 = arith.addf %370, %376 : vector<16x1xf32>
    %378 = math.rsqrt %377 : vector<16x1xf32>
    %379 = vector.broadcast %378 : vector<16x1xf32> to vector<16x32xf32>
    %380 = arith.mulf %375, %379 : vector<16x32xf32>
    %c14 = arith.constant 14 : index
    %c0_130 = arith.constant 0 : index
    %381 = vector.load %arg6[%c14, %c0_130] : memref<22x128xf32, #tpu.memory_space<vmem>>, vector<1x1xf32>
    %382 = vector.broadcast %381 : vector<1x1xf32> to vector<16x32xf32>
    %383 = arith.addf %380, %382 : vector<16x32xf32>
    %384 = arith.addf %284, %383 : vector<16x32xf32>
    %385 = arith.truncf %384 : vector<16x32xf32> to vector<16x32xbf16>
    %c608 = arith.constant 608 : index
    %c0_131 = arith.constant 0 : index
    %386 = vector.load %arg5[%c608, %c0_131] : memref<736x128xbf16, #tpu.memory_space<vmem>>, vector<32x64xbf16>
    %cst_132 = arith.constant dense<0.000000e+00> : vector<16x64xf32>
    %387 = tpu.matmul %385, %386, %cst_132 {dimension_numbers = #tpu.dot_dimension_numbers<[1], [0], [0], [1], [0, 0, 1, 1], [], []>} : vector<16x32xbf16>, vector<32x64xbf16>, vector<16x64xf32> -> vector<16x64xf32>
    %c9 = arith.constant 9 : index
    %c0_133 = arith.constant 0 : index
    %388 = vector.load %arg6[%c9, %c0_133] : memref<22x128xf32, #tpu.memory_space<vmem>>, vector<1x64xf32>
    %389 = vector.broadcast %388 : vector<1x64xf32> to vector<16x64xf32>
    %390 = arith.addf %387, %389 : vector<16x64xf32>
    %cst_134 = arith.constant 0.000000e+00 : f32
    %391 = vector.broadcast %cst_134 : f32 to vector<16x64xf32>
    %392 = arith.maximumf %390, %391 : vector<16x64xf32>
    %393 = arith.truncf %392 : vector<16x64xf32> to vector<16x64xbf16>
    %c640 = arith.constant 640 : index
    %c0_135 = arith.constant 0 : index
    %394 = vector.load %arg5[%c640, %c0_135] : memref<736x128xbf16, #tpu.memory_space<vmem>>, vector<64x32xbf16>
    %cst_136 = arith.constant dense<0.000000e+00> : vector<16x32xf32>
    %395 = tpu.matmul %393, %394, %cst_136 {dimension_numbers = #tpu.dot_dimension_numbers<[1], [0], [0], [1], [0, 0, 1, 1], [], []>} : vector<16x64xbf16>, vector<64x32xbf16>, vector<16x32xf32> -> vector<16x32xf32>
    %c10 = arith.constant 10 : index
    %c0_137 = arith.constant 0 : index
    %396 = vector.load %arg6[%c10, %c0_137] : memref<22x128xf32, #tpu.memory_space<vmem>>, vector<1x32xf32>
    %397 = vector.broadcast %396 : vector<1x32xf32> to vector<16x32xf32>
    %398 = arith.addf %395, %397 : vector<16x32xf32>
    %cst_138 = arith.constant dense<0.000000e+00> : vector<16xf32>
    %399 = vector.multi_reduction <add>, %398, %cst_138 [1] : vector<16x32xf32> to vector<16xf32>
    %400 = vector.shape_cast %399 : vector<16xf32> to vector<16x1xf32>
    %cst_139 = arith.constant 3.200000e+01 : f32
    %401 = vector.broadcast %cst_139 : f32 to vector<16x1xf32>
    %402 = arith.divf %400, %401 : vector<16x1xf32>
    %403 = vector.broadcast %402 : vector<16x1xf32> to vector<16x32xf32>
    %404 = arith.subf %398, %403 : vector<16x32xf32>
    %405 = arith.mulf %404, %404 : vector<16x32xf32>
    %cst_140 = arith.constant dense<0.000000e+00> : vector<16xf32>
    %406 = vector.multi_reduction <add>, %405, %cst_140 [1] : vector<16x32xf32> to vector<16xf32>
    %407 = vector.shape_cast %406 : vector<16xf32> to vector<16x1xf32>
    %cst_141 = arith.constant 0.0322580636 : f32
    %408 = vector.broadcast %cst_141 : f32 to vector<16x1xf32>
    %409 = arith.mulf %407, %408 : vector<16x1xf32>
    %c15 = arith.constant 15 : index
    %c0_142 = arith.constant 0 : index
    %410 = vector.load %arg6[%c15, %c0_142] : memref<22x128xf32, #tpu.memory_space<vmem>>, vector<1x1xf32>
    %411 = vector.broadcast %402 : vector<16x1xf32> to vector<16x32xf32>
    %412 = arith.subf %398, %411 : vector<16x32xf32>
    %413 = vector.broadcast %410 : vector<1x1xf32> to vector<16x32xf32>
    %414 = arith.mulf %413, %412 : vector<16x32xf32>
    %cst_143 = arith.constant 9.99999997E-7 : f32
    %415 = vector.broadcast %cst_143 : f32 to vector<16x1xf32>
    %416 = arith.addf %409, %415 : vector<16x1xf32>
    %417 = math.rsqrt %416 : vector<16x1xf32>
    %418 = vector.broadcast %417 : vector<16x1xf32> to vector<16x32xf32>
    %419 = arith.mulf %414, %418 : vector<16x32xf32>
    %c16 = arith.constant 16 : index
    %c0_144 = arith.constant 0 : index
    %420 = vector.load %arg6[%c16, %c0_144] : memref<22x128xf32, #tpu.memory_space<vmem>>, vector<1x1xf32>
    %421 = vector.broadcast %420 : vector<1x1xf32> to vector<16x32xf32>
    %422 = arith.addf %419, %421 : vector<16x32xf32>
    %423 = arith.addf %384, %422 : vector<16x32xf32>
    %cst_145 = arith.constant dense<0.000000e+00> : vector<16xf32>
    %424 = vector.multi_reduction <add>, %423, %cst_145 [1] : vector<16x32xf32> to vector<16xf32>
    %425 = vector.shape_cast %424 : vector<16xf32> to vector<16x1xf32>
    %cst_146 = arith.constant 3.200000e+01 : f32
    %426 = vector.broadcast %cst_146 : f32 to vector<16x1xf32>
    %427 = arith.divf %425, %426 : vector<16x1xf32>
    %428 = vector.broadcast %427 : vector<16x1xf32> to vector<16x32xf32>
    %429 = arith.subf %423, %428 : vector<16x32xf32>
    %430 = arith.mulf %429, %429 : vector<16x32xf32>
    %cst_147 = arith.constant dense<0.000000e+00> : vector<16xf32>
    %431 = vector.multi_reduction <add>, %430, %cst_147 [1] : vector<16x32xf32> to vector<16xf32>
    %432 = vector.shape_cast %431 : vector<16xf32> to vector<16x1xf32>
    %cst_148 = arith.constant 0.0322580636 : f32
    %433 = vector.broadcast %cst_148 : f32 to vector<16x1xf32>
    %434 = arith.mulf %432, %433 : vector<16x1xf32>
    %c19 = arith.constant 19 : index
    %c0_149 = arith.constant 0 : index
    %435 = vector.load %arg6[%c19, %c0_149] : memref<22x128xf32, #tpu.memory_space<vmem>>, vector<1x1xf32>
    %436 = vector.broadcast %427 : vector<16x1xf32> to vector<16x32xf32>
    %437 = arith.subf %423, %436 : vector<16x32xf32>
    %438 = vector.broadcast %435 : vector<1x1xf32> to vector<16x32xf32>
    %439 = arith.mulf %438, %437 : vector<16x32xf32>
    %cst_150 = arith.constant 9.99999997E-7 : f32
    %440 = vector.broadcast %cst_150 : f32 to vector<16x1xf32>
    %441 = arith.addf %434, %440 : vector<16x1xf32>
    %442 = math.rsqrt %441 : vector<16x1xf32>
    %443 = vector.broadcast %442 : vector<16x1xf32> to vector<16x32xf32>
    %444 = arith.mulf %439, %443 : vector<16x32xf32>
    %c20 = arith.constant 20 : index
    %c0_151 = arith.constant 0 : index
    %445 = vector.load %arg6[%c20, %c0_151] : memref<22x128xf32, #tpu.memory_space<vmem>>, vector<1x1xf32>
    %446 = vector.broadcast %445 : vector<1x1xf32> to vector<16x32xf32>
    %447 = arith.addf %444, %446 : vector<16x32xf32>
    %448 = arith.truncf %447 : vector<16x32xf32> to vector<16x32xbf16>
    %c704 = arith.constant 704 : index
    %c0_152 = arith.constant 0 : index
    %449 = vector.load %arg5[%c704, %c0_152] : memref<736x128xbf16, #tpu.memory_space<vmem>>, vector<32x128xbf16>
    %cst_153 = arith.constant dense<0.000000e+00> : vector<16x128xf32>
    %450 = tpu.matmul %448, %449, %cst_153 {dimension_numbers = #tpu.dot_dimension_numbers<[1], [0], [0], [1], [0, 0, 1, 1], [], []>} : vector<16x32xbf16>, vector<32x128xbf16>, vector<16x128xf32> -> vector<16x128xf32>
    %c21 = arith.constant 21 : index
    %c0_154 = arith.constant 0 : index
    %451 = vector.load %arg6[%c21, %c0_154] : memref<22x128xf32, #tpu.memory_space<vmem>>, vector<1x128xf32>
    %452 = vector.broadcast %451 : vector<1x128xf32> to vector<16x128xf32>
    %453 = arith.addf %450, %452 : vector<16x128xf32>
    %cst_155 = arith.constant dense<0xFF800000> : vector<16xf32>
    %454 = vector.multi_reduction <maximumf>, %453, %cst_155 [1] : vector<16x128xf32> to vector<16xf32>
    %455 = vector.shape_cast %454 : vector<16xf32> to vector<16x1xf32>
    %456 = vector.broadcast %455 : vector<16x1xf32> to vector<16x128xf32>
    %457 = arith.subf %453, %456 : vector<16x128xf32>
    %458 = math.exp %457 : vector<16x128xf32>
    %cst_156 = arith.constant dense<0.000000e+00> : vector<16xf32>
    %459 = vector.multi_reduction <add>, %458, %cst_156 [1] : vector<16x128xf32> to vector<16xf32>
    %460 = vector.shape_cast %459 : vector<16xf32> to vector<16x1xf32>
    %461 = math.log %460 : vector<16x1xf32>
    %462 = arith.addf %455, %461 : vector<16x1xf32>
    %463 = vector.broadcast %462 : vector<16x1xf32> to vector<16x128xf32>
    %464 = arith.subf %453, %463 : vector<16x128xf32>
    %c0_157 = arith.constant 0 : index
    %c0_158 = arith.constant 0 : index
    %465 = vector.load %arg7[%c0_157, %c0_158] : memref<16x128xf32, #tpu.memory_space<vmem>>, vector<16x128xf32>
    tpu.vector_store %arg7[%c0_157, %c0_158], %464 {strides = array<i32>} : memref<16x128xf32, #tpu.memory_space<vmem>>, vector<16x128xf32>,
    return
  }
}

</mosaic_0001>

<llo_original>
// kernel: forward.1
$region0: #{forward.1}
  #allocation0 [shape = 'u32[]', space=smem, size = 0x4, offset = 0x4, fixed_abs, tag = 'smem constant byte address 0x4 - core index']
  #allocation1 [shape = 'u32[144,128]{1,0:T(1,128)}', space=vmem, size = 0x12000, scoped, tag = 'internal scratch']
  %s0 = inlined_call_operand.vmem [shape: s32[16,1], index: 0, kind: input, shape index: {}]
  %s1 = inlined_call_operand.vmem [shape: s32[16,1], index: 1, kind: input, shape index: {}]
  %s2 = inlined_call_operand.vmem [shape: f32[16,16], index: 2, kind: input, shape index: {}]
  %s3 = inlined_call_operand.vmem [shape: f32[16,16], index: 3, kind: input, shape index: {}]
  %s4 = inlined_call_operand.vmem [shape: f32[8,32], index: 4, kind: input, shape index: {}]
  %s5 = inlined_call_operand.hbm [shape: bf16[736,128], index: 5, kind: input, shape index: {}]
  %s6 = inlined_call_operand.vmem [shape: f32[22,128], index: 6, kind: input, shape index: {}]
  %s7 = inlined_call_operand.vmem [shape: f32[16,128], index: 7, kind: output, shape index: {}]
  %s8 = sld [smem:[#allocation0]]
  $region42: #{forward.1} parent=0
    _
  %s10 = ssub.s32 1, %s8
  %s11 = scalar_select 0, %s10, %s8
  $region1: #{forward.1} parent=0
    #allocation2 [shape = 'u8[188416]{0}', space=vmem, size = 0x2e000, scoped, tag = 'input window, operand 5, single buffered']
    #allocation3 [shape = 's32[1]{0}', space=sflag, size = 0x4, scoped, tag = 'scoped memory for forward.1']
    %12 = vsyncpa [#allocation3], 0
    // Predicated region
    $region2: #{forward.1} parent=1 // pred_check
      _
    $region3: #{forward.1} parent=1 // pred_check_branch
      %14 = sbr.rel (0) target = $region5
    $region4: #{forward.1} parent=1 // pred_region
      _
    $region5: #{forward.1} parent=1 // pred_fallthru
      _
    // Predicated region
    $region6: #{forward.1} parent=1 // pred_check
      _
    $region7: #{forward.1} parent=1 // pred_check_branch
      %16 = sbr.rel (0) target = $region9
    $region8: #{forward.1} parent=1 // pred_region
      _
    $region9: #{forward.1} parent=1 // pred_fallthru
      _
    // Predicated region
    $region10: #{forward.1} parent=1 // pred_check
      _
    $region11: #{forward.1} parent=1 // pred_check_branch
      %18 = sbr.rel (0) target = $region13
    $region12: #{forward.1} parent=1 // pred_region
      _
    $region13: #{forward.1} parent=1 // pred_fallthru
      _
    // Predicated region
    $region14: #{forward.1} parent=1 // pred_check
      _
    $region15: #{forward.1} parent=1 // pred_check_branch
      %20 = sbr.rel (0) target = $region17
    $region16: #{forward.1} parent=1 // pred_region
      _
    $region17: #{forward.1} parent=1 // pred_fallthru
      _
    // Predicated region
    $region18: #{forward.1} parent=1 // pred_check
      _
    $region19: #{forward.1} parent=1 // pred_check_branch
      %22 = sbr.rel (0) target = $region21
    $region20: #{forward.1} parent=1 // pred_region
      _
    $region21: #{forward.1} parent=1 // pred_fallthru
      _
    // Predicated region
    $region22: #{forward.1} parent=1 // pred_check
      _
    $region23: #{forward.1} parent=1 // pred_check_branch
      %24 = sbr.rel (0) target = $region25
    $region24: #{forward.1} parent=1 // pred_region
      %s26 = ssub.s32 5888, 5888
      %27 = vsyncadd [#allocation3], %s26
      %s28 = sshll.u32 [#allocation2], 4
      %s29 = int_to_ptr.vmem [resolvable:$true] %s28
      %34 = dma.hbm_to_vmem [thread:$0]  %s5, 5888, %s29, [#allocation3], 64, 64, 4
    $region25: #{forward.1} parent=1 // pred_fallthru
      _
    // Predicated region
    $region26: #{forward.1} parent=1 // pred_check
      _
    $region27: #{forward.1} parent=1 // pred_check_branch
      %36 = sbr.rel (0) target = $region29
    $region28: #{forward.1} parent=1 // pred_region
      _
    $region29: #{forward.1} parent=1 // pred_fallthru
      _
    // Predicated region
    $region30: #{forward.1} parent=1 // pred_check
      _
    $region31: #{forward.1} parent=1 // pred_check_branch
      %38 = sbr.rel (0) target = $region33
    $region32: #{forward.1} parent=1 // pred_region
      %39 = dma.done [#allocation3], 5888
    $region33: #{forward.1} parent=1 // pred_fallthru
      _
    %v41 = vld [vmem:[%s2] sm:$0xff]
    %v42 = vld [vmem:[%s2 + $0x8] sm:$0xff]
    %v43 = vld [vmem:[%s3] sm:$0xff]
    %v44 = vld [vmem:[%s3 + $0x8] sm:$0xff]
    %v45 = vld [vmem:[%s4] sm:$0xff]
    %v46 = vld [vmem:[#allocation2] sm:$0xf]
    %v47 = vld [vmem:[#allocation2 + $0x4] sm:$0xf]
    %v48 = vld [vmem:[#allocation2 + $0x8] sm:$0xf]
    %v49 = vld [vmem:[#allocation2 + $0xc] sm:$0xf]
    %v50 = vld [vmem:[#allocation2 + $0x10] sm:$0xf]
    %v51 = vld [vmem:[#allocation2 + $0x14] sm:$0xf]
    %v52 = vld [vmem:[#allocation2 + $0x18] sm:$0xf]
    %v53 = vld [vmem:[#allocation2 + $0x1c] sm:$0xf]
    %v54 = vlaneseq
    %v55 = vand.u32 %v54, 127
    %v56 = vld [vmem:[%s0] sm:$0xff]
    %v57 = vld [vmem:[%s0 + $0x8] sm:$0xff]
    %58 = vset.pattern.permute.xlu0 0
    %59 = vperm.xlu0 %58, %v56
    %v60 = vpop.permute.xlu0 %59
    %61 = vset.pattern.permute.xlu0 0
    %62 = vperm.xlu0 %61, %v57
    %v63 = vpop.permute.xlu0 %62
    %vm64 = vcmp.eq.s32.totalorder %v55, %v60
    %vm65 = vcmp.eq.s32.totalorder %v55, %v63
    %v66 = vsel %vm64, 1, 0
    %v67 = vsel %vm65, 1, 0
    %v68 = vcvt.s32.f32 %v66
    %v69 = vcvt.s32.f32 %v67
    %v70 = vpack.c.bf16 %v69, %v68
    %v79 = vunpack.c.l.b16 %v46
    %v80 = vunpack.c.l.b16 %v47
    %v81 = vunpack.c.l.b16 %v48
    %v82 = vunpack.c.l.b16 %v49
    %v83 = vunpack.c.l.b16 %v50
    %v84 = vunpack.c.l.b16 %v51
    %v85 = vunpack.c.l.b16 %v52
    %v86 = vunpack.c.l.b16 %v53
    %v87 = vpack.c.b16 %v80, %v79
    %v88 = vpack.c.b16 %v82, %v81
    %v89 = vpack.c.b16 %v84, %v83
    %v90 = vpack.c.b16 %v86, %v85
    %vm95 = vcmask 523264
    %v97 = vsel %vm95, %v70, 0
    %99 = vmatprep.subr.bf16.mxu0 0
    %100 = vmatpush1.bf16.msra.mxu0 %v87
    %101 = vmatprep.subr.bf16.mxu0 0
    %102 = vmatpush1.bf16.msra.mxu0 %v88
    %103 = vmatprep.subr.bf16.mxu0 0
    %104 = vmatpush1.bf16.msra.mxu0 %v89
    %105 = vmatprep.subr.bf16.mxu0 0
    %106 = vmatpush1.bf16.msra.mxu0 %v90
    %107 = vmatprep.subr.bf16.mxu0 0
    %108 = vmatpush1.bf16.msra.mxu0 0
    %109 = vmatprep.subr.bf16.mxu0 0
    %110 = vmatpush1.bf16.msra.mxu0 0
    %111 = vmatprep.subr.bf16.mxu0 0
    %112 = vmatpush1.bf16.msra.mxu0 0
    %113 = vmatprep.subr.bf16.mxu0 0
    %114 = vmatpush1.bf16.msra.mxu0 0
    %115 = vmatprep.subr.bf16.mxu0 0
    %116 = vmatpush1.bf16.msra.mxu0 0
    %117 = vmatprep.subr.bf16.mxu0 0
    %118 = vmatpush1.bf16.msra.mxu0 0
    %119 = vmatprep.subr.bf16.mxu0 0
    %120 = vmatpush1.bf16.msra.mxu0 0
    %121 = vmatprep.subr.bf16.mxu0 0
    %122 = vmatpush1.bf16.msra.mxu0 0
    %123 = vmatprep.subr.bf16.mxu0 0
    %124 = vmatpush1.bf16.msra.mxu0 0
    %125 = vmatprep.subr.bf16.mxu0 0
    %126 = vmatpush1.bf16.msra.mxu0 0
    %127 = vmatprep.subr.bf16.mxu0 0
    %128 = vmatpush1.bf16.msra.mxu0 0
    %129 = vmatprep.subr.bf16.mxu0 0
    %130 = vmatpush1.bf16.msra.mxu0 0
    %131 = vmatprep.mubr.bf16.mxu0 0
    %132 = vmatmul.mubr.bf16.gmra.mrb[0].mxu0 %v97
    %v133 = vpop.f32.mrb[0].mxu0
    %v134 = vadd.f32 %v45, %v133
    %v135 = vpop.f32.mrb[0].mxu0
    %v136 = vpop.f32.mrb[0].mxu0
    %v137 = vadd.f32 %v45, %v136
    %v138 = vpop.f32.mrb[0].mxu0
    %139 = vdwg.mxu0
    %v140 = vpack.c.bf16 %v137, %v134
    %v141 = vld [vmem:[#allocation2 + $0x40] sm:$0xf]
    %v142 = vld [vmem:[#allocation2 + $0x44] sm:$0xf]
    %v143 = vld [vmem:[#allocation2 + $0x48] sm:$0xf]
    %v144 = vld [vmem:[#allocation2 + $0x4c] sm:$0xf]
    %v149 = vunpack.c.l.b16 %v141
    %v150 = vunpack.c.l.b16 %v142
    %v151 = vunpack.c.l.b16 %v143
    %v152 = vunpack.c.l.b16 %v144
    %v153 = vpack.c.b16 %v150, %v149
    %v154 = vpack.c.b16 %v152, %v151
    %vm157 = vcmask 261120
    %v159 = vsel %vm157, %v140, 0
    %161 = vmatprep.subr.bf16.mxu0 0
    %162 = vmatpush1.bf16.msra.mxu0 %v153
    %163 = vmatprep.subr.bf16.mxu0 0
    %164 = vmatpush1.bf16.msra.mxu0 %v154
    %165 = vmatprep.subr.bf16.mxu0 0
    %166 = vmatpush1.bf16.msra.mxu0 0
    %167 = vmatprep.subr.bf16.mxu0 0
    %168 = vmatpush1.bf16.msra.mxu0 0
    %169 = vmatprep.subr.bf16.mxu0 0
    %170 = vmatpush1.bf16.msra.mxu0 0
    %171 = vmatprep.subr.bf16.mxu0 0
    %172 = vmatpush1.bf16.msra.mxu0 0
    %173 = vmatprep.subr.bf16.mxu0 0
    %174 = vmatpush1.bf16.msra.mxu0 0
    %175 = vmatprep.subr.bf16.mxu0 0
    %176 = vmatpush1.bf16.msra.mxu0 0
    %177 = vmatprep.subr.bf16.mxu0 0
    %178 = vmatpush1.bf16.msra.mxu0 0
    %179 = vmatprep.subr.bf16.mxu0 0
    %180 = vmatpush1.bf16.msra.mxu0 0
    %181 = vmatprep.subr.bf16.mxu0 0
    %182 = vmatpush1.bf16.msra.mxu0 0
    %183 = vmatprep.subr.bf16.mxu0 0
    %184 = vmatpush1.bf16.msra.mxu0 0
    %185 = vmatprep.subr.bf16.mxu0 0
    %186 = vmatpush1.bf16.msra.mxu0 0
    %187 = vmatprep.subr.bf16.mxu0 0
    %188 = vmatpush1.bf16.msra.mxu0 0
    %189 = vmatprep.subr.bf16.mxu0 0
    %190 = vmatpush1.bf16.msra.mxu0 0
    %191 = vmatprep.subr.bf16.mxu0 0
    %192 = vmatpush1.bf16.msra.mxu0 0
    %193 = vmatprep.mubr.bf16.mxu0 0
    %194 = vmatmul.mubr.bf16.gmra.mrb[0].mxu0 %v159
    %v195 = vpop.f32.mrb[0].mxu0
    %v196 = vadd.f32 0.0, %v195
    %v197 = vpop.f32.mrb[0].mxu0
    %v198 = vpop.f32.mrb[0].mxu0
    %v199 = vadd.f32 0.0, %v198
    %v200 = vpop.f32.mrb[0].mxu0
    %201 = vdwg.mxu0
    %v202 = vld [vmem:[#allocation2 + $0x50] sm:$0xf]
    %v203 = vld [vmem:[#allocation2 + $0x54] sm:$0xf]
    %v204 = vld [vmem:[#allocation2 + $0x58] sm:$0xf]
    %v205 = vld [vmem:[#allocation2 + $0x5c] sm:$0xf]
    %v210 = vunpack.c.l.b16 %v202
    %v211 = vunpack.c.l.b16 %v203
    %v212 = vunpack.c.l.b16 %v204
    %v213 = vunpack.c.l.b16 %v205
    %v214 = vpack.c.b16 %v211, %v210
    %v215 = vpack.c.b16 %v213, %v212
    %218 = vmatprep.subr.bf16.mxu0 0
    %219 = vmatpush1.bf16.msra.mxu0 %v214
    %220 = vmatprep.subr.bf16.mxu0 0
    %221 = vmatpush1.bf16.msra.mxu0 %v215
    %222 = vmatprep.subr.bf16.mxu0 0
    %223 = vmatpush1.bf16.msra.mxu0 0
    %224 = vmatprep.subr.bf16.mxu0 0
    %225 = vmatpush1.bf16.msra.mxu0 0
    %226 = vmatprep.subr.bf16.mxu0 0
    %227 = vmatpush1.bf16.msra.mxu0 0
    %228 = vmatprep.subr.bf16.mxu0 0
    %229 = vmatpush1.bf16.msra.mxu0 0
    %230 = vmatprep.subr.bf16.mxu0 0
    %231 = vmatpush1.bf16.msra.mxu0 0
    %232 = vmatprep.subr.bf16.mxu0 0
    %233 = vmatpush1.bf16.msra.mxu0 0
    %234 = vmatprep.subr.bf16.mxu0 0
    %235 = vmatpush1.bf16.msra.mxu0 0
    %236 = vmatprep.subr.bf16.mxu0 0
    %237 = vmatpush1.bf16.msra.mxu0 0
    %238 = vmatprep.subr.bf16.mxu0 0
    %239 = vmatpush1.bf16.msra.mxu0 0
    %240 = vmatprep.subr.bf16.mxu0 0
    %241 = vmatpush1.bf16.msra.mxu0 0
    %242 = vmatprep.subr.bf16.mxu0 0
    %243 = vmatpush1.bf16.msra.mxu0 0
    %244 = vmatprep.subr.bf16.mxu0 0
    %245 = vmatpush1.bf16.msra.mxu0 0
    %246 = vmatprep.subr.bf16.mxu0 0
    %247 = vmatpush1.bf16.msra.mxu0 0
    %248 = vmatprep.subr.bf16.mxu0 0
    %249 = vmatpush1.bf16.msra.mxu0 0
    %250 = vmatprep.mubr.bf16.mxu0 0
    %251 = vmatmul.mubr.bf16.gmra.mrb[0].mxu0 %v159
    %v252 = vpop.f32.mrb[0].mxu0
    %v253 = vadd.f32 0.0, %v252
    %v254 = vpop.f32.mrb[0].mxu0
    %v255 = vpop.f32.mrb[0].mxu0
    %v256 = vadd.f32 0.0, %v255
    %v257 = vpop.f32.mrb[0].mxu0
    %258 = vdwg.mxu0
    %v259 = vld [vmem:[#allocation2 + $0x60] sm:$0xf]
    %v260 = vld [vmem:[#allocation2 + $0x64] sm:$0xf]
    %v261 = vld [vmem:[#allocation2 + $0x68] sm:$0xf]
    %v262 = vld [vmem:[#allocation2 + $0x6c] sm:$0xf]
    %v267 = vunpack.c.l.b16 %v259
    %v268 = vunpack.c.l.b16 %v260
    %v269 = vunpack.c.l.b16 %v261
    %v270 = vunpack.c.l.b16 %v262
    %v271 = vpack.c.b16 %v268, %v267
    %v272 = vpack.c.b16 %v270, %v269
    %275 = vmatprep.subr.bf16.mxu0 0
    %276 = vmatpush1.bf16.msra.mxu0 %v271
    %277 = vmatprep.subr.bf16.mxu0 0
    %278 = vmatpush1.bf16.msra.mxu0 %v272
    %279 = vmatprep.subr.bf16.mxu0 0
    %280 = vmatpush1.bf16.msra.mxu0 0
    %281 = vmatprep.subr.bf16.mxu0 0
    %282 = vmatpush1.bf16.msra.mxu0 0
    %283 = vmatprep.subr.bf16.mxu0 0
    %284 = vmatpush1.bf16.msra.mxu0 0
    %285 = vmatprep.subr.bf16.mxu0 0
    %286 = vmatpush1.bf16.msra.mxu0 0
    %287 = vmatprep.subr.bf16.mxu0 0
    %288 = vmatpush1.bf16.msra.mxu0 0
    %289 = vmatprep.subr.bf16.mxu0 0
    %290 = vmatpush1.bf16.msra.mxu0 0
    %291 = vmatprep.subr.bf16.mxu0 0
    %292 = vmatpush1.bf16.msra.mxu0 0
    %293 = vmatprep.subr.bf16.mxu0 0
    %294 = vmatpush1.bf16.msra.mxu0 0
    %295 = vmatprep.subr.bf16.mxu0 0
    %296 = vmatpush1.bf16.msra.mxu0 0
    %297 = vmatprep.subr.bf16.mxu0 0
    %298 = vmatpush1.bf16.msra.mxu0 0
    %299 = vmatprep.subr.bf16.mxu0 0
    %300 = vmatpush1.bf16.msra.mxu0 0
    %301 = vmatprep.subr.bf16.mxu0 0
    %302 = vmatpush1.bf16.msra.mxu0 0
    %303 = vmatprep.subr.bf16.mxu0 0
    %304 = vmatpush1.bf16.msra.mxu0 0
    %305 = vmatprep.subr.bf16.mxu0 0
    %306 = vmatpush1.bf16.msra.mxu0 0
    %307 = vmatprep.mubr.bf16.mxu0 0
    %308 = vmatmul.mubr.bf16.gmra.mrb[0].mxu0 %v159
    %v309 = vpop.f32.mrb[0].mxu0
    %v310 = vadd.f32 0.0, %v309
    %v311 = vpop.f32.mrb[0].mxu0
    %v312 = vpop.f32.mrb[0].mxu0
    %v313 = vadd.f32 0.0, %v312
    %v314 = vpop.f32.mrb[0].mxu0
    %315 = vdwg.mxu0
    %vm316 = vcmask 64512
    %v318 = vsel %vm316, %v196, 0
    %v321 = vsel %vm316, %v199, 0
    %v324 = vsel %vm316, %v253, 0
    %v327 = vsel %vm316, %v256, 0
    %329 = vmatprep.subr.mxu0 0.0
    %330 = vmatpush1.xpose.msra.mxu0 %v324
    %331 = vmatprep.subr.mxu0 0.0
    %332 = vmatpush1.xpose.msra.mxu0 %v327
    %333 = vmatprep.subr.mxu0 0.0
    %334 = vmatpush1.xpose.msra.mxu0 0.0
    %335 = vmatprep.subr.mxu0 0.0
    %336 = vmatpush1.xpose.msra.mxu0 0.0
    %337 = vmatprep.subr.mxu0 0.0
    %338 = vmatpush1.xpose.msra.mxu0 0.0
    %339 = vmatprep.subr.mxu0 0.0
    %340 = vmatpush1.xpose.msra.mxu0 0.0
    %341 = vmatprep.subr.mxu0 0.0
    %342 = vmatpush1.xpose.msra.mxu0 0.0
    %343 = vmatprep.subr.mxu0 0.0
    %344 = vmatpush1.xpose.msra.mxu0 0.0
    %345 = vmatprep.subr.mxu0 0.0
    %346 = vmatpush1.xpose.msra.mxu0 0.0
    %347 = vmatprep.subr.mxu0 0.0
    %348 = vmatpush1.xpose.msra.mxu0 0.0
    %349 = vmatprep.subr.mxu0 0.0
    %350 = vmatpush1.xpose.msra.mxu0 0.0
    %351 = vmatprep.subr.mxu0 0.0
    %352 = vmatpush1.xpose.msra.mxu0 0.0
    %353 = vmatprep.subr.mxu0 0.0
    %354 = vmatpush1.xpose.msra.mxu0 0.0
    %355 = vmatprep.subr.mxu0 0.0
    %356 = vmatpush1.xpose.msra.mxu0 0.0
    %357 = vmatprep.subr.mxu0 0.0
    %358 = vmatpush1.xpose.msra.mxu0 0.0
    %359 = vmatprep.subr.mxu0 0.0
    %360 = vmatpush1.xpose.msra.mxu0 0.0
    %361 = vmatprep.subr.mxu0 0.0
    %362 = vmatpush1.xpose.msra.mxu0 0.0
    %363 = vmatprep.subr.mxu0 0.0
    %364 = vmatpush1.xpose.msra.mxu0 0.0
    %365 = vmatprep.subr.mxu0 0.0
    %366 = vmatpush1.xpose.msra.mxu0 0.0
    %367 = vmatprep.subr.mxu0 0.0
    %368 = vmatpush1.xpose.msra.mxu0 0.0
    %369 = vmatprep.subr.mxu0 0.0
    %370 = vmatpush1.xpose.msra.mxu0 0.0
    %371 = vmatprep.subr.mxu0 0.0
    %372 = vmatpush1.xpose.msra.mxu0 0.0
    %373 = vmatprep.subr.mxu0 0.0
    %374 = vmatpush1.xpose.msra.mxu0 0.0
    %375 = vmatprep.subr.mxu0 0.0
    %376 = vmatpush1.xpose.msra.mxu0 0.0
    %377 = vmatprep.subr.mxu0 0.0
    %378 = vmatpush1.xpose.msra.mxu0 0.0
    %379 = vmatprep.subr.mxu0 0.0
    %380 = vmatpush1.xpose.msra.mxu0 0.0
    %381 = vmatprep.subr.mxu0 0.0
    %382 = vmatpush1.xpose.msra.mxu0 0.0
    %383 = vmatprep.subr.mxu0 0.0
    %384 = vmatpush1.xpose.msra.mxu0 0.0
    %385 = vmatprep.subr.mxu0 0.0
    %386 = vmatpush1.xpose.msra.mxu0 0.0
    %387 = vmatprep.subr.mxu0 0.0
    %388 = vmatpush1.xpose.msra.mxu0 0.0
    %389 = vmatprep.subr.mxu0 0.0
    %390 = vmatpush1.xpose.msra.mxu0 0.0
    %391 = vmatprep.subr.mxu0 0.0
    %392 = vmatpush1.xpose.msra.mxu0 0.0
    %393 = vmatprep.mubr.f32.mxu0 0.0
    %394 = vmatmul.mubr.f32.gmra.mrb[0].mxu0 %v318
    %v395 = vpop.f32.mrb[0].mxu0
    %v396 = vadd.f32 %v41, %v395
    %v397 = vpop.f32.mrb[0].mxu0
    %398 = vmatprep.mubr.f32.mxu0 0.0
    %399 = vmatmul.mubr.f32.gmra.mrb[0].mxu0 %v321
    %v400 = vpop.f32.mrb[0].mxu0
    %v401 = vadd.f32 %v42, %v400
    %v402 = vpop.f32.mrb[0].mxu0
    %403 = vdwg.mxu0
    %vm404 = vcmask 130048
    %v405 = vsel %vm404, %v396, -inf
    %406 = vmax.xlane.f32.xlu0 %v405
    %v407 = vpop.xlane.xlu0 %406
    %v408 = vsel %vm404, %v401, -inf
    %409 = vmax.xlane.f32.xlu0 %v408
    %v410 = vpop.xlane.xlu0 %409
    %v411 = vsub.f32 %v396, %v407
    %v412 = vsub.f32 %v401, %v410
    %v413 = vmul.f32 %v411, 1.442695
    %v414 = vpow.pop %v413
    %v415 = vmul.f32 %v412, 1.442695
    %v416 = vpow.pop %v415
    %v417 = vsel %vm404, %v414, 0.0
    %418 = vadd.xlane.f32.xlu0 %v417
    %v419 = vpop.xlane.xlu0 %418
    %v420 = vsel %vm404, %v416, 0.0
    %421 = vadd.xlane.f32.xlu0 %v420
    %v422 = vpop.xlane.xlu0 %421
    %v423 = vrcp.pop %v419
    %v424 = vmul.f32 %v414, %v423
    %v425 = vrcp.pop %v422
    %v426 = vmul.f32 %v416, %v425
    %v428 = vsel %vm404, %v424, 0
    %v431 = vsel %vm404, %v426, 0
    %433 = vmatprep.subr.mxu0 0.0
    %434 = vmatpush1.msra.mxu0 %v310
    %435 = vmatprep.subr.mxu0 0.0
    %436 = vmatpush1.msra.mxu0 %v313
    %437 = vmatprep.subr.mxu0 0.0
    %438 = vmatpush1.msra.mxu0 0.0
    %439 = vmatprep.subr.mxu0 0.0
    %440 = vmatpush1.msra.mxu0 0.0
    %441 = vmatprep.subr.mxu0 0.0
    %442 = vmatpush1.msra.mxu0 0.0
    %443 = vmatprep.subr.mxu0 0.0
    %444 = vmatpush1.msra.mxu0 0.0
    %445 = vmatprep.subr.mxu0 0.0
    %446 = vmatpush1.msra.mxu0 0.0
    %447 = vmatprep.subr.mxu0 0.0
    %448 = vmatpush1.msra.mxu0 0.0
    %449 = vmatprep.subr.mxu0 0.0
    %450 = vmatpush1.msra.mxu0 0.0
    %451 = vmatprep.subr.mxu0 0.0
    %452 = vmatpush1.msra.mxu0 0.0
    %453 = vmatprep.subr.mxu0 0.0
    %454 = vmatpush1.msra.mxu0 0.0
    %455 = vmatprep.subr.mxu0 0.0
    %456 = vmatpush1.msra.mxu0 0.0
    %457 = vmatprep.subr.mxu0 0.0
    %458 = vmatpush1.msra.mxu0 0.0
    %459 = vmatprep.subr.mxu0 0.0
    %460 = vmatpush1.msra.mxu0 0.0
    %461 = vmatprep.subr.mxu0 0.0
    %462 = vmatpush1.msra.mxu0 0.0
    %463 = vmatprep.subr.mxu0 0.0
    %464 = vmatpush1.msra.mxu0 0.0
    %465 = vmatprep.subr.mxu0 0.0
    %466 = vmatpush1.msra.mxu0 0.0
    %467 = vmatprep.subr.mxu0 0.0
    %468 = vmatpush1.msra.mxu0 0.0
    %469 = vmatprep.subr.mxu0 0.0
    %470 = vmatpush1.msra.mxu0 0.0
    %471 = vmatprep.subr.mxu0 0.0
    %472 = vmatpush1.msra.mxu0 0.0
    %473 = vmatprep.subr.mxu0 0.0
    %474 = vmatpush1.msra.mxu0 0.0
    %475 = vmatprep.subr.mxu0 0.0
    %476 = vmatpush1.msra.mxu0 0.0
    %477 = vmatprep.subr.mxu0 0.0
    %478 = vmatpush1.msra.mxu0 0.0
    %479 = vmatprep.subr.mxu0 0.0
    %480 = vmatpush1.msra.mxu0 0.0
    %481 = vmatprep.subr.mxu0 0.0
    %482 = vmatpush1.msra.mxu0 0.0
    %483 = vmatprep.subr.mxu0 0.0
    %484 = vmatpush1.msra.mxu0 0.0
    %485 = vmatprep.subr.mxu0 0.0
    %486 = vmatpush1.msra.mxu0 0.0
    %487 = vmatprep.subr.mxu0 0.0
    %488 = vmatpush1.msra.mxu0 0.0
    %489 = vmatprep.subr.mxu0 0.0
    %490 = vmatpush1.msra.mxu0 0.0
    %491 = vmatprep.subr.mxu0 0.0
    %492 = vmatpush1.msra.mxu0 0.0
    %493 = vmatprep.subr.mxu0 0.0
    %494 = vmatpush1.msra.mxu0 0.0
    %495 = vmatprep.subr.mxu0 0.0
    %496 = vmatpush1.msra.mxu0 0.0
    %497 = vmatprep.mubr.f32.mxu0 0.0
    %498 = vmatmul.mubr.f32.gmra.mrb[0].mxu0 %v428
    %v499 = vpop.f32.mrb[0].mxu0
    %v500 = vadd.f32 0.0, %v499
    %v501 = vpop.f32.mrb[0].mxu0
    %502 = vmatprep.mubr.f32.mxu0 0.0
    %503 = vmatmul.mubr.f32.gmra.mrb[0].mxu0 %v431
    %v504 = vpop.f32.mrb[0].mxu0
    %v505 = vadd.f32 0.0, %v504
    %v506 = vpop.f32.mrb[0].mxu0
    %507 = vdwg.mxu0
    %508 = vrot.lane.b32.xlu0 %v196, 120
    %v509 = vpop.permute.xlu0 %508
    %510 = vrot.lane.b32.xlu0 %v199, 120
    %v511 = vpop.permute.xlu0 %510
    %512 = vrot.lane.b32.xlu0 %v253, 120
    %v513 = vpop.permute.xlu0 %512
    %514 = vrot.lane.b32.xlu0 %v256, 120
    %v515 = vpop.permute.xlu0 %514
    %v516 = vsel %vm316, %v509, 0
    %v518 = vsel %vm316, %v511, 0
    %v520 = vsel %vm316, %v513, 0
    %v522 = vsel %vm316, %v515, 0
    %524 = vmatprep.subr.mxu0 0.0
    %525 = vmatpush1.xpose.msra.mxu0 %v520
    %526 = vmatprep.subr.mxu0 0.0
    %527 = vmatpush1.xpose.msra.mxu0 %v522
    %528 = vmatprep.subr.mxu0 0.0
    %529 = vmatpush1.xpose.msra.mxu0 0.0
    %530 = vmatprep.subr.mxu0 0.0
    %531 = vmatpush1.xpose.msra.mxu0 0.0
    %532 = vmatprep.subr.mxu0 0.0
    %533 = vmatpush1.xpose.msra.mxu0 0.0
    %534 = vmatprep.subr.mxu0 0.0
    %535 = vmatpush1.xpose.msra.mxu0 0.0
    %536 = vmatprep.subr.mxu0 0.0
    %537 = vmatpush1.xpose.msra.mxu0 0.0
    %538 = vmatprep.subr.mxu0 0.0
    %539 = vmatpush1.xpose.msra.mxu0 0.0
    %540 = vmatprep.subr.mxu0 0.0
    %541 = vmatpush1.xpose.msra.mxu0 0.0
    %542 = vmatprep.subr.mxu0 0.0
    %543 = vmatpush1.xpose.msra.mxu0 0.0
    %544 = vmatprep.subr.mxu0 0.0
    %545 = vmatpush1.xpose.msra.mxu0 0.0
    %546 = vmatprep.subr.mxu0 0.0
    %547 = vmatpush1.xpose.msra.mxu0 0.0
    %548 = vmatprep.subr.mxu0 0.0
    %549 = vmatpush1.xpose.msra.mxu0 0.0
    %550 = vmatprep.subr.mxu0 0.0
    %551 = vmatpush1.xpose.msra.mxu0 0.0
    %552 = vmatprep.subr.mxu0 0.0
    %553 = vmatpush1.xpose.msra.mxu0 0.0
    %554 = vmatprep.subr.mxu0 0.0
    %555 = vmatpush1.xpose.msra.mxu0 0.0
    %556 = vmatprep.subr.mxu0 0.0
    %557 = vmatpush1.xpose.msra.mxu0 0.0
    %558 = vmatprep.subr.mxu0 0.0
    %559 = vmatpush1.xpose.msra.mxu0 0.0
    %560 = vmatprep.subr.mxu0 0.0
    %561 = vmatpush1.xpose.msra.mxu0 0.0
    %562 = vmatprep.subr.mxu0 0.0
    %563 = vmatpush1.xpose.msra.mxu0 0.0
    %564 = vmatprep.subr.mxu0 0.0
    %565 = vmatpush1.xpose.msra.mxu0 0.0
    %566 = vmatprep.subr.mxu0 0.0
    %567 = vmatpush1.xpose.msra.mxu0 0.0
    %568 = vmatprep.subr.mxu0 0.0
    %569 = vmatpush1.xpose.msra.mxu0 0.0
    %570 = vmatprep.subr.mxu0 0.0
    %571 = vmatpush1.xpose.msra.mxu0 0.0
    %572 = vmatprep.subr.mxu0 0.0
    %573 = vmatpush1.xpose.msra.mxu0 0.0
    %574 = vmatprep.subr.mxu0 0.0
    %575 = vmatpush1.xpose.msra.mxu0 0.0
    %576 = vmatprep.subr.mxu0 0.0
    %577 = vmatpush1.xpose.msra.mxu0 0.0
    %578 = vmatprep.subr.mxu0 0.0
    %579 = vmatpush1.xpose.msra.mxu0 0.0
    %580 = vmatprep.subr.mxu0 0.0
    %581 = vmatpush1.xpose.msra.mxu0 0.0
    %582 = vmatprep.subr.mxu0 0.0
    %583 = vmatpush1.xpose.msra.mxu0 0.0
    %584 = vmatprep.subr.mxu0 0.0
    %585 = vmatpush1.xpose.msra.mxu0 0.0
    %586 = vmatprep.subr.mxu0 0.0
    %587 = vmatpush1.xpose.msra.mxu0 0.0
    %588 = vmatprep.mubr.f32.mxu0 0.0
    %589 = vmatmul.mubr.f32.gmra.mrb[0].mxu0 %v516
    %v590 = vpop.f32.mrb[0].mxu0
    %v591 = vadd.f32 %v41, %v590
    %v592 = vpop.f32.mrb[0].mxu0
    %593 = vmatprep.mubr.f32.mxu0 0.0
    %594 = vmatmul.mubr.f32.gmra.mrb[0].mxu0 %v518
    %v595 = vpop.f32.mrb[0].mxu0
    %v596 = vadd.f32 %v42, %v595
    %v597 = vpop.f32.mrb[0].mxu0
    %598 = vdwg.mxu0
    %v599 = vsel %vm404, %v591, -inf
    %600 = vmax.xlane.f32.xlu0 %v599
    %v601 = vpop.xlane.xlu0 %600
    %v602 = vsel %vm404, %v596, -inf
    %603 = vmax.xlane.f32.xlu0 %v602
    %v604 = vpop.xlane.xlu0 %603
    %v605 = vsub.f32 %v591, %v601
    %v606 = vsub.f32 %v596, %v604
    %v607 = vmul.f32 %v605, 1.442695
    %v608 = vpow.pop %v607
    %v609 = vmul.f32 %v606, 1.442695
    %v610 = vpow.pop %v609
    %v611 = vsel %vm404, %v608, 0.0
    %612 = vadd.xlane.f32.xlu0 %v611
    %v613 = vpop.xlane.xlu0 %612
    %v614 = vsel %vm404, %v610, 0.0
    %615 = vadd.xlane.f32.xlu0 %v614
    %v616 = vpop.xlane.xlu0 %615
    %v617 = vrcp.pop %v613
    %v618 = vmul.f32 %v608, %v617
    %v619 = vrcp.pop %v616
    %v620 = vmul.f32 %v610, %v619
    %623 = vrot.lane.b32.xlu0 %v310, 120
    %v624 = vpop.permute.xlu0 %623
    %625 = vrot.lane.b32.xlu0 %v313, 120
    %v626 = vpop.permute.xlu0 %625
    %v630 = vsel %vm404, %v618, 0
    %v633 = vsel %vm404, %v620, 0
    %635 = vmatprep.subr.mxu0 0.0
    %636 = vmatpush1.msra.mxu0 %v624
    %637 = vmatprep.subr.mxu0 0.0
    %638 = vmatpush1.msra.mxu0 %v626
    %639 = vmatprep.subr.mxu0 0.0
    %640 = vmatpush1.msra.mxu0 0.0
    %641 = vmatprep.subr.mxu0 0.0
    %642 = vmatpush1.msra.mxu0 0.0
    %643 = vmatprep.subr.mxu0 0.0
    %644 = vmatpush1.msra.mxu0 0.0
    %645 = vmatprep.subr.mxu0 0.0
    %646 = vmatpush1.msra.mxu0 0.0
    %647 = vmatprep.subr.mxu0 0.0
    %648 = vmatpush1.msra.mxu0 0.0
    %649 = vmatprep.subr.mxu0 0.0
    %650 = vmatpush1.msra.mxu0 0.0
    %651 = vmatprep.subr.mxu0 0.0
    %652 = vmatpush1.msra.mxu0 0.0
    %653 = vmatprep.subr.mxu0 0.0
    %654 = vmatpush1.msra.mxu0 0.0
    %655 = vmatprep.subr.mxu0 0.0
    %656 = vmatpush1.msra.mxu0 0.0
    %657 = vmatprep.subr.mxu0 0.0
    %658 = vmatpush1.msra.mxu0 0.0
    %659 = vmatprep.subr.mxu0 0.0
    %660 = vmatpush1.msra.mxu0 0.0
    %661 = vmatprep.subr.mxu0 0.0
    %662 = vmatpush1.msra.mxu0 0.0
    %663 = vmatprep.subr.mxu0 0.0
    %664 = vmatpush1.msra.mxu0 0.0
    %665 = vmatprep.subr.mxu0 0.0
    %666 = vmatpush1.msra.mxu0 0.0
    %667 = vmatprep.subr.mxu0 0.0
    %668 = vmatpush1.msra.mxu0 0.0
    %669 = vmatprep.subr.mxu0 0.0
    %670 = vmatpush1.msra.mxu0 0.0
    %671 = vmatprep.subr.mxu0 0.0
    %672 = vmatpush1.msra.mxu0 0.0
    %673 = vmatprep.subr.mxu0 0.0
    %674 = vmatpush1.msra.mxu0 0.0
    %675 = vmatprep.subr.mxu0 0.0
    %676 = vmatpush1.msra.mxu0 0.0
    %677 = vmatprep.subr.mxu0 0.0
    %678 = vmatpush1.msra.mxu0 0.0
    %679 = vmatprep.subr.mxu0 0.0
    %680 = vmatpush1.msra.mxu0 0.0
    %681 = vmatprep.subr.mxu0 0.0
    %682 = vmatpush1.msra.mxu0 0.0
    %683 = vmatprep.subr.mxu0 0.0
    %684 = vmatpush1.msra.mxu0 0.0
    %685 = vmatprep.subr.mxu0 0.0
    %686 = vmatpush1.msra.mxu0 0.0
    %687 = vmatprep.subr.mxu0 0.0
    %688 = vmatpush1.msra.mxu0 0.0
    %689 = vmatprep.subr.mxu0 0.0
    %690 = vmatpush1.msra.mxu0 0.0
    %691 = vmatprep.subr.mxu0 0.0
    %692 = vmatpush1.msra.mxu0 0.0
    %693 = vmatprep.subr.mxu0 0.0
    %694 = vmatpush1.msra.mxu0 0.0
    %695 = vmatprep.subr.mxu0 0.0
    %696 = vmatpush1.msra.mxu0 0.0
    %697 = vmatprep.subr.mxu0 0.0
    %698 = vmatpush1.msra.mxu0 0.0
    %699 = vmatprep.mubr.f32.mxu0 0.0
    %700 = vmatmul.mubr.f32.gmra.mrb[0].mxu0 %v630
    %v701 = vpop.f32.mrb[0].mxu0
    %v702 = vadd.f32 0.0, %v701
    %v703 = vpop.f32.mrb[0].mxu0
    %704 = vmatprep.mubr.f32.mxu0 0.0
    %705 = vmatmul.mubr.f32.gmra.mrb[0].mxu0 %v633
    %v706 = vpop.f32.mrb[0].mxu0
    %v707 = vadd.f32 0.0, %v706
    %v708 = vpop.f32.mrb[0].mxu0
    %709 = vdwg.mxu0
    %710 = vrot.lane.b32.xlu0 %v196, 112
    %v711 = vpop.permute.xlu0 %710
    %712 = vrot.lane.b32.xlu0 %v199, 112
    %v713 = vpop.permute.xlu0 %712
    %714 = vrot.lane.b32.xlu0 %v253, 112
    %v715 = vpop.permute.xlu0 %714
    %716 = vrot.lane.b32.xlu0 %v256, 112
    %v717 = vpop.permute.xlu0 %716
    %v718 = vsel %vm316, %v711, 0
    %v720 = vsel %vm316, %v713, 0
    %v722 = vsel %vm316, %v715, 0
    %v724 = vsel %vm316, %v717, 0
    %726 = vmatprep.subr.mxu0 0.0
    %727 = vmatpush1.xpose.msra.mxu0 %v722
    %728 = vmatprep.subr.mxu0 0.0
    %729 = vmatpush1.xpose.msra.mxu0 %v724
    %730 = vmatprep.subr.mxu0 0.0
    %731 = vmatpush1.xpose.msra.mxu0 0.0
    %732 = vmatprep.subr.mxu0 0.0
    %733 = vmatpush1.xpose.msra.mxu0 0.0
    %734 = vmatprep.subr.mxu0 0.0
    %735 = vmatpush1.xpose.msra.mxu0 0.0
    %736 = vmatprep.subr.mxu0 0.0
    %737 = vmatpush1.xpose.msra.mxu0 0.0
    %738 = vmatprep.subr.mxu0 0.0
    %739 = vmatpush1.xpose.msra.mxu0 0.0
    %740 = vmatprep.subr.mxu0 0.0
    %741 = vmatpush1.xpose.msra.mxu0 0.0
    %742 = vmatprep.subr.mxu0 0.0
    %743 = vmatpush1.xpose.msra.mxu0 0.0
    %744 = vmatprep.subr.mxu0 0.0
    %745 = vmatpush1.xpose.msra.mxu0 0.0
    %746 = vmatprep.subr.mxu0 0.0
    %747 = vmatpush1.xpose.msra.mxu0 0.0
    %748 = vmatprep.subr.mxu0 0.0
    %749 = vmatpush1.xpose.msra.mxu0 0.0
    %750 = vmatprep.subr.mxu0 0.0
    %751 = vmatpush1.xpose.msra.mxu0 0.0
    %752 = vmatprep.subr.mxu0 0.0
    %753 = vmatpush1.xpose.msra.mxu0 0.0
    %754 = vmatprep.subr.mxu0 0.0
    %755 = vmatpush1.xpose.msra.mxu0 0.0
    %756 = vmatprep.subr.mxu0 0.0
    %757 = vmatpush1.xpose.msra.mxu0 0.0
    %758 = vmatprep.subr.mxu0 0.0
    %759 = vmatpush1.xpose.msra.mxu0 0.0
    %760 = vmatprep.subr.mxu0 0.0
    %761 = vmatpush1.xpose.msra.mxu0 0.0
    %762 = vmatprep.subr.mxu0 0.0
    %763 = vmatpush1.xpose.msra.mxu0 0.0
    %764 = vmatprep.subr.mxu0 0.0
    %765 = vmatpush1.xpose.msra.mxu0 0.0
    %766 = vmatprep.subr.mxu0 0.0
    %767 = vmatpush1.xpose.msra.mxu0 0.0
    %768 = vmatprep.subr.mxu0 0.0
    %769 = vmatpush1.xpose.msra.mxu0 0.0
    %770 = vmatprep.subr.mxu0 0.0
    %771 = vmatpush1.xpose.msra.mxu0 0.0
    %772 = vmatprep.subr.mxu0 0.0
    %773 = vmatpush1.xpose.msra.mxu0 0.0
    %774 = vmatprep.subr.mxu0 0.0
    %775 = vmatpush1.xpose.msra.mxu0 0.0
    %776 = vmatprep.subr.mxu0 0.0
    %777 = vmatpush1.xpose.msra.mxu0 0.0
    %778 = vmatprep.subr.mxu0 0.0
    %779 = vmatpush1.xpose.msra.mxu0 0.0
    %780 = vmatprep.subr.mxu0 0.0
    %781 = vmatpush1.xpose.msra.mxu0 0.0
    %782 = vmatprep.subr.mxu0 0.0
    %783 = vmatpush1.xpose.msra.mxu0 0.0
    %784 = vmatprep.subr.mxu0 0.0
    %785 = vmatpush1.xpose.msra.mxu0 0.0
    %786 = vmatprep.subr.mxu0 0.0
    %787 = vmatpush1.xpose.msra.mxu0 0.0
    %788 = vmatprep.subr.mxu0 0.0
    %789 = vmatpush1.xpose.msra.mxu0 0.0
    %790 = vmatprep.mubr.f32.mxu0 0.0
    %791 = vmatmul.mubr.f32.gmra.mrb[0].mxu0 %v718
    %v792 = vpop.f32.mrb[0].mxu0
    %v793 = vadd.f32 %v41, %v792
    %v794 = vpop.f32.mrb[0].mxu0
    %795 = vmatprep.mubr.f32.mxu0 0.0
    %796 = vmatmul.mubr.f32.gmra.mrb[0].mxu0 %v720
    %v797 = vpop.f32.mrb[0].mxu0
    %v798 = vadd.f32 %v42, %v797
    %v799 = vpop.f32.mrb[0].mxu0
    %800 = vdwg.mxu0
    %v801 = vsel %vm404, %v793, -inf
    %802 = vmax.xlane.f32.xlu0 %v801
    %v803 = vpop.xlane.xlu0 %802
    %v804 = vsel %vm404, %v798, -inf
    %805 = vmax.xlane.f32.xlu0 %v804
    %v806 = vpop.xlane.xlu0 %805
    %v807 = vsub.f32 %v793, %v803
    %v808 = vsub.f32 %v798, %v806
    %v809 = vmul.f32 %v807, 1.442695
    %v810 = vpow.pop %v809
    %v811 = vmul.f32 %v808, 1.442695
    %v812 = vpow.pop %v811
    %v813 = vsel %vm404, %v810, 0.0
    %814 = vadd.xlane.f32.xlu0 %v813
    %v815 = vpop.xlane.xlu0 %814
    %v816 = vsel %vm404, %v812, 0.0
    %817 = vadd.xlane.f32.xlu0 %v816
    %v818 = vpop.xlane.xlu0 %817
    %v819 = vrcp.pop %v815
    %v820 = vmul.f32 %v810, %v819
    %v821 = vrcp.pop %v818
    %v822 = vmul.f32 %v812, %v821
    %823 = vrot.lane.b32.xlu0 %v310, 112
    %v824 = vpop.permute.xlu0 %823
    %825 = vrot.lane.b32.xlu0 %v313, 112
    %v826 = vpop.permute.xlu0 %825
    %v830 = vsel %vm404, %v820, 0
    %v833 = vsel %vm404, %v822, 0
    %835 = vmatprep.subr.mxu0 0.0
    %836 = vmatpush1.msra.mxu0 %v824
    %837 = vmatprep.subr.mxu0 0.0
    %838 = vmatpush1.msra.mxu0 %v826
    %839 = vmatprep.subr.mxu0 0.0
    %840 = vmatpush1.msra.mxu0 0.0
    %841 = vmatprep.subr.mxu0 0.0
    %842 = vmatpush1.msra.mxu0 0.0
    %843 = vmatprep.subr.mxu0 0.0
    %844 = vmatpush1.msra.mxu0 0.0
    %845 = vmatprep.subr.mxu0 0.0
    %846 = vmatpush1.msra.mxu0 0.0
    %847 = vmatprep.subr.mxu0 0.0
    %848 = vmatpush1.msra.mxu0 0.0
    %849 = vmatprep.subr.mxu0 0.0
    %850 = vmatpush1.msra.mxu0 0.0
    %851 = vmatprep.subr.mxu0 0.0
    %852 = vmatpush1.msra.mxu0 0.0
    %853 = vmatprep.subr.mxu0 0.0
    %854 = vmatpush1.msra.mxu0 0.0
    %855 = vmatprep.subr.mxu0 0.0
    %856 = vmatpush1.msra.mxu0 0.0
    %857 = vmatprep.subr.mxu0 0.0
    %858 = vmatpush1.msra.mxu0 0.0
    %859 = vmatprep.subr.mxu0 0.0
    %860 = vmatpush1.msra.mxu0 0.0
    %861 = vmatprep.subr.mxu0 0.0
    %862 = vmatpush1.msra.mxu0 0.0
    %863 = vmatprep.subr.mxu0 0.0
    %864 = vmatpush1.msra.mxu0 0.0
    %865 = vmatprep.subr.mxu0 0.0
    %866 = vmatpush1.msra.mxu0 0.0
    %867 = vmatprep.subr.mxu0 0.0
    %868 = vmatpush1.msra.mxu0 0.0
    %869 = vmatprep.subr.mxu0 0.0
    %870 = vmatpush1.msra.mxu0 0.0
    %871 = vmatprep.subr.mxu0 0.0
    %872 = vmatpush1.msra.mxu0 0.0
    %873 = vmatprep.subr.mxu0 0.0
    %874 = vmatpush1.msra.mxu0 0.0
    %875 = vmatprep.subr.mxu0 0.0
    %876 = vmatpush1.msra.mxu0 0.0
    %877 = vmatprep.subr.mxu0 0.0
    %878 = vmatpush1.msra.mxu0 0.0
    %879 = vmatprep.subr.mxu0 0.0
    %880 = vmatpush1.msra.mxu0 0.0
    %881 = vmatprep.subr.mxu0 0.0
    %882 = vmatpush1.msra.mxu0 0.0
    %883 = vmatprep.subr.mxu0 0.0
    %884 = vmatpush1.msra.mxu0 0.0
    %885 = vmatprep.subr.mxu0 0.0
    %886 = vmatpush1.msra.mxu0 0.0
    %887 = vmatprep.subr.mxu0 0.0
    %888 = vmatpush1.msra.mxu0 0.0
    %889 = vmatprep.subr.mxu0 0.0
    %890 = vmatpush1.msra.mxu0 0.0
    %891 = vmatprep.subr.mxu0 0.0
    %892 = vmatpush1.msra.mxu0 0.0
    %893 = vmatprep.subr.mxu0 0.0
    %894 = vmatpush1.msra.mxu0 0.0
    %895 = vmatprep.subr.mxu0 0.0
    %896 = vmatpush1.msra.mxu0 0.0
    %897 = vmatprep.subr.mxu0 0.0
    %898 = vmatpush1.msra.mxu0 0.0
    %899 = vmatprep.mubr.f32.mxu0 0.0
    %900 = vmatmul.mubr.f32.gmra.mrb[0].mxu0 %v830
    %v901 = vpop.f32.mrb[0].mxu0
    %v902 = vadd.f32 0.0, %v901
    %v903 = vpop.f32.mrb[0].mxu0
    %904 = vmatprep.mubr.f32.mxu0 0.0
    %905 = vmatmul.mubr.f32.gmra.mrb[0].mxu0 %v833
    %v906 = vpop.f32.mrb[0].mxu0
    %v907 = vadd.f32 0.0, %v906
    %v908 = vpop.f32.mrb[0].mxu0
    %909 = vdwg.mxu0
    %910 = vrot.lane.b32.xlu0 %v196, 104
    %v911 = vpop.permute.xlu0 %910
    %912 = vrot.lane.b32.xlu0 %v199, 104
    %v913 = vpop.permute.xlu0 %912
    %914 = vrot.lane.b32.xlu0 %v253, 104
    %v915 = vpop.permute.xlu0 %914
    %916 = vrot.lane.b32.xlu0 %v256, 104
    %v917 = vpop.permute.xlu0 %916
    %v918 = vsel %vm316, %v911, 0
    %v920 = vsel %vm316, %v913, 0
    %v922 = vsel %vm316, %v915, 0
    %v924 = vsel %vm316, %v917, 0
    %926 = vmatprep.subr.mxu0 0.0
    %927 = vmatpush1.xpose.msra.mxu0 %v922
    %928 = vmatprep.subr.mxu0 0.0
    %929 = vmatpush1.xpose.msra.mxu0 %v924
    %930 = vmatprep.subr.mxu0 0.0
    %931 = vmatpush1.xpose.msra.mxu0 0.0
    %932 = vmatprep.subr.mxu0 0.0
    %933 = vmatpush1.xpose.msra.mxu0 0.0
    %934 = vmatprep.subr.mxu0 0.0
    %935 = vmatpush1.xpose.msra.mxu0 0.0
    %936 = vmatprep.subr.mxu0 0.0
    %937 = vmatpush1.xpose.msra.mxu0 0.0
    %938 = vmatprep.subr.mxu0 0.0
    %939 = vmatpush1.xpose.msra.mxu0 0.0
    %940 = vmatprep.subr.mxu0 0.0
    %941 = vmatpush1.xpose.msra.mxu0 0.0
    %942 = vmatprep.subr.mxu0 0.0
    %943 = vmatpush1.xpose.msra.mxu0 0.0
    %944 = vmatprep.subr.mxu0 0.0
    %945 = vmatpush1.xpose.msra.mxu0 0.0
    %946 = vmatprep.subr.mxu0 0.0
    %947 = vmatpush1.xpose.msra.mxu0 0.0
    %948 = vmatprep.subr.mxu0 0.0
    %949 = vmatpush1.xpose.msra.mxu0 0.0
    %950 = vmatprep.subr.mxu0 0.0
    %951 = vmatpush1.xpose.msra.mxu0 0.0
    %952 = vmatprep.subr.mxu0 0.0
    %953 = vmatpush1.xpose.msra.mxu0 0.0
    %954 = vmatprep.subr.mxu0 0.0
    %955 = vmatpush1.xpose.msra.mxu0 0.0
    %956 = vmatprep.subr.mxu0 0.0
    %957 = vmatpush1.xpose.msra.mxu0 0.0
    %958 = vmatprep.subr.mxu0 0.0
    %959 = vmatpush1.xpose.msra.mxu0 0.0
    %960 = vmatprep.subr.mxu0 0.0
    %961 = vmatpush1.xpose.msra.mxu0 0.0
    %962 = vmatprep.subr.mxu0 0.0
    %963 = vmatpush1.xpose.msra.mxu0 0.0
    %964 = vmatprep.subr.mxu0 0.0
    %965 = vmatpush1.xpose.msra.mxu0 0.0
    %966 = vmatprep.subr.mxu0 0.0
    %967 = vmatpush1.xpose.msra.mxu0 0.0
    %968 = vmatprep.subr.mxu0 0.0
    %969 = vmatpush1.xpose.msra.mxu0 0.0
    %970 = vmatprep.subr.mxu0 0.0
    %971 = vmatpush1.xpose.msra.mxu0 0.0
    %972 = vmatprep.subr.mxu0 0.0
    %973 = vmatpush1.xpose.msra.mxu0 0.0
    %974 = vmatprep.subr.mxu0 0.0
    %975 = vmatpush1.xpose.msra.mxu0 0.0
    %976 = vmatprep.subr.mxu0 0.0
    %977 = vmatpush1.xpose.msra.mxu0 0.0
    %978 = vmatprep.subr.mxu0 0.0
    %979 = vmatpush1.xpose.msra.mxu0 0.0
    %980 = vmatprep.subr.mxu0 0.0
    %981 = vmatpush1.xpose.msra.mxu0 0.0
    %982 = vmatprep.subr.mxu0 0.0
    %983 = vmatpush1.xpose.msra.mxu0 0.0
    %984 = vmatprep.subr.mxu0 0.0
    %985 = vmatpush1.xpose.msra.mxu0 0.0
    %986 = vmatprep.subr.mxu0 0.0
    %987 = vmatpush1.xpose.msra.mxu0 0.0
    %988 = vmatprep.subr.mxu0 0.0
    %989 = vmatpush1.xpose.msra.mxu0 0.0
    %990 = vmatprep.mubr.f32.mxu0 0.0
    %991 = vmatmul.mubr.f32.gmra.mrb[0].mxu0 %v918
    %v992 = vpop.f32.mrb[0].mxu0
    %v993 = vadd.f32 %v41, %v992
    %v994 = vpop.f32.mrb[0].mxu0
    %995 = vmatprep.mubr.f32.mxu0 0.0
    %996 = vmatmul.mubr.f32.gmra.mrb[0].mxu0 %v920
    %v997 = vpop.f32.mrb[0].mxu0
    %v998 = vadd.f32 %v42, %v997
    %v999 = vpop.f32.mrb[0].mxu0
    %1000 = vdwg.mxu0
    %v1001 = vsel %vm404, %v993, -inf
    %1002 = vmax.xlane.f32.xlu0 %v1001
    %v1003 = vpop.xlane.xlu0 %1002
    %v1004 = vsel %vm404, %v998, -inf
    %1005 = vmax.xlane.f32.xlu0 %v1004
    %v1006 = vpop.xlane.xlu0 %1005
    %v1007 = vsub.f32 %v993, %v1003
    %v1008 = vsub.f32 %v998, %v1006
    %v1009 = vmul.f32 %v1007, 1.442695
    %v1010 = vpow.pop %v1009
    %v1011 = vmul.f32 %v1008, 1.442695
    %v1012 = vpow.pop %v1011
    %v1013 = vsel %vm404, %v1010, 0.0
    %1014 = vadd.xlane.f32.xlu0 %v1013
    %v1015 = vpop.xlane.xlu0 %1014
    %v1016 = vsel %vm404, %v1012, 0.0
    %1017 = vadd.xlane.f32.xlu0 %v1016
    %v1018 = vpop.xlane.xlu0 %1017
    %v1019 = vrcp.pop %v1015
    %v1020 = vmul.f32 %v1010, %v1019
    %v1021 = vrcp.pop %v1018
    %v1022 = vmul.f32 %v1012, %v1021
    %1023 = vrot.lane.b32.xlu0 %v310, 104
    %v1024 = vpop.permute.xlu0 %1023
    %1025 = vrot.lane.b32.xlu0 %v313, 104
    %v1026 = vpop.permute.xlu0 %1025
    %v1030 = vsel %vm404, %v1020, 0
    %v1033 = vsel %vm404, %v1022, 0
    %1035 = vmatprep.subr.mxu0 0.0
    %1036 = vmatpush1.msra.mxu0 %v1024
    %1037 = vmatprep.subr.mxu0 0.0
    %1038 = vmatpush1.msra.mxu0 %v1026
    %1039 = vmatprep.subr.mxu0 0.0
    %1040 = vmatpush1.msra.mxu0 0.0
    %1041 = vmatprep.subr.mxu0 0.0
    %1042 = vmatpush1.msra.mxu0 0.0
    %1043 = vmatprep.subr.mxu0 0.0
    %1044 = vmatpush1.msra.mxu0 0.0
    %1045 = vmatprep.subr.mxu0 0.0
    %1046 = vmatpush1.msra.mxu0 0.0
    %1047 = vmatprep.subr.mxu0 0.0
    %1048 = vmatpush1.msra.mxu0 0.0
    %1049 = vmatprep.subr.mxu0 0.0
    %1050 = vmatpush1.msra.mxu0 0.0
    %1051 = vmatprep.subr.mxu0 0.0
    %1052 = vmatpush1.msra.mxu0 0.0
    %1053 = vmatprep.subr.mxu0 0.0
    %1054 = vmatpush1.msra.mxu0 0.0
    %1055 = vmatprep.subr.mxu0 0.0
    %1056 = vmatpush1.msra.mxu0 0.0
    %1057 = vmatprep.subr.mxu0 0.0
    %1058 = vmatpush1.msra.mxu0 0.0
    %1059 = vmatprep.subr.mxu0 0.0
    %1060 = vmatpush1.msra.mxu0 0.0
    %1061 = vmatprep.subr.mxu0 0.0
    %1062 = vmatpush1.msra.mxu0 0.0
    %1063 = vmatprep.subr.mxu0 0.0
    %1064 = vmatpush1.msra.mxu0 0.0
    %1065 = vmatprep.subr.mxu0 0.0
    %1066 = vmatpush1.msra.mxu0 0.0
    %1067 = vmatprep.subr.mxu0 0.0
    %1068 = vmatpush1.msra.mxu0 0.0
    %1069 = vmatprep.subr.mxu0 0.0
    %1070 = vmatpush1.msra.mxu0 0.0
    %1071 = vmatprep.subr.mxu0 0.0
    %1072 = vmatpush1.msra.mxu0 0.0
    %1073 = vmatprep.subr.mxu0 0.0
    %1074 = vmatpush1.msra.mxu0 0.0
    %1075 = vmatprep.subr.mxu0 0.0
    %1076 = vmatpush1.msra.mxu0 0.0
    %1077 = vmatprep.subr.mxu0 0.0
    %1078 = vmatpush1.msra.mxu0 0.0
    %1079 = vmatprep.subr.mxu0 0.0
    %1080 = vmatpush1.msra.mxu0 0.0
    %1081 = vmatprep.subr.mxu0 0.0
    %1082 = vmatpush1.msra.mxu0 0.0
    %1083 = vmatprep.subr.mxu0 0.0
    %1084 = vmatpush1.msra.mxu0 0.0
    %1085 = vmatprep.subr.mxu0 0.0
    %1086 = vmatpush1.msra.mxu0 0.0
    %1087 = vmatprep.subr.mxu0 0.0
    %1088 = vmatpush1.msra.mxu0 0.0
    %1089 = vmatprep.subr.mxu0 0.0
    %1090 = vmatpush1.msra.mxu0 0.0
    %1091 = vmatprep.subr.mxu0 0.0
    %1092 = vmatpush1.msra.mxu0 0.0
    %1093 = vmatprep.subr.mxu0 0.0
    %1094 = vmatpush1.msra.mxu0 0.0
    %1095 = vmatprep.subr.mxu0 0.0
    %1096 = vmatpush1.msra.mxu0 0.0
    %1097 = vmatprep.subr.mxu0 0.0
    %1098 = vmatpush1.msra.mxu0 0.0
    %1099 = vmatprep.mubr.f32.mxu0 0.0
    %1100 = vmatmul.mubr.f32.gmra.mrb[0].mxu0 %v1030
    %v1101 = vpop.f32.mrb[0].mxu0
    %v1102 = vadd.f32 0.0, %v1101
    %v1103 = vpop.f32.mrb[0].mxu0
    %1104 = vmatprep.mubr.f32.mxu0 0.0
    %1105 = vmatmul.mubr.f32.gmra.mrb[0].mxu0 %v1033
    %v1106 = vpop.f32.mrb[0].mxu0
    %v1107 = vadd.f32 0.0, %v1106
    %v1108 = vpop.f32.mrb[0].mxu0
    %1109 = vdwg.mxu0
    %1112 = vrot.lane.b32.xlu0 %v702, 8
    %v1113 = vpop.permute.xlu0 %1112
    %1114 = vrot.lane.b32.xlu0 %v707, 8
    %v1115 = vpop.permute.xlu0 %1114
    %1120 = vrot.lane.b32.xlu0 %v902, 16
    %v1121 = vpop.permute.xlu0 %1120
    %1122 = vrot.lane.b32.xlu0 %v907, 16
    %v1123 = vpop.permute.xlu0 %1122
    %1128 = vrot.lane.b32.xlu0 %v1102, 24
    %v1129 = vpop.permute.xlu0 %1128
    %1130 = vrot.lane.b32.xlu0 %v1107, 24
    %v1131 = vpop.permute.xlu0 %1130
    %v1134 = vsel %vm316, %v500, %v1113
    %v1135 = vsel %vm316, %v505, %v1115
    %v1136 = vsel %vm404, %v1134, %v1121
    %v1137 = vsel %vm404, %v1135, %v1123
    %vm1138 = vcmask 195584
    %v1139 = vsel %vm1138, %v1136, %v1129
    %v1140 = vsel %vm1138, %v1137, %v1131
    %v1141 = vpack.c.bf16 %v1140, %v1139
    %v1142 = vld [vmem:[#allocation2 + $0x70] sm:$0xf]
    %v1143 = vld [vmem:[#allocation2 + $0x74] sm:$0xf]
    %v1144 = vld [vmem:[#allocation2 + $0x78] sm:$0xf]
    %v1145 = vld [vmem:[#allocation2 + $0x7c] sm:$0xf]
    %v1146 = vld [vmem:[%s6] sm:$0x1]
    %v1147 = vlaneseq
    %v1148 = vshrl.u32 %v1147, 7
    %v1149 = vsub.s32 0, %v1148
    %v1150 = vrot.slane %v1146, %v1149
    %v1155 = vunpack.c.l.b16 %v1142
    %v1156 = vunpack.c.l.b16 %v1143
    %v1157 = vunpack.c.l.b16 %v1144
    %v1158 = vunpack.c.l.b16 %v1145
    %v1159 = vpack.c.b16 %v1156, %v1155
    %v1160 = vpack.c.b16 %v1158, %v1157
    %v1164 = vsel %vm157, %v1141, 0
    %1166 = vmatprep.subr.bf16.mxu0 0
    %1167 = vmatpush1.bf16.msra.mxu0 %v1159
    %1168 = vmatprep.subr.bf16.mxu0 0
    %1169 = vmatpush1.bf16.msra.mxu0 %v1160
    %1170 = vmatprep.subr.bf16.mxu0 0
    %1171 = vmatpush1.bf16.msra.mxu0 0
    %1172 = vmatprep.subr.bf16.mxu0 0
    %1173 = vmatpush1.bf16.msra.mxu0 0
    %1174 = vmatprep.subr.bf16.mxu0 0
    %1175 = vmatpush1.bf16.msra.mxu0 0
    %1176 = vmatprep.subr.bf16.mxu0 0
    %1177 = vmatpush1.bf16.msra.mxu0 0
    %1178 = vmatprep.subr.bf16.mxu0 0
    %1179 = vmatpush1.bf16.msra.mxu0 0
    %1180 = vmatprep.subr.bf16.mxu0 0
    %1181 = vmatpush1.bf16.msra.mxu0 0
    %1182 = vmatprep.subr.bf16.mxu0 0
    %1183 = vmatpush1.bf16.msra.mxu0 0
    %1184 = vmatprep.subr.bf16.mxu0 0
    %1185 = vmatpush1.bf16.msra.mxu0 0
    %1186 = vmatprep.subr.bf16.mxu0 0
    %1187 = vmatpush1.bf16.msra.mxu0 0
    %1188 = vmatprep.subr.bf16.mxu0 0
    %1189 = vmatpush1.bf16.msra.mxu0 0
    %1190 = vmatprep.subr.bf16.mxu0 0
    %1191 = vmatpush1.bf16.msra.mxu0 0
    %1192 = vmatprep.subr.bf16.mxu0 0
    %1193 = vmatpush1.bf16.msra.mxu0 0
    %1194 = vmatprep.subr.bf16.mxu0 0
    %1195 = vmatpush1.bf16.msra.mxu0 0
    %1196 = vmatprep.subr.bf16.mxu0 0
    %1197 = vmatpush1.bf16.msra.mxu0 0
    %1198 = vmatprep.mubr.bf16.mxu0 0
    %1199 = vmatmul.mubr.bf16.gmra.mrb[0].mxu0 %v1164
    %v1200 = vpop.f32.mrb[0].mxu0
    %v1201 = vadd.f32 %v1150, %v1200
    %v1202 = vpop.f32.mrb[0].mxu0
    %v1203 = vpop.f32.mrb[0].mxu0
    %v1204 = vadd.f32 %v1150, %v1203
    %v1205 = vpop.f32.mrb[0].mxu0
    %1206 = vdwg.mxu0
    %v1207 = vsel %vm157, %v1201, 0.0
    %1208 = vadd.xlane.f32.xlu0 %v1207
    %v1209 = vpop.xlane.xlu0 %1208
    %v1210 = vsel %vm157, %v1204, 0.0
    %1211 = vadd.xlane.f32.xlu0 %v1210
    %v1212 = vpop.xlane.xlu0 %1211
    %v1213 = vrcp.pop 32.0
    %v1214 = vmul.f32 %v1209, %v1213
    %v1215 = vmul.f32 %v1212, %v1213
    %v1216 = vsub.f32 %v1201, %v1214
    %v1217 = vsub.f32 %v1204, %v1215
    %v1218 = vmul.f32 %v1216, %v1216
    %v1219 = vmul.f32 %v1217, %v1217
    %v1220 = vsel %vm157, %v1218, 0.0
    %1221 = vadd.xlane.f32.xlu0 %v1220
    %v1222 = vpop.xlane.xlu0 %1221
    %v1223 = vsel %vm157, %v1219, 0.0
    %1224 = vadd.xlane.f32.xlu0 %v1223
    %v1225 = vpop.xlane.xlu0 %1224
    %v1226 = vmul.f32 %v1222, 0.032258064
    %v1227 = vmul.f32 %v1225, 0.032258064
    %v1228 = vld [vmem:[%s6 + $0x3] sm:$0x1]
    %s1230 = vtos %v1228
    %v1231 = vstv %s1230
    %v1233 = vmul.f32 %v1231, %v1216
    %v1234 = vmul.f32 %v1231, %v1217
    %v1235 = vadd.f32 %v1226, 1e-06
    %v1236 = vadd.f32 %v1227, 1e-06
    %v1237 = vrsqrt.pop %v1235
    %v1238 = vrsqrt.pop %v1236
    %v1239 = vmul.f32 %v1233, %v1237
    %v1240 = vmul.f32 %v1234, %v1238
    %v1241 = vld [vmem:[%s6 + $0x4] sm:$0x1]
    %s1243 = vtos %v1241
    %v1244 = vstv %s1243
    %v1246 = vadd.f32 %v1239, %v1244
    %v1247 = vadd.f32 %v1240, %v1244
    %v1248 = vadd.f32 %v134, %v1246
    %v1249 = vadd.f32 %v137, %v1247
    %v1250 = vpack.c.bf16 %v1249, %v1248
    %v1251 = vld [vmem:[#allocation2 + $0x80] sm:$0xf]
    %v1252 = vld [vmem:[#allocation2 + $0x84] sm:$0xf]
    %v1253 = vld [vmem:[#allocation2 + $0x88] sm:$0xf]
    %v1254 = vld [vmem:[#allocation2 + $0x8c] sm:$0xf]
    %v1255 = vld [vmem:[%s6 + $0x1] sm:$0x1]
    %v1256 = vlaneseq
    %v1257 = vshrl.u32 %v1256, 7
    %v1258 = vsub.s32 0, %v1257
    %v1259 = vrot.slane %v1255, %v1258
    %v1264 = vunpack.c.l.b16 %v1251
    %v1265 = vunpack.c.l.b16 %v1252
    %v1266 = vunpack.c.l.b16 %v1253
    %v1267 = vunpack.c.l.b16 %v1254
    %v1268 = vpack.c.b16 %v1265, %v1264
    %v1269 = vpack.c.b16 %v1267, %v1266
    %v1273 = vsel %vm157, %v1250, 0
    %1275 = vmatprep.subr.bf16.mxu0 0
    %1276 = vmatpush1.bf16.msra.mxu0 %v1268
    %1277 = vmatprep.subr.bf16.mxu0 0
    %1278 = vmatpush1.bf16.msra.mxu0 %v1269
    %1279 = vmatprep.subr.bf16.mxu0 0
    %1280 = vmatpush1.bf16.msra.mxu0 0
    %1281 = vmatprep.subr.bf16.mxu0 0
    %1282 = vmatpush1.bf16.msra.mxu0 0
    %1283 = vmatprep.subr.bf16.mxu0 0
    %1284 = vmatpush1.bf16.msra.mxu0 0
    %1285 = vmatprep.subr.bf16.mxu0 0
    %1286 = vmatpush1.bf16.msra.mxu0 0
    %1287 = vmatprep.subr.bf16.mxu0 0
    %1288 = vmatpush1.bf16.msra.mxu0 0
    %1289 = vmatprep.subr.bf16.mxu0 0
    %1290 = vmatpush1.bf16.msra.mxu0 0
    %1291 = vmatprep.subr.bf16.mxu0 0
    %1292 = vmatpush1.bf16.msra.mxu0 0
    %1293 = vmatprep.subr.bf16.mxu0 0
    %1294 = vmatpush1.bf16.msra.mxu0 0
    %1295 = vmatprep.subr.bf16.mxu0 0
    %1296 = vmatpush1.bf16.msra.mxu0 0
    %1297 = vmatprep.subr.bf16.mxu0 0
    %1298 = vmatpush1.bf16.msra.mxu0 0
    %1299 = vmatprep.subr.bf16.mxu0 0
    %1300 = vmatpush1.bf16.msra.mxu0 0
    %1301 = vmatprep.subr.bf16.mxu0 0
    %1302 = vmatpush1.bf16.msra.mxu0 0
    %1303 = vmatprep.subr.bf16.mxu0 0
    %1304 = vmatpush1.bf16.msra.mxu0 0
    %1305 = vmatprep.subr.bf16.mxu0 0
    %1306 = vmatpush1.bf16.msra.mxu0 0
    %1307 = vmatprep.mubr.bf16.mxu0 0
    %1308 = vmatmul.mubr.bf16.gmra.mrb[0].mxu0 %v1273
    %v1309 = vpop.f32.mrb[0].mxu0
    %v1310 = vadd.f32 %v1259, %v1309
    %v1311 = vpop.f32.mrb[0].mxu0
    %v1312 = vpop.f32.mrb[0].mxu0
    %v1313 = vadd.f32 %v1259, %v1312
    %v1314 = vpop.f32.mrb[0].mxu0
    %1315 = vdwg.mxu0
    %v1316 = vmax.f32 %v1310, 0.0
    %v1317 = vmax.f32 %v1313, 0.0
    %v1318 = vpack.c.bf16 %v1317, %v1316
    %v1319 = vld [vmem:[#allocation2 + $0x90] sm:$0xf]
    %v1320 = vld [vmem:[#allocation2 + $0x94] sm:$0xf]
    %v1321 = vld [vmem:[#allocation2 + $0x98] sm:$0xf]
    %v1322 = vld [vmem:[#allocation2 + $0x9c] sm:$0xf]
    %v1323 = vld [vmem:[#allocation2 + $0xa0] sm:$0xf]
    %v1324 = vld [vmem:[#allocation2 + $0xa4] sm:$0xf]
    %v1325 = vld [vmem:[#allocation2 + $0xa8] sm:$0xf]
    %v1326 = vld [vmem:[#allocation2 + $0xac] sm:$0xf]
    %v1327 = vld [vmem:[%s6 + $0x2] sm:$0x1]
    %v1328 = vlaneseq
    %v1329 = vshrl.u32 %v1328, 7
    %v1330 = vsub.s32 0, %v1329
    %v1331 = vrot.slane %v1327, %v1330
    %v1340 = vunpack.c.l.b16 %v1319
    %v1341 = vunpack.c.l.b16 %v1320
    %v1342 = vunpack.c.l.b16 %v1321
    %v1343 = vunpack.c.l.b16 %v1322
    %v1344 = vunpack.c.l.b16 %v1323
    %v1345 = vunpack.c.l.b16 %v1324
    %v1346 = vunpack.c.l.b16 %v1325
    %v1347 = vunpack.c.l.b16 %v1326
    %v1348 = vpack.c.b16 %v1341, %v1340
    %v1349 = vpack.c.b16 %v1343, %v1342
    %v1350 = vpack.c.b16 %v1345, %v1344
    %v1351 = vpack.c.b16 %v1347, %v1346
    %v1357 = vsel %vm95, %v1318, 0
    %1359 = vmatprep.subr.bf16.mxu0 0
    %1360 = vmatpush1.bf16.msra.mxu0 %v1348
    %1361 = vmatprep.subr.bf16.mxu0 0
    %1362 = vmatpush1.bf16.msra.mxu0 %v1349
    %1363 = vmatprep.subr.bf16.mxu0 0
    %1364 = vmatpush1.bf16.msra.mxu0 %v1350
    %1365 = vmatprep.subr.bf16.mxu0 0
    %1366 = vmatpush1.bf16.msra.mxu0 %v1351
    %1367 = vmatprep.subr.bf16.mxu0 0
    %1368 = vmatpush1.bf16.msra.mxu0 0
    %1369 = vmatprep.subr.bf16.mxu0 0
    %1370 = vmatpush1.bf16.msra.mxu0 0
    %1371 = vmatprep.subr.bf16.mxu0 0
    %1372 = vmatpush1.bf16.msra.mxu0 0
    %1373 = vmatprep.subr.bf16.mxu0 0
    %1374 = vmatpush1.bf16.msra.mxu0 0
    %1375 = vmatprep.subr.bf16.mxu0 0
    %1376 = vmatpush1.bf16.msra.mxu0 0
    %1377 = vmatprep.subr.bf16.mxu0 0
    %1378 = vmatpush1.bf16.msra.mxu0 0
    %1379 = vmatprep.subr.bf16.mxu0 0
    %1380 = vmatpush1.bf16.msra.mxu0 0
    %1381 = vmatprep.subr.bf16.mxu0 0
    %1382 = vmatpush1.bf16.msra.mxu0 0
    %1383 = vmatprep.subr.bf16.mxu0 0
    %1384 = vmatpush1.bf16.msra.mxu0 0
    %1385 = vmatprep.subr.bf16.mxu0 0
    %1386 = vmatpush1.bf16.msra.mxu0 0
    %1387 = vmatprep.subr.bf16.mxu0 0
    %1388 = vmatpush1.bf16.msra.mxu0 0
    %1389 = vmatprep.subr.bf16.mxu0 0
    %1390 = vmatpush1.bf16.msra.mxu0 0
    %1391 = vmatprep.mubr.bf16.mxu0 0
    %1392 = vmatmul.mubr.bf16.gmra.mrb[0].mxu0 %v1357
    %v1393 = vpop.f32.mrb[0].mxu0
    %v1394 = vadd.f32 %v1331, %v1393
    %v1395 = vpop.f32.mrb[0].mxu0
    %v1396 = vpop.f32.mrb[0].mxu0
    %v1397 = vadd.f32 %v1331, %v1396
    %v1398 = vpop.f32.mrb[0].mxu0
    %1399 = vdwg.mxu0
    %v1400 = vsel %vm157, %v1394, 0.0
    %1401 = vadd.xlane.f32.xlu0 %v1400
    %v1402 = vpop.xlane.xlu0 %1401
    %v1403 = vsel %vm157, %v1397, 0.0
    %1404 = vadd.xlane.f32.xlu0 %v1403
    %v1405 = vpop.xlane.xlu0 %1404
    %v1406 = vmul.f32 %v1402, %v1213
    %v1407 = vmul.f32 %v1405, %v1213
    %v1408 = vsub.f32 %v1394, %v1406
    %v1409 = vsub.f32 %v1397, %v1407
    %v1410 = vmul.f32 %v1408, %v1408
    %v1411 = vmul.f32 %v1409, %v1409
    %v1412 = vsel %vm157, %v1410, 0.0
    %1413 = vadd.xlane.f32.xlu0 %v1412
    %v1414 = vpop.xlane.xlu0 %1413
    %v1415 = vsel %vm157, %v1411, 0.0
    %1416 = vadd.xlane.f32.xlu0 %v1415
    %v1417 = vpop.xlane.xlu0 %1416
    %v1418 = vmul.f32 %v1414, 0.032258064
    %v1419 = vmul.f32 %v1417, 0.032258064
    %v1420 = vld [vmem:[%s6 + $0x5] sm:$0x1]
    %s1422 = vtos %v1420
    %v1423 = vstv %s1422
    %v1425 = vmul.f32 %v1423, %v1408
    %v1426 = vmul.f32 %v1423, %v1409
    %v1427 = vadd.f32 %v1418, 1e-06
    %v1428 = vadd.f32 %v1419, 1e-06
    %v1429 = vrsqrt.pop %v1427
    %v1430 = vrsqrt.pop %v1428
    %v1431 = vmul.f32 %v1425, %v1429
    %v1432 = vmul.f32 %v1426, %v1430
    %v1433 = vld [vmem:[%s6 + $0x6] sm:$0x1]
    %s1435 = vtos %v1433
    %v1436 = vstv %s1435
    %v1438 = vadd.f32 %v1431, %v1436
    %v1439 = vadd.f32 %v1432, %v1436
    %v1440 = vadd.f32 %v1248, %v1438
    %v1441 = vadd.f32 %v1249, %v1439
    %v1442 = vsel %vm157, %v1440, 0.0
    %1443 = vadd.xlane.f32.xlu0 %v1442
    %v1444 = vpop.xlane.xlu0 %1443
    %v1445 = vsel %vm157, %v1441, 0.0
    %1446 = vadd.xlane.f32.xlu0 %v1445
    %v1447 = vpop.xlane.xlu0 %1446
    %v1448 = vmul.f32 %v1444, %v1213
    %v1449 = vmul.f32 %v1447, %v1213
    %v1450 = vsub.f32 %v1440, %v1448
    %v1451 = vsub.f32 %v1441, %v1449
    %v1452 = vmul.f32 %v1450, %v1450
    %v1453 = vmul.f32 %v1451, %v1451
    %v1454 = vsel %vm157, %v1452, 0.0
    %1455 = vadd.xlane.f32.xlu0 %v1454
    %v1456 = vpop.xlane.xlu0 %1455
    %v1457 = vsel %vm157, %v1453, 0.0
    %1458 = vadd.xlane.f32.xlu0 %v1457
    %v1459 = vpop.xlane.xlu0 %1458
    %v1460 = vmul.f32 %v1456, 0.032258064
    %v1461 = vmul.f32 %v1459, 0.032258064
    %v1462 = vld [vmem:[%s6 + $0x11] sm:$0x1]
    %s1464 = vtos %v1462
    %v1465 = vstv %s1464
    %v1467 = vmul.f32 %v1465, %v1450
    %v1468 = vmul.f32 %v1465, %v1451
    %v1469 = vadd.f32 %v1460, 1e-06
    %v1470 = vadd.f32 %v1461, 1e-06
    %v1471 = vrsqrt.pop %v1469
    %v1472 = vrsqrt.pop %v1470
    %v1473 = vmul.f32 %v1467, %v1471
    %v1474 = vmul.f32 %v1468, %v1472
    %v1475 = vld [vmem:[%s6 + $0x12] sm:$0x1]
    %s1477 = vtos %v1475
    %v1478 = vstv %s1477
    %v1480 = vadd.f32 %v1473, %v1478
    %v1481 = vadd.f32 %v1474, %v1478
    %v1482 = vld [vmem:[#allocation2 + $0x20] sm:$0xf]
    %v1483 = vld [vmem:[#allocation2 + $0x24] sm:$0xf]
    %v1484 = vld [vmem:[#allocation2 + $0x28] sm:$0xf]
    %v1485 = vld [vmem:[#allocation2 + $0x2c] sm:$0xf]
    %v1486 = vld [vmem:[#allocation2 + $0x30] sm:$0xf]
    %v1487 = vld [vmem:[#allocation2 + $0x34] sm:$0xf]
    %v1488 = vld [vmem:[#allocation2 + $0x38] sm:$0xf]
    %v1489 = vld [vmem:[#allocation2 + $0x3c] sm:$0xf]
    %v1490 = vld [vmem:[%s1] sm:$0xff]
    %v1491 = vld [vmem:[%s1 + $0x8] sm:$0xff]
    %1492 = vset.pattern.permute.xlu0 0
    %1493 = vperm.xlu0 %1492, %v1490
    %v1494 = vpop.permute.xlu0 %1493
    %1495 = vset.pattern.permute.xlu0 0
    %1496 = vperm.xlu0 %1495, %v1491
    %v1497 = vpop.permute.xlu0 %1496
    %vm1498 = vcmp.eq.s32.totalorder %v55, %v1494
    %vm1499 = vcmp.eq.s32.totalorder %v55, %v1497
    %v1500 = vsel %vm1498, 1, 0
    %v1501 = vsel %vm1499, 1, 0
    %v1502 = vcvt.s32.f32 %v1500
    %v1503 = vcvt.s32.f32 %v1501
    %v1504 = vpack.c.bf16 %v1503, %v1502
    %v1513 = vunpack.c.l.b16 %v1482
    %v1514 = vunpack.c.l.b16 %v1483
    %v1515 = vunpack.c.l.b16 %v1484
    %v1516 = vunpack.c.l.b16 %v1485
    %v1517 = vunpack.c.l.b16 %v1486
    %v1518 = vunpack.c.l.b16 %v1487
    %v1519 = vunpack.c.l.b16 %v1488
    %v1520 = vunpack.c.l.b16 %v1489
    %v1521 = vpack.c.b16 %v1514, %v1513
    %v1522 = vpack.c.b16 %v1516, %v1515
    %v1523 = vpack.c.b16 %v1518, %v1517
    %v1524 = vpack.c.b16 %v1520, %v1519
    %v1530 = vsel %vm95, %v1504, 0
    %1532 = vmatprep.subr.bf16.mxu0 0
    %1533 = vmatpush1.bf16.msra.mxu0 %v1521
    %1534 = vmatprep.subr.bf16.mxu0 0
    %1535 = vmatpush1.bf16.msra.mxu0 %v1522
    %1536 = vmatprep.subr.bf16.mxu0 0
    %1537 = vmatpush1.bf16.msra.mxu0 %v1523
    %1538 = vmatprep.subr.bf16.mxu0 0
    %1539 = vmatpush1.bf16.msra.mxu0 %v1524
    %1540 = vmatprep.subr.bf16.mxu0 0
    %1541 = vmatpush1.bf16.msra.mxu0 0
    %1542 = vmatprep.subr.bf16.mxu0 0
    %1543 = vmatpush1.bf16.msra.mxu0 0
    %1544 = vmatprep.subr.bf16.mxu0 0
    %1545 = vmatpush1.bf16.msra.mxu0 0
    %1546 = vmatprep.subr.bf16.mxu0 0
    %1547 = vmatpush1.bf16.msra.mxu0 0
    %1548 = vmatprep.subr.bf16.mxu0 0
    %1549 = vmatpush1.bf16.msra.mxu0 0
    %1550 = vmatprep.subr.bf16.mxu0 0
    %1551 = vmatpush1.bf16.msra.mxu0 0
    %1552 = vmatprep.subr.bf16.mxu0 0
    %1553 = vmatpush1.bf16.msra.mxu0 0
    %1554 = vmatprep.subr.bf16.mxu0 0
    %1555 = vmatpush1.bf16.msra.mxu0 0
    %1556 = vmatprep.subr.bf16.mxu0 0
    %1557 = vmatpush1.bf16.msra.mxu0 0
    %1558 = vmatprep.subr.bf16.mxu0 0
    %1559 = vmatpush1.bf16.msra.mxu0 0
    %1560 = vmatprep.subr.bf16.mxu0 0
    %1561 = vmatpush1.bf16.msra.mxu0 0
    %1562 = vmatprep.subr.bf16.mxu0 0
    %1563 = vmatpush1.bf16.msra.mxu0 0
    %1564 = vmatprep.mubr.bf16.mxu0 0
    %1565 = vmatmul.mubr.bf16.gmra.mrb[0].mxu0 %v1530
    %v1566 = vpop.f32.mrb[0].mxu0
    %v1567 = vadd.f32 %v45, %v1566
    %v1568 = vpop.f32.mrb[0].mxu0
    %v1569 = vpop.f32.mrb[0].mxu0
    %v1570 = vadd.f32 %v45, %v1569
    %v1571 = vpop.f32.mrb[0].mxu0
    %1572 = vdwg.mxu0
    %v1573 = vpack.c.bf16 %v1570, %v1567
    %v1574 = vld [vmem:[#allocation2 + $0xb0] sm:$0xf]
    %v1575 = vld [vmem:[#allocation2 + $0xb4] sm:$0xf]
    %v1576 = vld [vmem:[#allocation2 + $0xb8] sm:$0xf]
    %v1577 = vld [vmem:[#allocation2 + $0xbc] sm:$0xf]
    %v1582 = vunpack.c.l.b16 %v1574
    %v1583 = vunpack.c.l.b16 %v1575
    %v1584 = vunpack.c.l.b16 %v1576
    %v1585 = vunpack.c.l.b16 %v1577
    %v1586 = vpack.c.b16 %v1583, %v1582
    %v1587 = vpack.c.b16 %v1585, %v1584
    %v1591 = vsel %vm157, %v1573, 0
    %1593 = vmatprep.subr.bf16.mxu0 0
    %1594 = vmatpush1.bf16.msra.mxu0 %v1586
    %1595 = vmatprep.subr.bf16.mxu0 0
    %1596 = vmatpush1.bf16.msra.mxu0 %v1587
    %1597 = vmatprep.subr.bf16.mxu0 0
    %1598 = vmatpush1.bf16.msra.mxu0 0
    %1599 = vmatprep.subr.bf16.mxu0 0
    %1600 = vmatpush1.bf16.msra.mxu0 0
    %1601 = vmatprep.subr.bf16.mxu0 0
    %1602 = vmatpush1.bf16.msra.mxu0 0
    %1603 = vmatprep.subr.bf16.mxu0 0
    %1604 = vmatpush1.bf16.msra.mxu0 0
    %1605 = vmatprep.subr.bf16.mxu0 0
    %1606 = vmatpush1.bf16.msra.mxu0 0
    %1607 = vmatprep.subr.bf16.mxu0 0
    %1608 = vmatpush1.bf16.msra.mxu0 0
    %1609 = vmatprep.subr.bf16.mxu0 0
    %1610 = vmatpush1.bf16.msra.mxu0 0
    %1611 = vmatprep.subr.bf16.mxu0 0
    %1612 = vmatpush1.bf16.msra.mxu0 0
    %1613 = vmatprep.subr.bf16.mxu0 0
    %1614 = vmatpush1.bf16.msra.mxu0 0
    %1615 = vmatprep.subr.bf16.mxu0 0
    %1616 = vmatpush1.bf16.msra.mxu0 0
    %1617 = vmatprep.subr.bf16.mxu0 0
    %1618 = vmatpush1.bf16.msra.mxu0 0
    %1619 = vmatprep.subr.bf16.mxu0 0
    %1620 = vmatpush1.bf16.msra.mxu0 0
    %1621 = vmatprep.subr.bf16.mxu0 0
    %1622 = vmatpush1.bf16.msra.mxu0 0
    %1623 = vmatprep.subr.bf16.mxu0 0
    %1624 = vmatpush1.bf16.msra.mxu0 0
    %1625 = vmatprep.mubr.bf16.mxu0 0
    %1626 = vmatmul.mubr.bf16.gmra.mrb[0].mxu0 %v1591
    %v1627 = vpop.f32.mrb[0].mxu0
    %v1628 = vadd.f32 0.0, %v1627
    %v1629 = vpop.f32.mrb[0].mxu0
    %v1630 = vpop.f32.mrb[0].mxu0
    %v1631 = vadd.f32 0.0, %v1630
    %v1632 = vpop.f32.mrb[0].mxu0
    %1633 = vdwg.mxu0
    %v1634 = vld [vmem:[#allocation2 + $0xc0] sm:$0xf]
    %v1635 = vld [vmem:[#allocation2 + $0xc4] sm:$0xf]
    %v1636 = vld [vmem:[#allocation2 + $0xc8] sm:$0xf]
    %v1637 = vld [vmem:[#allocation2 + $0xcc] sm:$0xf]
    %v1642 = vunpack.c.l.b16 %v1634
    %v1643 = vunpack.c.l.b16 %v1635
    %v1644 = vunpack.c.l.b16 %v1636
    %v1645 = vunpack.c.l.b16 %v1637
    %v1646 = vpack.c.b16 %v1643, %v1642
    %v1647 = vpack.c.b16 %v1645, %v1644
    %1650 = vmatprep.subr.bf16.mxu0 0
    %1651 = vmatpush1.bf16.msra.mxu0 %v1646
    %1652 = vmatprep.subr.bf16.mxu0 0
    %1653 = vmatpush1.bf16.msra.mxu0 %v1647
    %1654 = vmatprep.subr.bf16.mxu0 0
    %1655 = vmatpush1.bf16.msra.mxu0 0
    %1656 = vmatprep.subr.bf16.mxu0 0
    %1657 = vmatpush1.bf16.msra.mxu0 0
    %1658 = vmatprep.subr.bf16.mxu0 0
    %1659 = vmatpush1.bf16.msra.mxu0 0
    %1660 = vmatprep.subr.bf16.mxu0 0
    %1661 = vmatpush1.bf16.msra.mxu0 0
    %1662 = vmatprep.subr.bf16.mxu0 0
    %1663 = vmatpush1.bf16.msra.mxu0 0
    %1664 = vmatprep.subr.bf16.mxu0 0
    %1665 = vmatpush1.bf16.msra.mxu0 0
    %1666 = vmatprep.subr.bf16.mxu0 0
    %1667 = vmatpush1.bf16.msra.mxu0 0
    %1668 = vmatprep.subr.bf16.mxu0 0
    %1669 = vmatpush1.bf16.msra.mxu0 0
    %1670 = vmatprep.subr.bf16.mxu0 0
    %1671 = vmatpush1.bf16.msra.mxu0 0
    %1672 = vmatprep.subr.bf16.mxu0 0
    %1673 = vmatpush1.bf16.msra.mxu0 0
    %1674 = vmatprep.subr.bf16.mxu0 0
    %1675 = vmatpush1.bf16.msra.mxu0 0
    %1676 = vmatprep.subr.bf16.mxu0 0
    %1677 = vmatpush1.bf16.msra.mxu0 0
    %1678 = vmatprep.subr.bf16.mxu0 0
    %1679 = vmatpush1.bf16.msra.mxu0 0
    %1680 = vmatprep.subr.bf16.mxu0 0
    %1681 = vmatpush1.bf16.msra.mxu0 0
    %1682 = vmatprep.mubr.bf16.mxu0 0
    %1683 = vmatmul.mubr.bf16.gmra.mrb[0].mxu0 %v1591
    %v1684 = vpop.f32.mrb[0].mxu0
    %v1685 = vadd.f32 0.0, %v1684
    %v1686 = vpop.f32.mrb[0].mxu0
    %v1687 = vpop.f32.mrb[0].mxu0
    %v1688 = vadd.f32 0.0, %v1687
    %v1689 = vpop.f32.mrb[0].mxu0
    %1690 = vdwg.mxu0
    %v1691 = vld [vmem:[#allocation2 + $0xd0] sm:$0xf]
    %v1692 = vld [vmem:[#allocation2 + $0xd4] sm:$0xf]
    %v1693 = vld [vmem:[#allocation2 + $0xd8] sm:$0xf]
    %v1694 = vld [vmem:[#allocation2 + $0xdc] sm:$0xf]
    %v1699 = vunpack.c.l.b16 %v1691
    %v1700 = vunpack.c.l.b16 %v1692
    %v1701 = vunpack.c.l.b16 %v1693
    %v1702 = vunpack.c.l.b16 %v1694
    %v1703 = vpack.c.b16 %v1700, %v1699
    %v1704 = vpack.c.b16 %v1702, %v1701
    %1707 = vmatprep.subr.bf16.mxu0 0
    %1708 = vmatpush1.bf16.msra.mxu0 %v1703
    %1709 = vmatprep.subr.bf16.mxu0 0
    %1710 = vmatpush1.bf16.msra.mxu0 %v1704
    %1711 = vmatprep.subr.bf16.mxu0 0
    %1712 = vmatpush1.bf16.msra.mxu0 0
    %1713 = vmatprep.subr.bf16.mxu0 0
    %1714 = vmatpush1.bf16.msra.mxu0 0
    %1715 = vmatprep.subr.bf16.mxu0 0
    %1716 = vmatpush1.bf16.msra.mxu0 0
    %1717 = vmatprep.subr.bf16.mxu0 0
    %1718 = vmatpush1.bf16.msra.mxu0 0
    %1719 = vmatprep.subr.bf16.mxu0 0
    %1720 = vmatpush1.bf16.msra.mxu0 0
    %1721 = vmatprep.subr.bf16.mxu0 0
    %1722 = vmatpush1.bf16.msra.mxu0 0
    %1723 = vmatprep.subr.bf16.mxu0 0
    %1724 = vmatpush1.bf16.msra.mxu0 0
    %1725 = vmatprep.subr.bf16.mxu0 0
    %1726 = vmatpush1.bf16.msra.mxu0 0
    %1727 = vmatprep.subr.bf16.mxu0 0
    %1728 = vmatpush1.bf16.msra.mxu0 0
    %1729 = vmatprep.subr.bf16.mxu0 0
    %1730 = vmatpush1.bf16.msra.mxu0 0
    %1731 = vmatprep.subr.bf16.mxu0 0
    %1732 = vmatpush1.bf16.msra.mxu0 0
    %1733 = vmatprep.subr.bf16.mxu0 0
    %1734 = vmatpush1.bf16.msra.mxu0 0
    %1735 = vmatprep.subr.bf16.mxu0 0
    %1736 = vmatpush1.bf16.msra.mxu0 0
    %1737 = vmatprep.subr.bf16.mxu0 0
    %1738 = vmatpush1.bf16.msra.mxu0 0
    %1739 = vmatprep.mubr.bf16.mxu0 0
    %1740 = vmatmul.mubr.bf16.gmra.mrb[0].mxu0 %v1591
    %v1741 = vpop.f32.mrb[0].mxu0
    %v1742 = vadd.f32 0.0, %v1741
    %v1743 = vpop.f32.mrb[0].mxu0
    %v1744 = vpop.f32.mrb[0].mxu0
    %v1745 = vadd.f32 0.0, %v1744
    %v1746 = vpop.f32.mrb[0].mxu0
    %1747 = vdwg.mxu0
    %v1749 = vsel %vm316, %v1628, 0
    %v1752 = vsel %vm316, %v1631, 0
    %v1755 = vsel %vm316, %v1685, 0
    %v1758 = vsel %vm316, %v1688, 0
    %1760 = vmatprep.subr.mxu0 0.0
    %1761 = vmatpush1.xpose.msra.mxu0 %v1755
    %1762 = vmatprep.subr.mxu0 0.0
    %1763 = vmatpush1.xpose.msra.mxu0 %v1758
    %1764 = vmatprep.subr.mxu0 0.0
    %1765 = vmatpush1.xpose.msra.mxu0 0.0
    %1766 = vmatprep.subr.mxu0 0.0
    %1767 = vmatpush1.xpose.msra.mxu0 0.0
    %1768 = vmatprep.subr.mxu0 0.0
    %1769 = vmatpush1.xpose.msra.mxu0 0.0
    %1770 = vmatprep.subr.mxu0 0.0
    %1771 = vmatpush1.xpose.msra.mxu0 0.0
    %1772 = vmatprep.subr.mxu0 0.0
    %1773 = vmatpush1.xpose.msra.mxu0 0.0
    %1774 = vmatprep.subr.mxu0 0.0
    %1775 = vmatpush1.xpose.msra.mxu0 0.0
    %1776 = vmatprep.subr.mxu0 0.0
    %1777 = vmatpush1.xpose.msra.mxu0 0.0
    %1778 = vmatprep.subr.mxu0 0.0
    %1779 = vmatpush1.xpose.msra.mxu0 0.0
    %1780 = vmatprep.subr.mxu0 0.0
    %1781 = vmatpush1.xpose.msra.mxu0 0.0
    %1782 = vmatprep.subr.mxu0 0.0
    %1783 = vmatpush1.xpose.msra.mxu0 0.0
    %1784 = vmatprep.subr.mxu0 0.0
    %1785 = vmatpush1.xpose.msra.mxu0 0.0
    %1786 = vmatprep.subr.mxu0 0.0
    %1787 = vmatpush1.xpose.msra.mxu0 0.0
    %1788 = vmatprep.subr.mxu0 0.0
    %1789 = vmatpush1.xpose.msra.mxu0 0.0
    %1790 = vmatprep.subr.mxu0 0.0
    %1791 = vmatpush1.xpose.msra.mxu0 0.0
    %1792 = vmatprep.subr.mxu0 0.0
    %1793 = vmatpush1.xpose.msra.mxu0 0.0
    %1794 = vmatprep.subr.mxu0 0.0
    %1795 = vmatpush1.xpose.msra.mxu0 0.0
    %1796 = vmatprep.subr.mxu0 0.0
    %1797 = vmatpush1.xpose.msra.mxu0 0.0
    %1798 = vmatprep.subr.mxu0 0.0
    %1799 = vmatpush1.xpose.msra.mxu0 0.0
    %1800 = vmatprep.subr.mxu0 0.0
    %1801 = vmatpush1.xpose.msra.mxu0 0.0
    %1802 = vmatprep.subr.mxu0 0.0
    %1803 = vmatpush1.xpose.msra.mxu0 0.0
    %1804 = vmatprep.subr.mxu0 0.0
    %1805 = vmatpush1.xpose.msra.mxu0 0.0
    %1806 = vmatprep.subr.mxu0 0.0
    %1807 = vmatpush1.xpose.msra.mxu0 0.0
    %1808 = vmatprep.subr.mxu0 0.0
    %1809 = vmatpush1.xpose.msra.mxu0 0.0
    %1810 = vmatprep.subr.mxu0 0.0
    %1811 = vmatpush1.xpose.msra.mxu0 0.0
    %1812 = vmatprep.subr.mxu0 0.0
    %1813 = vmatpush1.xpose.msra.mxu0 0.0
    %1814 = vmatprep.subr.mxu0 0.0
    %1815 = vmatpush1.xpose.msra.mxu0 0.0
    %1816 = vmatprep.subr.mxu0 0.0
    %1817 = vmatpush1.xpose.msra.mxu0 0.0
    %1818 = vmatprep.subr.mxu0 0.0
    %1819 = vmatpush1.xpose.msra.mxu0 0.0
    %1820 = vmatprep.subr.mxu0 0.0
    %1821 = vmatpush1.xpose.msra.mxu0 0.0
    %1822 = vmatprep.subr.mxu0 0.0
    %1823 = vmatpush1.xpose.msra.mxu0 0.0
    %1824 = vmatprep.mubr.f32.mxu0 0.0
    %1825 = vmatmul.mubr.f32.gmra.mrb[0].mxu0 %v1749
    %v1826 = vpop.f32.mrb[0].mxu0
    %v1827 = vadd.f32 %v43, %v1826
    %v1828 = vpop.f32.mrb[0].mxu0
    %1829 = vmatprep.mubr.f32.mxu0 0.0
    %1830 = vmatmul.mubr.f32.gmra.mrb[0].mxu0 %v1752
    %v1831 = vpop.f32.mrb[0].mxu0
    %v1832 = vadd.f32 %v44, %v1831
    %v1833 = vpop.f32.mrb[0].mxu0
    %1834 = vdwg.mxu0
    %v1835 = vsel %vm404, %v1827, -inf
    %1836 = vmax.xlane.f32.xlu0 %v1835
    %v1837 = vpop.xlane.xlu0 %1836
    %v1838 = vsel %vm404, %v1832, -inf
    %1839 = vmax.xlane.f32.xlu0 %v1838
    %v1840 = vpop.xlane.xlu0 %1839
    %v1841 = vsub.f32 %v1827, %v1837
    %v1842 = vsub.f32 %v1832, %v1840
    %v1843 = vmul.f32 %v1841, 1.442695
    %v1844 = vpow.pop %v1843
    %v1845 = vmul.f32 %v1842, 1.442695
    %v1846 = vpow.pop %v1845
    %v1847 = vsel %vm404, %v1844, 0.0
    %1848 = vadd.xlane.f32.xlu0 %v1847
    %v1849 = vpop.xlane.xlu0 %1848
    %v1850 = vsel %vm404, %v1846, 0.0
    %1851 = vadd.xlane.f32.xlu0 %v1850
    %v1852 = vpop.xlane.xlu0 %1851
    %v1853 = vrcp.pop %v1849
    %v1854 = vmul.f32 %v1844, %v1853
    %v1855 = vrcp.pop %v1852
    %v1856 = vmul.f32 %v1846, %v1855
    %v1858 = vsel %vm404, %v1854, 0
    %v1861 = vsel %vm404, %v1856, 0
    %1863 = vmatprep.subr.mxu0 0.0
    %1864 = vmatpush1.msra.mxu0 %v1742
    %1865 = vmatprep.subr.mxu0 0.0
    %1866 = vmatpush1.msra.mxu0 %v1745
    %1867 = vmatprep.subr.mxu0 0.0
    %1868 = vmatpush1.msra.mxu0 0.0
    %1869 = vmatprep.subr.mxu0 0.0
    %1870 = vmatpush1.msra.mxu0 0.0
    %1871 = vmatprep.subr.mxu0 0.0
    %1872 = vmatpush1.msra.mxu0 0.0
    %1873 = vmatprep.subr.mxu0 0.0
    %1874 = vmatpush1.msra.mxu0 0.0
    %1875 = vmatprep.subr.mxu0 0.0
    %1876 = vmatpush1.msra.mxu0 0.0
    %1877 = vmatprep.subr.mxu0 0.0
    %1878 = vmatpush1.msra.mxu0 0.0
    %1879 = vmatprep.subr.mxu0 0.0
    %1880 = vmatpush1.msra.mxu0 0.0
    %1881 = vmatprep.subr.mxu0 0.0
    %1882 = vmatpush1.msra.mxu0 0.0
    %1883 = vmatprep.subr.mxu0 0.0
    %1884 = vmatpush1.msra.mxu0 0.0
    %1885 = vmatprep.subr.mxu0 0.0
    %1886 = vmatpush1.msra.mxu0 0.0
    %1887 = vmatprep.subr.mxu0 0.0
    %1888 = vmatpush1.msra.mxu0 0.0
    %1889 = vmatprep.subr.mxu0 0.0
    %1890 = vmatpush1.msra.mxu0 0.0
    %1891 = vmatprep.subr.mxu0 0.0
    %1892 = vmatpush1.msra.mxu0 0.0
    %1893 = vmatprep.subr.mxu0 0.0
    %1894 = vmatpush1.msra.mxu0 0.0
    %1895 = vmatprep.subr.mxu0 0.0
    %1896 = vmatpush1.msra.mxu0 0.0
    %1897 = vmatprep.subr.mxu0 0.0
    %1898 = vmatpush1.msra.mxu0 0.0
    %1899 = vmatprep.subr.mxu0 0.0
    %1900 = vmatpush1.msra.mxu0 0.0
    %1901 = vmatprep.subr.mxu0 0.0
    %1902 = vmatpush1.msra.mxu0 0.0
    %1903 = vmatprep.subr.mxu0 0.0
    %1904 = vmatpush1.msra.mxu0 0.0
    %1905 = vmatprep.subr.mxu0 0.0
    %1906 = vmatpush1.msra.mxu0 0.0
    %1907 = vmatprep.subr.mxu0 0.0
    %1908 = vmatpush1.msra.mxu0 0.0
    %1909 = vmatprep.subr.mxu0 0.0
    %1910 = vmatpush1.msra.mxu0 0.0
    %1911 = vmatprep.subr.mxu0 0.0
    %1912 = vmatpush1.msra.mxu0 0.0
    %1913 = vmatprep.subr.mxu0 0.0
    %1914 = vmatpush1.msra.mxu0 0.0
    %1915 = vmatprep.subr.mxu0 0.0
    %1916 = vmatpush1.msra.mxu0 0.0
    %1917 = vmatprep.subr.mxu0 0.0
    %1918 = vmatpush1.msra.mxu0 0.0
    %1919 = vmatprep.subr.mxu0 0.0
    %1920 = vmatpush1.msra.mxu0 0.0
    %1921 = vmatprep.subr.mxu0 0.0
    %1922 = vmatpush1.msra.mxu0 0.0
    %1923 = vmatprep.subr.mxu0 0.0
    %1924 = vmatpush1.msra.mxu0 0.0
    %1925 = vmatprep.subr.mxu0 0.0
    %1926 = vmatpush1.msra.mxu0 0.0
    %1927 = vmatprep.mubr.f32.mxu0 0.0
    %1928 = vmatmul.mubr.f32.gmra.mrb[0].mxu0 %v1858
    %v1929 = vpop.f32.mrb[0].mxu0
    %v1930 = vadd.f32 0.0, %v1929
    %v1931 = vpop.f32.mrb[0].mxu0
    %1932 = vmatprep.mubr.f32.mxu0 0.0
    %1933 = vmatmul.mubr.f32.gmra.mrb[0].mxu0 %v1861
    %v1934 = vpop.f32.mrb[0].mxu0
    %v1935 = vadd.f32 0.0, %v1934
    %v1936 = vpop.f32.mrb[0].mxu0
    %1937 = vdwg.mxu0
    %1938 = vrot.lane.b32.xlu0 %v1628, 120
    %v1939 = vpop.permute.xlu0 %1938
    %1940 = vrot.lane.b32.xlu0 %v1631, 120
    %v1941 = vpop.permute.xlu0 %1940
    %1942 = vrot.lane.b32.xlu0 %v1685, 120
    %v1943 = vpop.permute.xlu0 %1942
    %1944 = vrot.lane.b32.xlu0 %v1688, 120
    %v1945 = vpop.permute.xlu0 %1944
    %v1946 = vsel %vm316, %v1939, 0
    %v1948 = vsel %vm316, %v1941, 0
    %v1950 = vsel %vm316, %v1943, 0
    %v1952 = vsel %vm316, %v1945, 0
    %1954 = vmatprep.subr.mxu0 0.0
    %1955 = vmatpush1.xpose.msra.mxu0 %v1950
    %1956 = vmatprep.subr.mxu0 0.0
    %1957 = vmatpush1.xpose.msra.mxu0 %v1952
    %1958 = vmatprep.subr.mxu0 0.0
    %1959 = vmatpush1.xpose.msra.mxu0 0.0
    %1960 = vmatprep.subr.mxu0 0.0
    %1961 = vmatpush1.xpose.msra.mxu0 0.0
    %1962 = vmatprep.subr.mxu0 0.0
    %1963 = vmatpush1.xpose.msra.mxu0 0.0
    %1964 = vmatprep.subr.mxu0 0.0
    %1965 = vmatpush1.xpose.msra.mxu0 0.0
    %1966 = vmatprep.subr.mxu0 0.0
    %1967 = vmatpush1.xpose.msra.mxu0 0.0
    %1968 = vmatprep.subr.mxu0 0.0
    %1969 = vmatpush1.xpose.msra.mxu0 0.0
    %1970 = vmatprep.subr.mxu0 0.0
    %1971 = vmatpush1.xpose.msra.mxu0 0.0
    %1972 = vmatprep.subr.mxu0 0.0
    %1973 = vmatpush1.xpose.msra.mxu0 0.0
    %1974 = vmatprep.subr.mxu0 0.0
    %1975 = vmatpush1.xpose.msra.mxu0 0.0
    %1976 = vmatprep.subr.mxu0 0.0
    %1977 = vmatpush1.xpose.msra.mxu0 0.0
    %1978 = vmatprep.subr.mxu0 0.0
    %1979 = vmatpush1.xpose.msra.mxu0 0.0
    %1980 = vmatprep.subr.mxu0 0.0
    %1981 = vmatpush1.xpose.msra.mxu0 0.0
    %1982 = vmatprep.subr.mxu0 0.0
    %1983 = vmatpush1.xpose.msra.mxu0 0.0
    %1984 = vmatprep.subr.mxu0 0.0
    %1985 = vmatpush1.xpose.msra.mxu0 0.0
    %1986 = vmatprep.subr.mxu0 0.0
    %1987 = vmatpush1.xpose.msra.mxu0 0.0
    %1988 = vmatprep.subr.mxu0 0.0
    %1989 = vmatpush1.xpose.msra.mxu0 0.0
    %1990 = vmatprep.subr.mxu0 0.0
    %1991 = vmatpush1.xpose.msra.mxu0 0.0
    %1992 = vmatprep.subr.mxu0 0.0
    %1993 = vmatpush1.xpose.msra.mxu0 0.0
    %1994 = vmatprep.subr.mxu0 0.0
    %1995 = vmatpush1.xpose.msra.mxu0 0.0
    %1996 = vmatprep.subr.mxu0 0.0
    %1997 = vmatpush1.xpose.msra.mxu0 0.0
    %1998 = vmatprep.subr.mxu0 0.0
    %1999 = vmatpush1.xpose.msra.mxu0 0.0
    %2000 = vmatprep.subr.mxu0 0.0
    %2001 = vmatpush1.xpose.msra.mxu0 0.0
    %2002 = vmatprep.subr.mxu0 0.0
    %2003 = vmatpush1.xpose.msra.mxu0 0.0
    %2004 = vmatprep.subr.mxu0 0.0
    %2005 = vmatpush1.xpose.msra.mxu0 0.0
    %2006 = vmatprep.subr.mxu0 0.0
    %2007 = vmatpush1.xpose.msra.mxu0 0.0
    %2008 = vmatprep.subr.mxu0 0.0
    %2009 = vmatpush1.xpose.msra.mxu0 0.0
    %2010 = vmatprep.subr.mxu0 0.0
    %2011 = vmatpush1.xpose.msra.mxu0 0.0
    %2012 = vmatprep.subr.mxu0 0.0
    %2013 = vmatpush1.xpose.msra.mxu0 0.0
    %2014 = vmatprep.subr.mxu0 0.0
    %2015 = vmatpush1.xpose.msra.mxu0 0.0
    %2016 = vmatprep.subr.mxu0 0.0
    %2017 = vmatpush1.xpose.msra.mxu0 0.0
    %2018 = vmatprep.mubr.f32.mxu0 0.0
    %2019 = vmatmul.mubr.f32.gmra.mrb[0].mxu0 %v1946
    %v2020 = vpop.f32.mrb[0].mxu0
    %v2021 = vadd.f32 %v43, %v2020
    %v2022 = vpop.f32.mrb[0].mxu0
    %2023 = vmatprep.mubr.f32.mxu0 0.0
    %2024 = vmatmul.mubr.f32.gmra.mrb[0].mxu0 %v1948
    %v2025 = vpop.f32.mrb[0].mxu0
    %v2026 = vadd.f32 %v44, %v2025
    %v2027 = vpop.f32.mrb[0].mxu0
    %2028 = vdwg.mxu0
    %v2029 = vsel %vm404, %v2021, -inf
    %2030 = vmax.xlane.f32.xlu0 %v2029
    %v2031 = vpop.xlane.xlu0 %2030
    %v2032 = vsel %vm404, %v2026, -inf
    %2033 = vmax.xlane.f32.xlu0 %v2032
    %v2034 = vpop.xlane.xlu0 %2033
    %v2035 = vsub.f32 %v2021, %v2031
    %v2036 = vsub.f32 %v2026, %v2034
    %v2037 = vmul.f32 %v2035, 1.442695
    %v2038 = vpow.pop %v2037
    %v2039 = vmul.f32 %v2036, 1.442695
    %v2040 = vpow.pop %v2039
    %v2041 = vsel %vm404, %v2038, 0.0
    %2042 = vadd.xlane.f32.xlu0 %v2041
    %v2043 = vpop.xlane.xlu0 %2042
    %v2044 = vsel %vm404, %v2040, 0.0
    %2045 = vadd.xlane.f32.xlu0 %v2044
    %v2046 = vpop.xlane.xlu0 %2045
    %v2047 = vrcp.pop %v2043
    %v2048 = vmul.f32 %v2038, %v2047
    %v2049 = vrcp.pop %v2046
    %v2050 = vmul.f32 %v2040, %v2049
    %2053 = vrot.lane.b32.xlu0 %v1742, 120
    %v2054 = vpop.permute.xlu0 %2053
    %2055 = vrot.lane.b32.xlu0 %v1745, 120
    %v2056 = vpop.permute.xlu0 %2055
    %v2060 = vsel %vm404, %v2048, 0
    %v2063 = vsel %vm404, %v2050, 0
    %2065 = vmatprep.subr.mxu0 0.0
    %2066 = vmatpush1.msra.mxu0 %v2054
    %2067 = vmatprep.subr.mxu0 0.0
    %2068 = vmatpush1.msra.mxu0 %v2056
    %2069 = vmatprep.subr.mxu0 0.0
    %2070 = vmatpush1.msra.mxu0 0.0
    %2071 = vmatprep.subr.mxu0 0.0
    %2072 = vmatpush1.msra.mxu0 0.0
    %2073 = vmatprep.subr.mxu0 0.0
    %2074 = vmatpush1.msra.mxu0 0.0
    %2075 = vmatprep.subr.mxu0 0.0
    %2076 = vmatpush1.msra.mxu0 0.0
    %2077 = vmatprep.subr.mxu0 0.0
    %2078 = vmatpush1.msra.mxu0 0.0
    %2079 = vmatprep.subr.mxu0 0.0
    %2080 = vmatpush1.msra.mxu0 0.0
    %2081 = vmatprep.subr.mxu0 0.0
    %2082 = vmatpush1.msra.mxu0 0.0
    %2083 = vmatprep.subr.mxu0 0.0
    %2084 = vmatpush1.msra.mxu0 0.0
    %2085 = vmatprep.subr.mxu0 0.0
    %2086 = vmatpush1.msra.mxu0 0.0
    %2087 = vmatprep.subr.mxu0 0.0
    %2088 = vmatpush1.msra.mxu0 0.0
    %2089 = vmatprep.subr.mxu0 0.0
    %2090 = vmatpush1.msra.mxu0 0.0
    %2091 = vmatprep.subr.mxu0 0.0
    %2092 = vmatpush1.msra.mxu0 0.0
    %2093 = vmatprep.subr.mxu0 0.0
    %2094 = vmatpush1.msra.mxu0 0.0
    %2095 = vmatprep.subr.mxu0 0.0
    %2096 = vmatpush1.msra.mxu0 0.0
    %2097 = vmatprep.subr.mxu0 0.0
    %2098 = vmatpush1.msra.mxu0 0.0
    %2099 = vmatprep.subr.mxu0 0.0
    %2100 = vmatpush1.msra.mxu0 0.0
    %2101 = vmatprep.subr.mxu0 0.0
    %2102 = vmatpush1.msra.mxu0 0.0
    %2103 = vmatprep.subr.mxu0 0.0
    %2104 = vmatpush1.msra.mxu0 0.0
    %2105 = vmatprep.subr.mxu0 0.0
    %2106 = vmatpush1.msra.mxu0 0.0
    %2107 = vmatprep.subr.mxu0 0.0
    %2108 = vmatpush1.msra.mxu0 0.0
    %2109 = vmatprep.subr.mxu0 0.0
    %2110 = vmatpush1.msra.mxu0 0.0
    %2111 = vmatprep.subr.mxu0 0.0
    %2112 = vmatpush1.msra.mxu0 0.0
    %2113 = vmatprep.subr.mxu0 0.0
    %2114 = vmatpush1.msra.mxu0 0.0
    %2115 = vmatprep.subr.mxu0 0.0
    %2116 = vmatpush1.msra.mxu0 0.0
    %2117 = vmatprep.subr.mxu0 0.0
    %2118 = vmatpush1.msra.mxu0 0.0
    %2119 = vmatprep.subr.mxu0 0.0
    %2120 = vmatpush1.msra.mxu0 0.0
    %2121 = vmatprep.subr.mxu0 0.0
    %2122 = vmatpush1.msra.mxu0 0.0
    %2123 = vmatprep.subr.mxu0 0.0
    %2124 = vmatpush1.msra.mxu0 0.0
    %2125 = vmatprep.subr.mxu0 0.0
    %2126 = vmatpush1.msra.mxu0 0.0
    %2127 = vmatprep.subr.mxu0 0.0
    %2128 = vmatpush1.msra.mxu0 0.0
    %2129 = vmatprep.mubr.f32.mxu0 0.0
    %2130 = vmatmul.mubr.f32.gmra.mrb[0].mxu0 %v2060
    %v2131 = vpop.f32.mrb[0].mxu0
    %v2132 = vadd.f32 0.0, %v2131
    %v2133 = vpop.f32.mrb[0].mxu0
    %2134 = vmatprep.mubr.f32.mxu0 0.0
    %2135 = vmatmul.mubr.f32.gmra.mrb[0].mxu0 %v2063
    %v2136 = vpop.f32.mrb[0].mxu0
    %v2137 = vadd.f32 0.0, %v2136
    %v2138 = vpop.f32.mrb[0].mxu0
    %2139 = vdwg.mxu0
    %2140 = vrot.lane.b32.xlu0 %v1628, 112
    %v2141 = vpop.permute.xlu0 %2140
    %2142 = vrot.lane.b32.xlu0 %v1631, 112
    %v2143 = vpop.permute.xlu0 %2142
    %2144 = vrot.lane.b32.xlu0 %v1685, 112
    %v2145 = vpop.permute.xlu0 %2144
    %2146 = vrot.lane.b32.xlu0 %v1688, 112
    %v2147 = vpop.permute.xlu0 %2146
    %v2148 = vsel %vm316, %v2141, 0
    %v2150 = vsel %vm316, %v2143, 0
    %v2152 = vsel %vm316, %v2145, 0
    %v2154 = vsel %vm316, %v2147, 0
    %2156 = vmatprep.subr.mxu0 0.0
    %2157 = vmatpush1.xpose.msra.mxu0 %v2152
    %2158 = vmatprep.subr.mxu0 0.0
    %2159 = vmatpush1.xpose.msra.mxu0 %v2154
    %2160 = vmatprep.subr.mxu0 0.0
    %2161 = vmatpush1.xpose.msra.mxu0 0.0
    %2162 = vmatprep.subr.mxu0 0.0
    %2163 = vmatpush1.xpose.msra.mxu0 0.0
    %2164 = vmatprep.subr.mxu0 0.0
    %2165 = vmatpush1.xpose.msra.mxu0 0.0
    %2166 = vmatprep.subr.mxu0 0.0
    %2167 = vmatpush1.xpose.msra.mxu0 0.0
    %2168 = vmatprep.subr.mxu0 0.0
    %2169 = vmatpush1.xpose.msra.mxu0 0.0
    %2170 = vmatprep.subr.mxu0 0.0
    %2171 = vmatpush1.xpose.msra.mxu0 0.0
    %2172 = vmatprep.subr.mxu0 0.0
    %2173 = vmatpush1.xpose.msra.mxu0 0.0
    %2174 = vmatprep.subr.mxu0 0.0
    %2175 = vmatpush1.xpose.msra.mxu0 0.0
    %2176 = vmatprep.subr.mxu0 0.0
    %2177 = vmatpush1.xpose.msra.mxu0 0.0
    %2178 = vmatprep.subr.mxu0 0.0
    %2179 = vmatpush1.xpose.msra.mxu0 0.0
    %2180 = vmatprep.subr.mxu0 0.0
    %2181 = vmatpush1.xpose.msra.mxu0 0.0
    %2182 = vmatprep.subr.mxu0 0.0
    %2183 = vmatpush1.xpose.msra.mxu0 0.0
    %2184 = vmatprep.subr.mxu0 0.0
    %2185 = vmatpush1.xpose.msra.mxu0 0.0
    %2186 = vmatprep.subr.mxu0 0.0
    %2187 = vmatpush1.xpose.msra.mxu0 0.0
    %2188 = vmatprep.subr.mxu0 0.0
    %2189 = vmatpush1.xpose.msra.mxu0 0.0
    %2190 = vmatprep.subr.mxu0 0.0
    %2191 = vmatpush1.xpose.msra.mxu0 0.0
    %2192 = vmatprep.subr.mxu0 0.0
    %2193 = vmatpush1.xpose.msra.mxu0 0.0
    %2194 = vmatprep.subr.mxu0 0.0
    %2195 = vmatpush1.xpose.msra.mxu0 0.0
    %2196 = vmatprep.subr.mxu0 0.0
    %2197 = vmatpush1.xpose.msra.mxu0 0.0
    %2198 = vmatprep.subr.mxu0 0.0
    %2199 = vmatpush1.xpose.msra.mxu0 0.0
    %2200 = vmatprep.subr.mxu0 0.0
    %2201 = vmatpush1.xpose.msra.mxu0 0.0
    %2202 = vmatprep.subr.mxu0 0.0
    %2203 = vmatpush1.xpose.msra.mxu0 0.0
    %2204 = vmatprep.subr.mxu0 0.0
    %2205 = vmatpush1.xpose.msra.mxu0 0.0
    %2206 = vmatprep.subr.mxu0 0.0
    %2207 = vmatpush1.xpose.msra.mxu0 0.0
    %2208 = vmatprep.subr.mxu0 0.0
    %2209 = vmatpush1.xpose.msra.mxu0 0.0
    %2210 = vmatprep.subr.mxu0 0.0
    %2211 = vmatpush1.xpose.msra.mxu0 0.0
    %2212 = vmatprep.subr.mxu0 0.0
    %2213 = vmatpush1.xpose.msra.mxu0 0.0
    %2214 = vmatprep.subr.mxu0 0.0
    %2215 = vmatpush1.xpose.msra.mxu0 0.0
    %2216 = vmatprep.subr.mxu0 0.0
    %2217 = vmatpush1.xpose.msra.mxu0 0.0
    %2218 = vmatprep.subr.mxu0 0.0
    %2219 = vmatpush1.xpose.msra.mxu0 0.0
    %2220 = vmatprep.mubr.f32.mxu0 0.0
    %2221 = vmatmul.mubr.f32.gmra.mrb[0].mxu0 %v2148
    %v2222 = vpop.f32.mrb[0].mxu0
    %v2223 = vadd.f32 %v43, %v2222
    %v2224 = vpop.f32.mrb[0].mxu0
    %2225 = vmatprep.mubr.f32.mxu0 0.0
    %2226 = vmatmul.mubr.f32.gmra.mrb[0].mxu0 %v2150
    %v2227 = vpop.f32.mrb[0].mxu0
    %v2228 = vadd.f32 %v44, %v2227
    %v2229 = vpop.f32.mrb[0].mxu0
    %2230 = vdwg.mxu0
    %v2231 = vsel %vm404, %v2223, -inf
    %2232 = vmax.xlane.f32.xlu0 %v2231
    %v2233 = vpop.xlane.xlu0 %2232
    %v2234 = vsel %vm404, %v2228, -inf
    %2235 = vmax.xlane.f32.xlu0 %v2234
    %v2236 = vpop.xlane.xlu0 %2235
    %v2237 = vsub.f32 %v2223, %v2233
    %v2238 = vsub.f32 %v2228, %v2236
    %v2239 = vmul.f32 %v2237, 1.442695
    %v2240 = vpow.pop %v2239
    %v2241 = vmul.f32 %v2238, 1.442695
    %v2242 = vpow.pop %v2241
    %v2243 = vsel %vm404, %v2240, 0.0
    %2244 = vadd.xlane.f32.xlu0 %v2243
    %v2245 = vpop.xlane.xlu0 %2244
    %v2246 = vsel %vm404, %v2242, 0.0
    %2247 = vadd.xlane.f32.xlu0 %v2246
    %v2248 = vpop.xlane.xlu0 %2247
    %v2249 = vrcp.pop %v2245
    %v2250 = vmul.f32 %v2240, %v2249
    %v2251 = vrcp.pop %v2248
    %v2252 = vmul.f32 %v2242, %v2251
    %2253 = vrot.lane.b32.xlu0 %v1742, 112
    %v2254 = vpop.permute.xlu0 %2253
    %2255 = vrot.lane.b32.xlu0 %v1745, 112
    %v2256 = vpop.permute.xlu0 %2255
    %v2260 = vsel %vm404, %v2250, 0
    %v2263 = vsel %vm404, %v2252, 0
    %2265 = vmatprep.subr.mxu0 0.0
    %2266 = vmatpush1.msra.mxu0 %v2254
    %2267 = vmatprep.subr.mxu0 0.0
    %2268 = vmatpush1.msra.mxu0 %v2256
    %2269 = vmatprep.subr.mxu0 0.0
    %2270 = vmatpush1.msra.mxu0 0.0
    %2271 = vmatprep.subr.mxu0 0.0
    %2272 = vmatpush1.msra.mxu0 0.0
    %2273 = vmatprep.subr.mxu0 0.0
    %2274 = vmatpush1.msra.mxu0 0.0
    %2275 = vmatprep.subr.mxu0 0.0
    %2276 = vmatpush1.msra.mxu0 0.0
    %2277 = vmatprep.subr.mxu0 0.0
    %2278 = vmatpush1.msra.mxu0 0.0
    %2279 = vmatprep.subr.mxu0 0.0
    %2280 = vmatpush1.msra.mxu0 0.0
    %2281 = vmatprep.subr.mxu0 0.0
    %2282 = vmatpush1.msra.mxu0 0.0
    %2283 = vmatprep.subr.mxu0 0.0
    %2284 = vmatpush1.msra.mxu0 0.0
    %2285 = vmatprep.subr.mxu0 0.0
    %2286 = vmatpush1.msra.mxu0 0.0
    %2287 = vmatprep.subr.mxu0 0.0
    %2288 = vmatpush1.msra.mxu0 0.0
    %2289 = vmatprep.subr.mxu0 0.0
    %2290 = vmatpush1.msra.mxu0 0.0
    %2291 = vmatprep.subr.mxu0 0.0
    %2292 = vmatpush1.msra.mxu0 0.0
    %2293 = vmatprep.subr.mxu0 0.0
    %2294 = vmatpush1.msra.mxu0 0.0
    %2295 = vmatprep.subr.mxu0 0.0
    %2296 = vmatpush1.msra.mxu0 0.0
    %2297 = vmatprep.subr.mxu0 0.0
    %2298 = vmatpush1.msra.mxu0 0.0
    %2299 = vmatprep.subr.mxu0 0.0
    %2300 = vmatpush1.msra.mxu0 0.0
    %2301 = vmatprep.subr.mxu0 0.0
    %2302 = vmatpush1.msra.mxu0 0.0
    %2303 = vmatprep.subr.mxu0 0.0
    %2304 = vmatpush1.msra.mxu0 0.0
    %2305 = vmatprep.subr.mxu0 0.0
    %2306 = vmatpush1.msra.mxu0 0.0
    %2307 = vmatprep.subr.mxu0 0.0
    %2308 = vmatpush1.msra.mxu0 0.0
    %2309 = vmatprep.subr.mxu0 0.0
    %2310 = vmatpush1.msra.mxu0 0.0
    %2311 = vmatprep.subr.mxu0 0.0
    %2312 = vmatpush1.msra.mxu0 0.0
    %2313 = vmatprep.subr.mxu0 0.0
    %2314 = vmatpush1.msra.mxu0 0.0
    %2315 = vmatprep.subr.mxu0 0.0
    %2316 = vmatpush1.msra.mxu0 0.0
    %2317 = vmatprep.subr.mxu0 0.0
    %2318 = vmatpush1.msra.mxu0 0.0
    %2319 = vmatprep.subr.mxu0 0.0
    %2320 = vmatpush1.msra.mxu0 0.0
    %2321 = vmatprep.subr.mxu0 0.0
    %2322 = vmatpush1.msra.mxu0 0.0
    %2323 = vmatprep.subr.mxu0 0.0
    %2324 = vmatpush1.msra.mxu0 0.0
    %2325 = vmatprep.subr.mxu0 0.0
    %2326 = vmatpush1.msra.mxu0 0.0
    %2327 = vmatprep.subr.mxu0 0.0
    %2328 = vmatpush1.msra.mxu0 0.0
    %2329 = vmatprep.mubr.f32.mxu0 0.0
    %2330 = vmatmul.mubr.f32.gmra.mrb[0].mxu0 %v2260
    %v2331 = vpop.f32.mrb[0].mxu0
    %v2332 = vadd.f32 0.0, %v2331
    %v2333 = vpop.f32.mrb[0].mxu0
    %2334 = vmatprep.mubr.f32.mxu0 0.0
    %2335 = vmatmul.mubr.f32.gmra.mrb[0].mxu0 %v2263
    %v2336 = vpop.f32.mrb[0].mxu0
    %v2337 = vadd.f32 0.0, %v2336
    %v2338 = vpop.f32.mrb[0].mxu0
    %2339 = vdwg.mxu0
    %2340 = vrot.lane.b32.xlu0 %v1628, 104
    %v2341 = vpop.permute.xlu0 %2340
    %2342 = vrot.lane.b32.xlu0 %v1631, 104
    %v2343 = vpop.permute.xlu0 %2342
    %2344 = vrot.lane.b32.xlu0 %v1685, 104
    %v2345 = vpop.permute.xlu0 %2344
    %2346 = vrot.lane.b32.xlu0 %v1688, 104
    %v2347 = vpop.permute.xlu0 %2346
    %v2348 = vsel %vm316, %v2341, 0
    %v2350 = vsel %vm316, %v2343, 0
    %v2352 = vsel %vm316, %v2345, 0
    %v2354 = vsel %vm316, %v2347, 0
    %2356 = vmatprep.subr.mxu0 0.0
    %2357 = vmatpush1.xpose.msra.mxu0 %v2352
    %2358 = vmatprep.subr.mxu0 0.0
    %2359 = vmatpush1.xpose.msra.mxu0 %v2354
    %2360 = vmatprep.subr.mxu0 0.0
    %2361 = vmatpush1.xpose.msra.mxu0 0.0
    %2362 = vmatprep.subr.mxu0 0.0
    %2363 = vmatpush1.xpose.msra.mxu0 0.0
    %2364 = vmatprep.subr.mxu0 0.0
    %2365 = vmatpush1.xpose.msra.mxu0 0.0
    %2366 = vmatprep.subr.mxu0 0.0
    %2367 = vmatpush1.xpose.msra.mxu0 0.0
    %2368 = vmatprep.subr.mxu0 0.0
    %2369 = vmatpush1.xpose.msra.mxu0 0.0
    %2370 = vmatprep.subr.mxu0 0.0
    %2371 = vmatpush1.xpose.msra.mxu0 0.0
    %2372 = vmatprep.subr.mxu0 0.0
    %2373 = vmatpush1.xpose.msra.mxu0 0.0
    %2374 = vmatprep.subr.mxu0 0.0
    %2375 = vmatpush1.xpose.msra.mxu0 0.0
    %2376 = vmatprep.subr.mxu0 0.0
    %2377 = vmatpush1.xpose.msra.mxu0 0.0
    %2378 = vmatprep.subr.mxu0 0.0
    %2379 = vmatpush1.xpose.msra.mxu0 0.0
    %2380 = vmatprep.subr.mxu0 0.0
    %2381 = vmatpush1.xpose.msra.mxu0 0.0
    %2382 = vmatprep.subr.mxu0 0.0
    %2383 = vmatpush1.xpose.msra.mxu0 0.0
    %2384 = vmatprep.subr.mxu0 0.0
    %2385 = vmatpush1.xpose.msra.mxu0 0.0
    %2386 = vmatprep.subr.mxu0 0.0
    %2387 = vmatpush1.xpose.msra.mxu0 0.0
    %2388 = vmatprep.subr.mxu0 0.0
    %2389 = vmatpush1.xpose.msra.mxu0 0.0
    %2390 = vmatprep.subr.mxu0 0.0
    %2391 = vmatpush1.xpose.msra.mxu0 0.0
    %2392 = vmatprep.subr.mxu0 0.0
    %2393 = vmatpush1.xpose.msra.mxu0 0.0
    %2394 = vmatprep.subr.mxu0 0.0
    %2395 = vmatpush1.xpose.msra.mxu0 0.0
    %2396 = vmatprep.subr.mxu0 0.0
    %2397 = vmatpush1.xpose.msra.mxu0 0.0
    %2398 = vmatprep.subr.mxu0 0.0
    %2399 = vmatpush1.xpose.msra.mxu0 0.0
    %2400 = vmatprep.subr.mxu0 0.0
    %2401 = vmatpush1.xpose.msra.mxu0 0.0
    %2402 = vmatprep.subr.mxu0 0.0
    %2403 = vmatpush1.xpose.msra.mxu0 0.0
    %2404 = vmatprep.subr.mxu0 0.0
    %2405 = vmatpush1.xpose.msra.mxu0 0.0
    %2406 = vmatprep.subr.mxu0 0.0
    %2407 = vmatpush1.xpose.msra.mxu0 0.0
    %2408 = vmatprep.subr.mxu0 0.0
    %2409 = vmatpush1.xpose.msra.mxu0 0.0
    %2410 = vmatprep.subr.mxu0 0.0
    %2411 = vmatpush1.xpose.msra.mxu0 0.0
    %2412 = vmatprep.subr.mxu0 0.0
    %2413 = vmatpush1.xpose.msra.mxu0 0.0
    %2414 = vmatprep.subr.mxu0 0.0
    %2415 = vmatpush1.xpose.msra.mxu0 0.0
    %2416 = vmatprep.subr.mxu0 0.0
    %2417 = vmatpush1.xpose.msra.mxu0 0.0
    %2418 = vmatprep.subr.mxu0 0.0
    %2419 = vmatpush1.xpose.msra.mxu0 0.0
    %2420 = vmatprep.mubr.f32.mxu0 0.0
    %2421 = vmatmul.mubr.f32.gmra.mrb[0].mxu0 %v2348
    %v2422 = vpop.f32.mrb[0].mxu0
    %v2423 = vadd.f32 %v43, %v2422
    %v2424 = vpop.f32.mrb[0].mxu0
    %2425 = vmatprep.mubr.f32.mxu0 0.0
    %2426 = vmatmul.mubr.f32.gmra.mrb[0].mxu0 %v2350
    %v2427 = vpop.f32.mrb[0].mxu0
    %v2428 = vadd.f32 %v44, %v2427
    %v2429 = vpop.f32.mrb[0].mxu0
    %2430 = vdwg.mxu0
    %v2431 = vsel %vm404, %v2423, -inf
    %2432 = vmax.xlane.f32.xlu0 %v2431
    %v2433 = vpop.xlane.xlu0 %2432
    %v2434 = vsel %vm404, %v2428, -inf
    %2435 = vmax.xlane.f32.xlu0 %v2434
    %v2436 = vpop.xlane.xlu0 %2435
    %v2437 = vsub.f32 %v2423, %v2433
    %v2438 = vsub.f32 %v2428, %v2436
    %v2439 = vmul.f32 %v2437, 1.442695
    %v2440 = vpow.pop %v2439
    %v2441 = vmul.f32 %v2438, 1.442695
    %v2442 = vpow.pop %v2441
    %v2443 = vsel %vm404, %v2440, 0.0
    %2444 = vadd.xlane.f32.xlu0 %v2443
    %v2445 = vpop.xlane.xlu0 %2444
    %v2446 = vsel %vm404, %v2442, 0.0
    %2447 = vadd.xlane.f32.xlu0 %v2446
    %v2448 = vpop.xlane.xlu0 %2447
    %v2449 = vrcp.pop %v2445
    %v2450 = vmul.f32 %v2440, %v2449
    %v2451 = vrcp.pop %v2448
    %v2452 = vmul.f32 %v2442, %v2451
    %2453 = vrot.lane.b32.xlu0 %v1742, 104
    %v2454 = vpop.permute.xlu0 %2453
    %2455 = vrot.lane.b32.xlu0 %v1745, 104
    %v2456 = vpop.permute.xlu0 %2455
    %v2460 = vsel %vm404, %v2450, 0
    %v2463 = vsel %vm404, %v2452, 0
    %2465 = vmatprep.subr.mxu0 0.0
    %2466 = vmatpush1.msra.mxu0 %v2454
    %2467 = vmatprep.subr.mxu0 0.0
    %2468 = vmatpush1.msra.mxu0 %v2456
    %2469 = vmatprep.subr.mxu0 0.0
    %2470 = vmatpush1.msra.mxu0 0.0
    %2471 = vmatprep.subr.mxu0 0.0
    %2472 = vmatpush1.msra.mxu0 0.0
    %2473 = vmatprep.subr.mxu0 0.0
    %2474 = vmatpush1.msra.mxu0 0.0
    %2475 = vmatprep.subr.mxu0 0.0
    %2476 = vmatpush1.msra.mxu0 0.0
    %2477 = vmatprep.subr.mxu0 0.0
    %2478 = vmatpush1.msra.mxu0 0.0
    %2479 = vmatprep.subr.mxu0 0.0
    %2480 = vmatpush1.msra.mxu0 0.0
    %2481 = vmatprep.subr.mxu0 0.0
    %2482 = vmatpush1.msra.mxu0 0.0
    %2483 = vmatprep.subr.mxu0 0.0
    %2484 = vmatpush1.msra.mxu0 0.0
    %2485 = vmatprep.subr.mxu0 0.0
    %2486 = vmatpush1.msra.mxu0 0.0
    %2487 = vmatprep.subr.mxu0 0.0
    %2488 = vmatpush1.msra.mxu0 0.0
    %2489 = vmatprep.subr.mxu0 0.0
    %2490 = vmatpush1.msra.mxu0 0.0
    %2491 = vmatprep.subr.mxu0 0.0
    %2492 = vmatpush1.msra.mxu0 0.0
    %2493 = vmatprep.subr.mxu0 0.0
    %2494 = vmatpush1.msra.mxu0 0.0
    %2495 = vmatprep.subr.mxu0 0.0
    %2496 = vmatpush1.msra.mxu0 0.0
    %2497 = vmatprep.subr.mxu0 0.0
    %2498 = vmatpush1.msra.mxu0 0.0
    %2499 = vmatprep.subr.mxu0 0.0
    %2500 = vmatpush1.msra.mxu0 0.0
    %2501 = vmatprep.subr.mxu0 0.0
    %2502 = vmatpush1.msra.mxu0 0.0
    %2503 = vmatprep.subr.mxu0 0.0
    %2504 = vmatpush1.msra.mxu0 0.0
    %2505 = vmatprep.subr.mxu0 0.0
    %2506 = vmatpush1.msra.mxu0 0.0
    %2507 = vmatprep.subr.mxu0 0.0
    %2508 = vmatpush1.msra.mxu0 0.0
    %2509 = vmatprep.subr.mxu0 0.0
    %2510 = vmatpush1.msra.mxu0 0.0
    %2511 = vmatprep.subr.mxu0 0.0
    %2512 = vmatpush1.msra.mxu0 0.0
    %2513 = vmatprep.subr.mxu0 0.0
    %2514 = vmatpush1.msra.mxu0 0.0
    %2515 = vmatprep.subr.mxu0 0.0
    %2516 = vmatpush1.msra.mxu0 0.0
    %2517 = vmatprep.subr.mxu0 0.0
    %2518 = vmatpush1.msra.mxu0 0.0
    %2519 = vmatprep.subr.mxu0 0.0
    %2520 = vmatpush1.msra.mxu0 0.0
    %2521 = vmatprep.subr.mxu0 0.0
    %2522 = vmatpush1.msra.mxu0 0.0
    %2523 = vmatprep.subr.mxu0 0.0
    %2524 = vmatpush1.msra.mxu0 0.0
    %2525 = vmatprep.subr.mxu0 0.0
    %2526 = vmatpush1.msra.mxu0 0.0
    %2527 = vmatprep.subr.mxu0 0.0
    %2528 = vmatpush1.msra.mxu0 0.0
    %2529 = vmatprep.mubr.f32.mxu0 0.0
    %2530 = vmatmul.mubr.f32.gmra.mrb[0].mxu0 %v2460
    %v2531 = vpop.f32.mrb[0].mxu0
    %v2532 = vadd.f32 0.0, %v2531
    %v2533 = vpop.f32.mrb[0].mxu0
    %2534 = vmatprep.mubr.f32.mxu0 0.0
    %2535 = vmatmul.mubr.f32.gmra.mrb[0].mxu0 %v2463
    %v2536 = vpop.f32.mrb[0].mxu0
    %v2537 = vadd.f32 0.0, %v2536
    %v2538 = vpop.f32.mrb[0].mxu0
    %2539 = vdwg.mxu0
    %2542 = vrot.lane.b32.xlu0 %v2132, 8
    %v2543 = vpop.permute.xlu0 %2542
    %2544 = vrot.lane.b32.xlu0 %v2137, 8
    %v2545 = vpop.permute.xlu0 %2544
    %2550 = vrot.lane.b32.xlu0 %v2332, 16
    %v2551 = vpop.permute.xlu0 %2550
    %2552 = vrot.lane.b32.xlu0 %v2337, 16
    %v2553 = vpop.permute.xlu0 %2552
    %2558 = vrot.lane.b32.xlu0 %v2532, 24
    %v2559 = vpop.permute.xlu0 %2558
    %2560 = vrot.lane.b32.xlu0 %v2537, 24
    %v2561 = vpop.permute.xlu0 %2560
    %v2564 = vsel %vm316, %v1930, %v2543
    %v2565 = vsel %vm316, %v1935, %v2545
    %v2566 = vsel %vm404, %v2564, %v2551
    %v2567 = vsel %vm404, %v2565, %v2553
    %v2568 = vsel %vm1138, %v2566, %v2559
    %v2569 = vsel %vm1138, %v2567, %v2561
    %v2570 = vpack.c.bf16 %v2569, %v2568
    %v2571 = vld [vmem:[#allocation2 + $0xe0] sm:$0xf]
    %v2572 = vld [vmem:[#allocation2 + $0xe4] sm:$0xf]
    %v2573 = vld [vmem:[#allocation2 + $0xe8] sm:$0xf]
    %v2574 = vld [vmem:[#allocation2 + $0xec] sm:$0xf]
    %v2575 = vld [vmem:[%s6 + $0x7] sm:$0x1]
    %v2576 = vlaneseq
    %v2577 = vshrl.u32 %v2576, 7
    %v2578 = vsub.s32 0, %v2577
    %v2579 = vrot.slane %v2575, %v2578
    %v2584 = vunpack.c.l.b16 %v2571
    %v2585 = vunpack.c.l.b16 %v2572
    %v2586 = vunpack.c.l.b16 %v2573
    %v2587 = vunpack.c.l.b16 %v2574
    %v2588 = vpack.c.b16 %v2585, %v2584
    %v2589 = vpack.c.b16 %v2587, %v2586
    %v2593 = vsel %vm157, %v2570, 0
    %2595 = vmatprep.subr.bf16.mxu0 0
    %2596 = vmatpush1.bf16.msra.mxu0 %v2588
    %2597 = vmatprep.subr.bf16.mxu0 0
    %2598 = vmatpush1.bf16.msra.mxu0 %v2589
    %2599 = vmatprep.subr.bf16.mxu0 0
    %2600 = vmatpush1.bf16.msra.mxu0 0
    %2601 = vmatprep.subr.bf16.mxu0 0
    %2602 = vmatpush1.bf16.msra.mxu0 0
    %2603 = vmatprep.subr.bf16.mxu0 0
    %2604 = vmatpush1.bf16.msra.mxu0 0
    %2605 = vmatprep.subr.bf16.mxu0 0
    %2606 = vmatpush1.bf16.msra.mxu0 0
    %2607 = vmatprep.subr.bf16.mxu0 0
    %2608 = vmatpush1.bf16.msra.mxu0 0
    %2609 = vmatprep.subr.bf16.mxu0 0
    %2610 = vmatpush1.bf16.msra.mxu0 0
    %2611 = vmatprep.subr.bf16.mxu0 0
    %2612 = vmatpush1.bf16.msra.mxu0 0
    %2613 = vmatprep.subr.bf16.mxu0 0
    %2614 = vmatpush1.bf16.msra.mxu0 0
    %2615 = vmatprep.subr.bf16.mxu0 0
    %2616 = vmatpush1.bf16.msra.mxu0 0
    %2617 = vmatprep.subr.bf16.mxu0 0
    %2618 = vmatpush1.bf16.msra.mxu0 0
    %2619 = vmatprep.subr.bf16.mxu0 0
    %2620 = vmatpush1.bf16.msra.mxu0 0
    %2621 = vmatprep.subr.bf16.mxu0 0
    %2622 = vmatpush1.bf16.msra.mxu0 0
    %2623 = vmatprep.subr.bf16.mxu0 0
    %2624 = vmatpush1.bf16.msra.mxu0 0
    %2625 = vmatprep.subr.bf16.mxu0 0
    %2626 = vmatpush1.bf16.msra.mxu0 0
    %2627 = vmatprep.mubr.bf16.mxu0 0
    %2628 = vmatmul.mubr.bf16.gmra.mrb[0].mxu0 %v2593
    %v2629 = vpop.f32.mrb[0].mxu0
    %v2630 = vadd.f32 %v2579, %v2629
    %v2631 = vpop.f32.mrb[0].mxu0
    %v2632 = vpop.f32.mrb[0].mxu0
    %v2633 = vadd.f32 %v2579, %v2632
    %v2634 = vpop.f32.mrb[0].mxu0
    %2635 = vdwg.mxu0
    %v2636 = vsel %vm157, %v2630, 0.0
    %2637 = vadd.xlane.f32.xlu0 %v2636
    %v2638 = vpop.xlane.xlu0 %2637
    %v2639 = vsel %vm157, %v2633, 0.0
    %2640 = vadd.xlane.f32.xlu0 %v2639
    %v2641 = vpop.xlane.xlu0 %2640
    %v2642 = vmul.f32 %v2638, %v1213
    %v2643 = vmul.f32 %v2641, %v1213
    %v2644 = vsub.f32 %v2630, %v2642
    %v2645 = vsub.f32 %v2633, %v2643
    %v2646 = vmul.f32 %v2644, %v2644
    %v2647 = vmul.f32 %v2645, %v2645
    %v2648 = vsel %vm157, %v2646, 0.0
    %2649 = vadd.xlane.f32.xlu0 %v2648
    %v2650 = vpop.xlane.xlu0 %2649
    %v2651 = vsel %vm157, %v2647, 0.0
    %2652 = vadd.xlane.f32.xlu0 %v2651
    %v2653 = vpop.xlane.xlu0 %2652
    %v2654 = vmul.f32 %v2650, 0.032258064
    %v2655 = vmul.f32 %v2653, 0.032258064
    %v2656 = vld [vmem:[%s6 + $0xb] sm:$0x1]
    %s2658 = vtos %v2656
    %v2659 = vstv %s2658
    %v2661 = vmul.f32 %v2659, %v2644
    %v2662 = vmul.f32 %v2659, %v2645
    %v2663 = vadd.f32 %v2654, 1e-06
    %v2664 = vadd.f32 %v2655, 1e-06
    %v2665 = vrsqrt.pop %v2663
    %v2666 = vrsqrt.pop %v2664
    %v2667 = vmul.f32 %v2661, %v2665
    %v2668 = vmul.f32 %v2662, %v2666
    %v2669 = vld [vmem:[%s6 + $0xc] sm:$0x1]
    %s2671 = vtos %v2669
    %v2672 = vstv %s2671
    %v2674 = vadd.f32 %v2667, %v2672
    %v2675 = vadd.f32 %v2668, %v2672
    %v2676 = vadd.f32 %v1567, %v2674
    %v2677 = vadd.f32 %v1570, %v2675
    %v2678 = vpack.c.bf16 %v2677, %v2676
    %v2679 = vpack.c.bf16 %v1481, %v1480
    %v2680 = vld [vmem:[#allocation2 + $0xf0] sm:$0xf]
    %v2681 = vld [vmem:[#allocation2 + $0xf4] sm:$0xf]
    %v2682 = vld [vmem:[#allocation2 + $0xf8] sm:$0xf]
    %v2683 = vld [vmem:[#allocation2 + $0xfc] sm:$0xf]
    %v2688 = vunpack.c.l.b16 %v2680
    %v2689 = vunpack.c.l.b16 %v2681
    %v2690 = vunpack.c.l.b16 %v2682
    %v2691 = vunpack.c.l.b16 %v2683
    %v2692 = vpack.c.b16 %v2689, %v2688
    %v2693 = vpack.c.b16 %v2691, %v2690
    %v2697 = vsel %vm157, %v2678, 0
    %2699 = vmatprep.subr.bf16.mxu0 0
    %2700 = vmatpush1.bf16.msra.mxu0 %v2692
    %2701 = vmatprep.subr.bf16.mxu0 0
    %2702 = vmatpush1.bf16.msra.mxu0 %v2693
    %2703 = vmatprep.subr.bf16.mxu0 0
    %2704 = vmatpush1.bf16.msra.mxu0 0
    %2705 = vmatprep.subr.bf16.mxu0 0
    %2706 = vmatpush1.bf16.msra.mxu0 0
    %2707 = vmatprep.subr.bf16.mxu0 0
    %2708 = vmatpush1.bf16.msra.mxu0 0
    %2709 = vmatprep.subr.bf16.mxu0 0
    %2710 = vmatpush1.bf16.msra.mxu0 0
    %2711 = vmatprep.subr.bf16.mxu0 0
    %2712 = vmatpush1.bf16.msra.mxu0 0
    %2713 = vmatprep.subr.bf16.mxu0 0
    %2714 = vmatpush1.bf16.msra.mxu0 0
    %2715 = vmatprep.subr.bf16.mxu0 0
    %2716 = vmatpush1.bf16.msra.mxu0 0
    %2717 = vmatprep.subr.bf16.mxu0 0
    %2718 = vmatpush1.bf16.msra.mxu0 0
    %2719 = vmatprep.subr.bf16.mxu0 0
    %2720 = vmatpush1.bf16.msra.mxu0 0
    %2721 = vmatprep.subr.bf16.mxu0 0
    %2722 = vmatpush1.bf16.msra.mxu0 0
    %2723 = vmatprep.subr.bf16.mxu0 0
    %2724 = vmatpush1.bf16.msra.mxu0 0
    %2725 = vmatprep.subr.bf16.mxu0 0
    %2726 = vmatpush1.bf16.msra.mxu0 0
    %2727 = vmatprep.subr.bf16.mxu0 0
    %2728 = vmatpush1.bf16.msra.mxu0 0
    %2729 = vmatprep.subr.bf16.mxu0 0
    %2730 = vmatpush1.bf16.msra.mxu0 0
    %2731 = vmatprep.mubr.bf16.mxu0 0
    %2732 = vmatmul.mubr.bf16.gmra.mrb[0].mxu0 %v2697
    %v2733 = vpop.f32.mrb[0].mxu0
    %v2734 = vadd.f32 0.0, %v2733
    %v2735 = vpop.f32.mrb[0].mxu0
    %v2736 = vpop.f32.mrb[0].mxu0
    %v2737 = vadd.f32 0.0, %v2736
    %v2738 = vpop.f32.mrb[0].mxu0
    %2739 = vdwg.mxu0
    %v2740 = vld [vmem:[#allocation2 + $0x100] sm:$0xf]
    %v2741 = vld [vmem:[#allocation2 + $0x104] sm:$0xf]
    %v2742 = vld [vmem:[#allocation2 + $0x108] sm:$0xf]
    %v2743 = vld [vmem:[#allocation2 + $0x10c] sm:$0xf]
    %v2748 = vunpack.c.l.b16 %v2740
    %v2749 = vunpack.c.l.b16 %v2741
    %v2750 = vunpack.c.l.b16 %v2742
    %v2751 = vunpack.c.l.b16 %v2743
    %v2752 = vpack.c.b16 %v2749, %v2748
    %v2753 = vpack.c.b16 %v2751, %v2750
    %v2757 = vsel %vm157, %v2679, 0
    %2759 = vmatprep.subr.bf16.mxu0 0
    %2760 = vmatpush1.bf16.msra.mxu0 %v2752
    %2761 = vmatprep.subr.bf16.mxu0 0
    %2762 = vmatpush1.bf16.msra.mxu0 %v2753
    %2763 = vmatprep.subr.bf16.mxu0 0
    %2764 = vmatpush1.bf16.msra.mxu0 0
    %2765 = vmatprep.subr.bf16.mxu0 0
    %2766 = vmatpush1.bf16.msra.mxu0 0
    %2767 = vmatprep.subr.bf16.mxu0 0
    %2768 = vmatpush1.bf16.msra.mxu0 0
    %2769 = vmatprep.subr.bf16.mxu0 0
    %2770 = vmatpush1.bf16.msra.mxu0 0
    %2771 = vmatprep.subr.bf16.mxu0 0
    %2772 = vmatpush1.bf16.msra.mxu0 0
    %2773 = vmatprep.subr.bf16.mxu0 0
    %2774 = vmatpush1.bf16.msra.mxu0 0
    %2775 = vmatprep.subr.bf16.mxu0 0
    %2776 = vmatpush1.bf16.msra.mxu0 0
    %2777 = vmatprep.subr.bf16.mxu0 0
    %2778 = vmatpush1.bf16.msra.mxu0 0
    %2779 = vmatprep.subr.bf16.mxu0 0
    %2780 = vmatpush1.bf16.msra.mxu0 0
    %2781 = vmatprep.subr.bf16.mxu0 0
    %2782 = vmatpush1.bf16.msra.mxu0 0
    %2783 = vmatprep.subr.bf16.mxu0 0
    %2784 = vmatpush1.bf16.msra.mxu0 0
    %2785 = vmatprep.subr.bf16.mxu0 0
    %2786 = vmatpush1.bf16.msra.mxu0 0
    %2787 = vmatprep.subr.bf16.mxu0 0
    %2788 = vmatpush1.bf16.msra.mxu0 0
    %2789 = vmatprep.subr.bf16.mxu0 0
    %2790 = vmatpush1.bf16.msra.mxu0 0
    %2791 = vmatprep.mubr.bf16.mxu0 0
    %2792 = vmatmul.mubr.bf16.gmra.mrb[0].mxu0 %v2757
    %v2793 = vpop.f32.mrb[0].mxu0
    %v2794 = vadd.f32 0.0, %v2793
    %v2795 = vpop.f32.mrb[0].mxu0
    %v2796 = vpop.f32.mrb[0].mxu0
    %v2797 = vadd.f32 0.0, %v2796
    %v2798 = vpop.f32.mrb[0].mxu0
    %2799 = vdwg.mxu0
    %v2800 = vld [vmem:[#allocation2 + $0x110] sm:$0xf]
    %v2801 = vld [vmem:[#allocation2 + $0x114] sm:$0xf]
    %v2802 = vld [vmem:[#allocation2 + $0x118] sm:$0xf]
    %v2803 = vld [vmem:[#allocation2 + $0x11c] sm:$0xf]
    %v2808 = vunpack.c.l.b16 %v2800
    %v2809 = vunpack.c.l.b16 %v2801
    %v2810 = vunpack.c.l.b16 %v2802
    %v2811 = vunpack.c.l.b16 %v2803
    %v2812 = vpack.c.b16 %v2809, %v2808
    %v2813 = vpack.c.b16 %v2811, %v2810
    %2816 = vmatprep.subr.bf16.mxu0 0
    %2817 = vmatpush1.bf16.msra.mxu0 %v2812
    %2818 = vmatprep.subr.bf16.mxu0 0
    %2819 = vmatpush1.bf16.msra.mxu0 %v2813
    %2820 = vmatprep.subr.bf16.mxu0 0
    %2821 = vmatpush1.bf16.msra.mxu0 0
    %2822 = vmatprep.subr.bf16.mxu0 0
    %2823 = vmatpush1.bf16.msra.mxu0 0
    %2824 = vmatprep.subr.bf16.mxu0 0
    %2825 = vmatpush1.bf16.msra.mxu0 0
    %2826 = vmatprep.subr.bf16.mxu0 0
    %2827 = vmatpush1.bf16.msra.mxu0 0
    %2828 = vmatprep.subr.bf16.mxu0 0
    %2829 = vmatpush1.bf16.msra.mxu0 0
    %2830 = vmatprep.subr.bf16.mxu0 0
    %2831 = vmatpush1.bf16.msra.mxu0 0
    %2832 = vmatprep.subr.bf16.mxu0 0
    %2833 = vmatpush1.bf16.msra.mxu0 0
    %2834 = vmatprep.subr.bf16.mxu0 0
    %2835 = vmatpush1.bf16.msra.mxu0 0
    %2836 = vmatprep.subr.bf16.mxu0 0
    %2837 = vmatpush1.bf16.msra.mxu0 0
    %2838 = vmatprep.subr.bf16.mxu0 0
    %2839 = vmatpush1.bf16.msra.mxu0 0
    %2840 = vmatprep.subr.bf16.mxu0 0
    %2841 = vmatpush1.bf16.msra.mxu0 0
    %2842 = vmatprep.subr.bf16.mxu0 0
    %2843 = vmatpush1.bf16.msra.mxu0 0
    %2844 = vmatprep.subr.bf16.mxu0 0
    %2845 = vmatpush1.bf16.msra.mxu0 0
    %2846 = vmatprep.subr.bf16.mxu0 0
    %2847 = vmatpush1.bf16.msra.mxu0 0
    %2848 = vmatprep.mubr.bf16.mxu0 0
    %2849 = vmatmul.mubr.bf16.gmra.mrb[0].mxu0 %v2757
    %v2850 = vpop.f32.mrb[0].mxu0
    %v2851 = vadd.f32 0.0, %v2850
    %v2852 = vpop.f32.mrb[0].mxu0
    %v2853 = vpop.f32.mrb[0].mxu0
    %v2854 = vadd.f32 0.0, %v2853
    %v2855 = vpop.f32.mrb[0].mxu0
    %2856 = vdwg.mxu0
    %v2858 = vsel %vm316, %v2734, 0
    %v2861 = vsel %vm316, %v2737, 0
    %v2864 = vsel %vm316, %v2794, 0
    %v2867 = vsel %vm316, %v2797, 0
    %2869 = vmatprep.subr.mxu0 0.0
    %2870 = vmatpush1.xpose.msra.mxu0 %v2864
    %2871 = vmatprep.subr.mxu0 0.0
    %2872 = vmatpush1.xpose.msra.mxu0 %v2867
    %2873 = vmatprep.subr.mxu0 0.0
    %2874 = vmatpush1.xpose.msra.mxu0 0.0
    %2875 = vmatprep.subr.mxu0 0.0
    %2876 = vmatpush1.xpose.msra.mxu0 0.0
    %2877 = vmatprep.subr.mxu0 0.0
    %2878 = vmatpush1.xpose.msra.mxu0 0.0
    %2879 = vmatprep.subr.mxu0 0.0
    %2880 = vmatpush1.xpose.msra.mxu0 0.0
    %2881 = vmatprep.subr.mxu0 0.0
    %2882 = vmatpush1.xpose.msra.mxu0 0.0
    %2883 = vmatprep.subr.mxu0 0.0
    %2884 = vmatpush1.xpose.msra.mxu0 0.0
    %2885 = vmatprep.subr.mxu0 0.0
    %2886 = vmatpush1.xpose.msra.mxu0 0.0
    %2887 = vmatprep.subr.mxu0 0.0
    %2888 = vmatpush1.xpose.msra.mxu0 0.0
    %2889 = vmatprep.subr.mxu0 0.0
    %2890 = vmatpush1.xpose.msra.mxu0 0.0
    %2891 = vmatprep.subr.mxu0 0.0
    %2892 = vmatpush1.xpose.msra.mxu0 0.0
    %2893 = vmatprep.subr.mxu0 0.0
    %2894 = vmatpush1.xpose.msra.mxu0 0.0
    %2895 = vmatprep.subr.mxu0 0.0
    %2896 = vmatpush1.xpose.msra.mxu0 0.0
    %2897 = vmatprep.subr.mxu0 0.0
    %2898 = vmatpush1.xpose.msra.mxu0 0.0
    %2899 = vmatprep.subr.mxu0 0.0
    %2900 = vmatpush1.xpose.msra.mxu0 0.0
    %2901 = vmatprep.subr.mxu0 0.0
    %2902 = vmatpush1.xpose.msra.mxu0 0.0
    %2903 = vmatprep.subr.mxu0 0.0
    %2904 = vmatpush1.xpose.msra.mxu0 0.0
    %2905 = vmatprep.subr.mxu0 0.0
    %2906 = vmatpush1.xpose.msra.mxu0 0.0
    %2907 = vmatprep.subr.mxu0 0.0
    %2908 = vmatpush1.xpose.msra.mxu0 0.0
    %2909 = vmatprep.subr.mxu0 0.0
    %2910 = vmatpush1.xpose.msra.mxu0 0.0
    %2911 = vmatprep.subr.mxu0 0.0
    %2912 = vmatpush1.xpose.msra.mxu0 0.0
    %2913 = vmatprep.subr.mxu0 0.0
    %2914 = vmatpush1.xpose.msra.mxu0 0.0
    %2915 = vmatprep.subr.mxu0 0.0
    %2916 = vmatpush1.xpose.msra.mxu0 0.0
    %2917 = vmatprep.subr.mxu0 0.0
    %2918 = vmatpush1.xpose.msra.mxu0 0.0
    %2919 = vmatprep.subr.mxu0 0.0
    %2920 = vmatpush1.xpose.msra.mxu0 0.0
    %2921 = vmatprep.subr.mxu0 0.0
    %2922 = vmatpush1.xpose.msra.mxu0 0.0
    %2923 = vmatprep.subr.mxu0 0.0
    %2924 = vmatpush1.xpose.msra.mxu0 0.0
    %2925 = vmatprep.subr.mxu0 0.0
    %2926 = vmatpush1.xpose.msra.mxu0 0.0
    %2927 = vmatprep.subr.mxu0 0.0
    %2928 = vmatpush1.xpose.msra.mxu0 0.0
    %2929 = vmatprep.subr.mxu0 0.0
    %2930 = vmatpush1.xpose.msra.mxu0 0.0
    %2931 = vmatprep.subr.mxu0 0.0
    %2932 = vmatpush1.xpose.msra.mxu0 0.0
    %2933 = vmatprep.mubr.f32.mxu0 0.0
    %2934 = vmatmul.mubr.f32.gmra.mrb[0].mxu0 %v2858
    %v2935 = vpop.f32.mrb[0].mxu0
    %v2936 = vadd.f32 %v41, %v2935
    %v2937 = vpop.f32.mrb[0].mxu0
    %2938 = vmatprep.mubr.f32.mxu0 0.0
    %2939 = vmatmul.mubr.f32.gmra.mrb[0].mxu0 %v2861
    %v2940 = vpop.f32.mrb[0].mxu0
    %v2941 = vadd.f32 %v42, %v2940
    %v2942 = vpop.f32.mrb[0].mxu0
    %2943 = vdwg.mxu0
    %v2944 = vsel %vm404, %v2936, -inf
    %2945 = vmax.xlane.f32.xlu0 %v2944
    %v2946 = vpop.xlane.xlu0 %2945
    %v2947 = vsel %vm404, %v2941, -inf
    %2948 = vmax.xlane.f32.xlu0 %v2947
    %v2949 = vpop.xlane.xlu0 %2948
    %v2950 = vsub.f32 %v2936, %v2946
    %v2951 = vsub.f32 %v2941, %v2949
    %v2952 = vmul.f32 %v2950, 1.442695
    %v2953 = vpow.pop %v2952
    %v2954 = vmul.f32 %v2951, 1.442695
    %v2955 = vpow.pop %v2954
    %v2956 = vsel %vm404, %v2953, 0.0
    %2957 = vadd.xlane.f32.xlu0 %v2956
    %v2958 = vpop.xlane.xlu0 %2957
    %v2959 = vsel %vm404, %v2955, 0.0
    %2960 = vadd.xlane.f32.xlu0 %v2959
    %v2961 = vpop.xlane.xlu0 %2960
    %v2962 = vrcp.pop %v2958
    %v2963 = vmul.f32 %v2953, %v2962
    %v2964 = vrcp.pop %v2961
    %v2965 = vmul.f32 %v2955, %v2964
    %v2967 = vsel %vm404, %v2963, 0
    %v2970 = vsel %vm404, %v2965, 0
    %2972 = vmatprep.subr.mxu0 0.0
    %2973 = vmatpush1.msra.mxu0 %v2851
    %2974 = vmatprep.subr.mxu0 0.0
    %2975 = vmatpush1.msra.mxu0 %v2854
    %2976 = vmatprep.subr.mxu0 0.0
    %2977 = vmatpush1.msra.mxu0 0.0
    %2978 = vmatprep.subr.mxu0 0.0
    %2979 = vmatpush1.msra.mxu0 0.0
    %2980 = vmatprep.subr.mxu0 0.0
    %2981 = vmatpush1.msra.mxu0 0.0
    %2982 = vmatprep.subr.mxu0 0.0
    %2983 = vmatpush1.msra.mxu0 0.0
    %2984 = vmatprep.subr.mxu0 0.0
    %2985 = vmatpush1.msra.mxu0 0.0
    %2986 = vmatprep.subr.mxu0 0.0
    %2987 = vmatpush1.msra.mxu0 0.0
    %2988 = vmatprep.subr.mxu0 0.0
    %2989 = vmatpush1.msra.mxu0 0.0
    %2990 = vmatprep.subr.mxu0 0.0
    %2991 = vmatpush1.msra.mxu0 0.0
    %2992 = vmatprep.subr.mxu0 0.0
    %2993 = vmatpush1.msra.mxu0 0.0
    %2994 = vmatprep.subr.mxu0 0.0
    %2995 = vmatpush1.msra.mxu0 0.0
    %2996 = vmatprep.subr.mxu0 0.0
    %2997 = vmatpush1.msra.mxu0 0.0
    %2998 = vmatprep.subr.mxu0 0.0
    %2999 = vmatpush1.msra.mxu0 0.0
    %3000 = vmatprep.subr.mxu0 0.0
    %3001 = vmatpush1.msra.mxu0 0.0
    %3002 = vmatprep.subr.mxu0 0.0
    %3003 = vmatpush1.msra.mxu0 0.0
    %3004 = vmatprep.subr.mxu0 0.0
    %3005 = vmatpush1.msra.mxu0 0.0
    %3006 = vmatprep.subr.mxu0 0.0
    %3007 = vmatpush1.msra.mxu0 0.0
    %3008 = vmatprep.subr.mxu0 0.0
    %3009 = vmatpush1.msra.mxu0 0.0
    %3010 = vmatprep.subr.mxu0 0.0
    %3011 = vmatpush1.msra.mxu0 0.0
    %3012 = vmatprep.subr.mxu0 0.0
    %3013 = vmatpush1.msra.mxu0 0.0
    %3014 = vmatprep.subr.mxu0 0.0
    %3015 = vmatpush1.msra.mxu0 0.0
    %3016 = vmatprep.subr.mxu0 0.0
    %3017 = vmatpush1.msra.mxu0 0.0
    %3018 = vmatprep.subr.mxu0 0.0
    %3019 = vmatpush1.msra.mxu0 0.0
    %3020 = vmatprep.subr.mxu0 0.0
    %3021 = vmatpush1.msra.mxu0 0.0
    %3022 = vmatprep.subr.mxu0 0.0
    %3023 = vmatpush1.msra.mxu0 0.0
    %3024 = vmatprep.subr.mxu0 0.0
    %3025 = vmatpush1.msra.mxu0 0.0
    %3026 = vmatprep.subr.mxu0 0.0
    %3027 = vmatpush1.msra.mxu0 0.0
    %3028 = vmatprep.subr.mxu0 0.0
    %3029 = vmatpush1.msra.mxu0 0.0
    %3030 = vmatprep.subr.mxu0 0.0
    %3031 = vmatpush1.msra.mxu0 0.0
    %3032 = vmatprep.subr.mxu0 0.0
    %3033 = vmatpush1.msra.mxu0 0.0
    %3034 = vmatprep.subr.mxu0 0.0
    %3035 = vmatpush1.msra.mxu0 0.0
    %3036 = vmatprep.mubr.f32.mxu0 0.0
    %3037 = vmatmul.mubr.f32.gmra.mrb[0].mxu0 %v2967
    %v3038 = vpop.f32.mrb[0].mxu0
    %v3039 = vadd.f32 0.0, %v3038
    %v3040 = vpop.f32.mrb[0].mxu0
    %3041 = vmatprep.mubr.f32.mxu0 0.0
    %3042 = vmatmul.mubr.f32.gmra.mrb[0].mxu0 %v2970
    %v3043 = vpop.f32.mrb[0].mxu0
    %v3044 = vadd.f32 0.0, %v3043
    %v3045 = vpop.f32.mrb[0].mxu0
    %3046 = vdwg.mxu0
    %3047 = vrot.lane.b32.xlu0 %v2734, 120
    %v3048 = vpop.permute.xlu0 %3047
    %3049 = vrot.lane.b32.xlu0 %v2737, 120
    %v3050 = vpop.permute.xlu0 %3049
    %3051 = vrot.lane.b32.xlu0 %v2794, 120
    %v3052 = vpop.permute.xlu0 %3051
    %3053 = vrot.lane.b32.xlu0 %v2797, 120
    %v3054 = vpop.permute.xlu0 %3053
    %v3055 = vsel %vm316, %v3048, 0
    %v3057 = vsel %vm316, %v3050, 0
    %v3059 = vsel %vm316, %v3052, 0
    %v3061 = vsel %vm316, %v3054, 0
    %3063 = vmatprep.subr.mxu0 0.0
    %3064 = vmatpush1.xpose.msra.mxu0 %v3059
    %3065 = vmatprep.subr.mxu0 0.0
    %3066 = vmatpush1.xpose.msra.mxu0 %v3061
    %3067 = vmatprep.subr.mxu0 0.0
    %3068 = vmatpush1.xpose.msra.mxu0 0.0
    %3069 = vmatprep.subr.mxu0 0.0
    %3070 = vmatpush1.xpose.msra.mxu0 0.0
    %3071 = vmatprep.subr.mxu0 0.0
    %3072 = vmatpush1.xpose.msra.mxu0 0.0
    %3073 = vmatprep.subr.mxu0 0.0
    %3074 = vmatpush1.xpose.msra.mxu0 0.0
    %3075 = vmatprep.subr.mxu0 0.0
    %3076 = vmatpush1.xpose.msra.mxu0 0.0
    %3077 = vmatprep.subr.mxu0 0.0
    %3078 = vmatpush1.xpose.msra.mxu0 0.0
    %3079 = vmatprep.subr.mxu0 0.0
    %3080 = vmatpush1.xpose.msra.mxu0 0.0
    %3081 = vmatprep.subr.mxu0 0.0
    %3082 = vmatpush1.xpose.msra.mxu0 0.0
    %3083 = vmatprep.subr.mxu0 0.0
    %3084 = vmatpush1.xpose.msra.mxu0 0.0
    %3085 = vmatprep.subr.mxu0 0.0
    %3086 = vmatpush1.xpose.msra.mxu0 0.0
    %3087 = vmatprep.subr.mxu0 0.0
    %3088 = vmatpush1.xpose.msra.mxu0 0.0
    %3089 = vmatprep.subr.mxu0 0.0
    %3090 = vmatpush1.xpose.msra.mxu0 0.0
    %3091 = vmatprep.subr.mxu0 0.0
    %3092 = vmatpush1.xpose.msra.mxu0 0.0
    %3093 = vmatprep.subr.mxu0 0.0
    %3094 = vmatpush1.xpose.msra.mxu0 0.0
    %3095 = vmatprep.subr.mxu0 0.0
    %3096 = vmatpush1.xpose.msra.mxu0 0.0
    %3097 = vmatprep.subr.mxu0 0.0
    %3098 = vmatpush1.xpose.msra.mxu0 0.0
    %3099 = vmatprep.subr.mxu0 0.0
    %3100 = vmatpush1.xpose.msra.mxu0 0.0
    %3101 = vmatprep.subr.mxu0 0.0
    %3102 = vmatpush1.xpose.msra.mxu0 0.0
    %3103 = vmatprep.subr.mxu0 0.0
    %3104 = vmatpush1.xpose.msra.mxu0 0.0
    %3105 = vmatprep.subr.mxu0 0.0
    %3106 = vmatpush1.xpose.msra.mxu0 0.0
    %3107 = vmatprep.subr.mxu0 0.0
    %3108 = vmatpush1.xpose.msra.mxu0 0.0
    %3109 = vmatprep.subr.mxu0 0.0
    %3110 = vmatpush1.xpose.msra.mxu0 0.0
    %3111 = vmatprep.subr.mxu0 0.0
    %3112 = vmatpush1.xpose.msra.mxu0 0.0
    %3113 = vmatprep.subr.mxu0 0.0
    %3114 = vmatpush1.xpose.msra.mxu0 0.0
    %3115 = vmatprep.subr.mxu0 0.0
    %3116 = vmatpush1.xpose.msra.mxu0 0.0
    %3117 = vmatprep.subr.mxu0 0.0
    %3118 = vmatpush1.xpose.msra.mxu0 0.0
    %3119 = vmatprep.subr.mxu0 0.0
    %3120 = vmatpush1.xpose.msra.mxu0 0.0
    %3121 = vmatprep.subr.mxu0 0.0
    %3122 = vmatpush1.xpose.msra.mxu0 0.0
    %3123 = vmatprep.subr.mxu0 0.0
    %3124 = vmatpush1.xpose.msra.mxu0 0.0
    %3125 = vmatprep.subr.mxu0 0.0
    %3126 = vmatpush1.xpose.msra.mxu0 0.0
    %3127 = vmatprep.mubr.f32.mxu0 0.0
    %3128 = vmatmul.mubr.f32.gmra.mrb[0].mxu0 %v3055
    %v3129 = vpop.f32.mrb[0].mxu0
    %v3130 = vadd.f32 %v41, %v3129
    %v3131 = vpop.f32.mrb[0].mxu0
    %3132 = vmatprep.mubr.f32.mxu0 0.0
    %3133 = vmatmul.mubr.f32.gmra.mrb[0].mxu0 %v3057
    %v3134 = vpop.f32.mrb[0].mxu0
    %v3135 = vadd.f32 %v42, %v3134
    %v3136 = vpop.f32.mrb[0].mxu0
    %3137 = vdwg.mxu0
    %v3138 = vsel %vm404, %v3130, -inf
    %3139 = vmax.xlane.f32.xlu0 %v3138
    %v3140 = vpop.xlane.xlu0 %3139
    %v3141 = vsel %vm404, %v3135, -inf
    %3142 = vmax.xlane.f32.xlu0 %v3141
    %v3143 = vpop.xlane.xlu0 %3142
    %v3144 = vsub.f32 %v3130, %v3140
    %v3145 = vsub.f32 %v3135, %v3143
    %v3146 = vmul.f32 %v3144, 1.442695
    %v3147 = vpow.pop %v3146
    %v3148 = vmul.f32 %v3145, 1.442695
    %v3149 = vpow.pop %v3148
    %v3150 = vsel %vm404, %v3147, 0.0
    %3151 = vadd.xlane.f32.xlu0 %v3150
    %v3152 = vpop.xlane.xlu0 %3151
    %v3153 = vsel %vm404, %v3149, 0.0
    %3154 = vadd.xlane.f32.xlu0 %v3153
    %v3155 = vpop.xlane.xlu0 %3154
    %v3156 = vrcp.pop %v3152
    %v3157 = vmul.f32 %v3147, %v3156
    %v3158 = vrcp.pop %v3155
    %v3159 = vmul.f32 %v3149, %v3158
    %3162 = vrot.lane.b32.xlu0 %v2851, 120
    %v3163 = vpop.permute.xlu0 %3162
    %3164 = vrot.lane.b32.xlu0 %v2854, 120
    %v3165 = vpop.permute.xlu0 %3164
    %v3169 = vsel %vm404, %v3157, 0
    %v3172 = vsel %vm404, %v3159, 0
    %3174 = vmatprep.subr.mxu0 0.0
    %3175 = vmatpush1.msra.mxu0 %v3163
    %3176 = vmatprep.subr.mxu0 0.0
    %3177 = vmatpush1.msra.mxu0 %v3165
    %3178 = vmatprep.subr.mxu0 0.0
    %3179 = vmatpush1.msra.mxu0 0.0
    %3180 = vmatprep.subr.mxu0 0.0
    %3181 = vmatpush1.msra.mxu0 0.0
    %3182 = vmatprep.subr.mxu0 0.0
    %3183 = vmatpush1.msra.mxu0 0.0
    %3184 = vmatprep.subr.mxu0 0.0
    %3185 = vmatpush1.msra.mxu0 0.0
    %3186 = vmatprep.subr.mxu0 0.0
    %3187 = vmatpush1.msra.mxu0 0.0
    %3188 = vmatprep.subr.mxu0 0.0
    %3189 = vmatpush1.msra.mxu0 0.0
    %3190 = vmatprep.subr.mxu0 0.0
    %3191 = vmatpush1.msra.mxu0 0.0
    %3192 = vmatprep.subr.mxu0 0.0
    %3193 = vmatpush1.msra.mxu0 0.0
    %3194 = vmatprep.subr.mxu0 0.0
    %3195 = vmatpush1.msra.mxu0 0.0
    %3196 = vmatprep.subr.mxu0 0.0
    %3197 = vmatpush1.msra.mxu0 0.0
    %3198 = vmatprep.subr.mxu0 0.0
    %3199 = vmatpush1.msra.mxu0 0.0
    %3200 = vmatprep.subr.mxu0 0.0
    %3201 = vmatpush1.msra.mxu0 0.0
    %3202 = vmatprep.subr.mxu0 0.0
    %3203 = vmatpush1.msra.mxu0 0.0
    %3204 = vmatprep.subr.mxu0 0.0
    %3205 = vmatpush1.msra.mxu0 0.0
    %3206 = vmatprep.subr.mxu0 0.0
    %3207 = vmatpush1.msra.mxu0 0.0
    %3208 = vmatprep.subr.mxu0 0.0
    %3209 = vmatpush1.msra.mxu0 0.0
    %3210 = vmatprep.subr.mxu0 0.0
    %3211 = vmatpush1.msra.mxu0 0.0
    %3212 = vmatprep.subr.mxu0 0.0
    %3213 = vmatpush1.msra.mxu0 0.0
    %3214 = vmatprep.subr.mxu0 0.0
    %3215 = vmatpush1.msra.mxu0 0.0
    %3216 = vmatprep.subr.mxu0 0.0
    %3217 = vmatpush1.msra.mxu0 0.0
    %3218 = vmatprep.subr.mxu0 0.0
    %3219 = vmatpush1.msra.mxu0 0.0
    %3220 = vmatprep.subr.mxu0 0.0
    %3221 = vmatpush1.msra.mxu0 0.0
    %3222 = vmatprep.subr.mxu0 0.0
    %3223 = vmatpush1.msra.mxu0 0.0
    %3224 = vmatprep.subr.mxu0 0.0
    %3225 = vmatpush1.msra.mxu0 0.0
    %3226 = vmatprep.subr.mxu0 0.0
    %3227 = vmatpush1.msra.mxu0 0.0
    %3228 = vmatprep.subr.mxu0 0.0
    %3229 = vmatpush1.msra.mxu0 0.0
    %3230 = vmatprep.subr.mxu0 0.0
    %3231 = vmatpush1.msra.mxu0 0.0
    %3232 = vmatprep.subr.mxu0 0.0
    %3233 = vmatpush1.msra.mxu0 0.0
    %3234 = vmatprep.subr.mxu0 0.0
    %3235 = vmatpush1.msra.mxu0 0.0
    %3236 = vmatprep.subr.mxu0 0.0
    %3237 = vmatpush1.msra.mxu0 0.0
    %3238 = vmatprep.mubr.f32.mxu0 0.0
    %3239 = vmatmul.mubr.f32.gmra.mrb[0].mxu0 %v3169
    %v3240 = vpop.f32.mrb[0].mxu0
    %v3241 = vadd.f32 0.0, %v3240
    %v3242 = vpop.f32.mrb[0].mxu0
    %3243 = vmatprep.mubr.f32.mxu0 0.0
    %3244 = vmatmul.mubr.f32.gmra.mrb[0].mxu0 %v3172
    %v3245 = vpop.f32.mrb[0].mxu0
    %v3246 = vadd.f32 0.0, %v3245
    %v3247 = vpop.f32.mrb[0].mxu0
    %3248 = vdwg.mxu0
    %3249 = vrot.lane.b32.xlu0 %v2734, 112
    %v3250 = vpop.permute.xlu0 %3249
    %3251 = vrot.lane.b32.xlu0 %v2737, 112
    %v3252 = vpop.permute.xlu0 %3251
    %3253 = vrot.lane.b32.xlu0 %v2794, 112
    %v3254 = vpop.permute.xlu0 %3253
    %3255 = vrot.lane.b32.xlu0 %v2797, 112
    %v3256 = vpop.permute.xlu0 %3255
    %v3257 = vsel %vm316, %v3250, 0
    %v3259 = vsel %vm316, %v3252, 0
    %v3261 = vsel %vm316, %v3254, 0
    %v3263 = vsel %vm316, %v3256, 0
    %3265 = vmatprep.subr.mxu0 0.0
    %3266 = vmatpush1.xpose.msra.mxu0 %v3261
    %3267 = vmatprep.subr.mxu0 0.0
    %3268 = vmatpush1.xpose.msra.mxu0 %v3263
    %3269 = vmatprep.subr.mxu0 0.0
    %3270 = vmatpush1.xpose.msra.mxu0 0.0
    %3271 = vmatprep.subr.mxu0 0.0
    %3272 = vmatpush1.xpose.msra.mxu0 0.0
    %3273 = vmatprep.subr.mxu0 0.0
    %3274 = vmatpush1.xpose.msra.mxu0 0.0
    %3275 = vmatprep.subr.mxu0 0.0
    %3276 = vmatpush1.xpose.msra.mxu0 0.0
    %3277 = vmatprep.subr.mxu0 0.0
    %3278 = vmatpush1.xpose.msra.mxu0 0.0
    %3279 = vmatprep.subr.mxu0 0.0
    %3280 = vmatpush1.xpose.msra.mxu0 0.0
    %3281 = vmatprep.subr.mxu0 0.0
    %3282 = vmatpush1.xpose.msra.mxu0 0.0
    %3283 = vmatprep.subr.mxu0 0.0
    %3284 = vmatpush1.xpose.msra.mxu0 0.0
    %3285 = vmatprep.subr.mxu0 0.0
    %3286 = vmatpush1.xpose.msra.mxu0 0.0
    %3287 = vmatprep.subr.mxu0 0.0
    %3288 = vmatpush1.xpose.msra.mxu0 0.0
    %3289 = vmatprep.subr.mxu0 0.0
    %3290 = vmatpush1.xpose.msra.mxu0 0.0
    %3291 = vmatprep.subr.mxu0 0.0
    %3292 = vmatpush1.xpose.msra.mxu0 0.0
    %3293 = vmatprep.subr.mxu0 0.0
    %3294 = vmatpush1.xpose.msra.mxu0 0.0
    %3295 = vmatprep.subr.mxu0 0.0
    %3296 = vmatpush1.xpose.msra.mxu0 0.0
    %3297 = vmatprep.subr.mxu0 0.0
    %3298 = vmatpush1.xpose.msra.mxu0 0.0
    %3299 = vmatprep.subr.mxu0 0.0
    %3300 = vmatpush1.xpose.msra.mxu0 0.0
    %3301 = vmatprep.subr.mxu0 0.0
    %3302 = vmatpush1.xpose.msra.mxu0 0.0
    %3303 = vmatprep.subr.mxu0 0.0
    %3304 = vmatpush1.xpose.msra.mxu0 0.0
    %3305 = vmatprep.subr.mxu0 0.0
    %3306 = vmatpush1.xpose.msra.mxu0 0.0
    %3307 = vmatprep.subr.mxu0 0.0
    %3308 = vmatpush1.xpose.msra.mxu0 0.0
    %3309 = vmatprep.subr.mxu0 0.0
    %3310 = vmatpush1.xpose.msra.mxu0 0.0
    %3311 = vmatprep.subr.mxu0 0.0
    %3312 = vmatpush1.xpose.msra.mxu0 0.0
    %3313 = vmatprep.subr.mxu0 0.0
    %3314 = vmatpush1.xpose.msra.mxu0 0.0
    %3315 = vmatprep.subr.mxu0 0.0
    %3316 = vmatpush1.xpose.msra.mxu0 0.0
    %3317 = vmatprep.subr.mxu0 0.0
    %3318 = vmatpush1.xpose.msra.mxu0 0.0
    %3319 = vmatprep.subr.mxu0 0.0
    %3320 = vmatpush1.xpose.msra.mxu0 0.0
    %3321 = vmatprep.subr.mxu0 0.0
    %3322 = vmatpush1.xpose.msra.mxu0 0.0
    %3323 = vmatprep.subr.mxu0 0.0
    %3324 = vmatpush1.xpose.msra.mxu0 0.0
    %3325 = vmatprep.subr.mxu0 0.0
    %3326 = vmatpush1.xpose.msra.mxu0 0.0
    %3327 = vmatprep.subr.mxu0 0.0
    %3328 = vmatpush1.xpose.msra.mxu0 0.0
    %3329 = vmatprep.mubr.f32.mxu0 0.0
    %3330 = vmatmul.mubr.f32.gmra.mrb[0].mxu0 %v3257
    %v3331 = vpop.f32.mrb[0].mxu0
    %v3332 = vadd.f32 %v41, %v3331
    %v3333 = vpop.f32.mrb[0].mxu0
    %3334 = vmatprep.mubr.f32.mxu0 0.0
    %3335 = vmatmul.mubr.f32.gmra.mrb[0].mxu0 %v3259
    %v3336 = vpop.f32.mrb[0].mxu0
    %v3337 = vadd.f32 %v42, %v3336
    %v3338 = vpop.f32.mrb[0].mxu0
    %3339 = vdwg.mxu0
    %v3340 = vsel %vm404, %v3332, -inf
    %3341 = vmax.xlane.f32.xlu0 %v3340
    %v3342 = vpop.xlane.xlu0 %3341
    %v3343 = vsel %vm404, %v3337, -inf
    %3344 = vmax.xlane.f32.xlu0 %v3343
    %v3345 = vpop.xlane.xlu0 %3344
    %v3346 = vsub.f32 %v3332, %v3342
    %v3347 = vsub.f32 %v3337, %v3345
    %v3348 = vmul.f32 %v3346, 1.442695
    %v3349 = vpow.pop %v3348
    %v3350 = vmul.f32 %v3347, 1.442695
    %v3351 = vpow.pop %v3350
    %v3352 = vsel %vm404, %v3349, 0.0
    %3353 = vadd.xlane.f32.xlu0 %v3352
    %v3354 = vpop.xlane.xlu0 %3353
    %v3355 = vsel %vm404, %v3351, 0.0
    %3356 = vadd.xlane.f32.xlu0 %v3355
    %v3357 = vpop.xlane.xlu0 %3356
    %v3358 = vrcp.pop %v3354
    %v3359 = vmul.f32 %v3349, %v3358
    %v3360 = vrcp.pop %v3357
    %v3361 = vmul.f32 %v3351, %v3360
    %3362 = vrot.lane.b32.xlu0 %v2851, 112
    %v3363 = vpop.permute.xlu0 %3362
    %3364 = vrot.lane.b32.xlu0 %v2854, 112
    %v3365 = vpop.permute.xlu0 %3364
    %v3369 = vsel %vm404, %v3359, 0
    %v3372 = vsel %vm404, %v3361, 0
    %3374 = vmatprep.subr.mxu0 0.0
    %3375 = vmatpush1.msra.mxu0 %v3363
    %3376 = vmatprep.subr.mxu0 0.0
    %3377 = vmatpush1.msra.mxu0 %v3365
    %3378 = vmatprep.subr.mxu0 0.0
    %3379 = vmatpush1.msra.mxu0 0.0
    %3380 = vmatprep.subr.mxu0 0.0
    %3381 = vmatpush1.msra.mxu0 0.0
    %3382 = vmatprep.subr.mxu0 0.0
    %3383 = vmatpush1.msra.mxu0 0.0
    %3384 = vmatprep.subr.mxu0 0.0
    %3385 = vmatpush1.msra.mxu0 0.0
    %3386 = vmatprep.subr.mxu0 0.0
    %3387 = vmatpush1.msra.mxu0 0.0
    %3388 = vmatprep.subr.mxu0 0.0
    %3389 = vmatpush1.msra.mxu0 0.0
    %3390 = vmatprep.subr.mxu0 0.0
    %3391 = vmatpush1.msra.mxu0 0.0
    %3392 = vmatprep.subr.mxu0 0.0
    %3393 = vmatpush1.msra.mxu0 0.0
    %3394 = vmatprep.subr.mxu0 0.0
    %3395 = vmatpush1.msra.mxu0 0.0
    %3396 = vmatprep.subr.mxu0 0.0
    %3397 = vmatpush1.msra.mxu0 0.0
    %3398 = vmatprep.subr.mxu0 0.0
    %3399 = vmatpush1.msra.mxu0 0.0
    %3400 = vmatprep.subr.mxu0 0.0
    %3401 = vmatpush1.msra.mxu0 0.0
    %3402 = vmatprep.subr.mxu0 0.0
    %3403 = vmatpush1.msra.mxu0 0.0
    %3404 = vmatprep.subr.mxu0 0.0
    %3405 = vmatpush1.msra.mxu0 0.0
    %3406 = vmatprep.subr.mxu0 0.0
    %3407 = vmatpush1.msra.mxu0 0.0
    %3408 = vmatprep.subr.mxu0 0.0
    %3409 = vmatpush1.msra.mxu0 0.0
    %3410 = vmatprep.subr.mxu0 0.0
    %3411 = vmatpush1.msra.mxu0 0.0
    %3412 = vmatprep.subr.mxu0 0.0
    %3413 = vmatpush1.msra.mxu0 0.0
    %3414 = vmatprep.subr.mxu0 0.0
    %3415 = vmatpush1.msra.mxu0 0.0
    %3416 = vmatprep.subr.mxu0 0.0
    %3417 = vmatpush1.msra.mxu0 0.0
    %3418 = vmatprep.subr.mxu0 0.0
    %3419 = vmatpush1.msra.mxu0 0.0
    %3420 = vmatprep.subr.mxu0 0.0
    %3421 = vmatpush1.msra.mxu0 0.0
    %3422 = vmatprep.subr.mxu0 0.0
    %3423 = vmatpush1.msra.mxu0 0.0
    %3424 = vmatprep.subr.mxu0 0.0
    %3425 = vmatpush1.msra.mxu0 0.0
    %3426 = vmatprep.subr.mxu0 0.0
    %3427 = vmatpush1.msra.mxu0 0.0
    %3428 = vmatprep.subr.mxu0 0.0
    %3429 = vmatpush1.msra.mxu0 0.0
    %3430 = vmatprep.subr.mxu0 0.0
    %3431 = vmatpush1.msra.mxu0 0.0
    %3432 = vmatprep.subr.mxu0 0.0
    %3433 = vmatpush1.msra.mxu0 0.0
    %3434 = vmatprep.subr.mxu0 0.0
    %3435 = vmatpush1.msra.mxu0 0.0
    %3436 = vmatprep.subr.mxu0 0.0
    %3437 = vmatpush1.msra.mxu0 0.0
    %3438 = vmatprep.mubr.f32.mxu0 0.0
    %3439 = vmatmul.mubr.f32.gmra.mrb[0].mxu0 %v3369
    %v3440 = vpop.f32.mrb[0].mxu0
    %v3441 = vadd.f32 0.0, %v3440
    %v3442 = vpop.f32.mrb[0].mxu0
    %3443 = vmatprep.mubr.f32.mxu0 0.0
    %3444 = vmatmul.mubr.f32.gmra.mrb[0].mxu0 %v3372
    %v3445 = vpop.f32.mrb[0].mxu0
    %v3446 = vadd.f32 0.0, %v3445
    %v3447 = vpop.f32.mrb[0].mxu0
    %3448 = vdwg.mxu0
    %3449 = vrot.lane.b32.xlu0 %v2734, 104
    %v3450 = vpop.permute.xlu0 %3449
    %3451 = vrot.lane.b32.xlu0 %v2737, 104
    %v3452 = vpop.permute.xlu0 %3451
    %3453 = vrot.lane.b32.xlu0 %v2794, 104
    %v3454 = vpop.permute.xlu0 %3453
    %3455 = vrot.lane.b32.xlu0 %v2797, 104
    %v3456 = vpop.permute.xlu0 %3455
    %v3457 = vsel %vm316, %v3450, 0
    %v3459 = vsel %vm316, %v3452, 0
    %v3461 = vsel %vm316, %v3454, 0
    %v3463 = vsel %vm316, %v3456, 0
    %3465 = vmatprep.subr.mxu0 0.0
    %3466 = vmatpush1.xpose.msra.mxu0 %v3461
    %3467 = vmatprep.subr.mxu0 0.0
    %3468 = vmatpush1.xpose.msra.mxu0 %v3463
    %3469 = vmatprep.subr.mxu0 0.0
    %3470 = vmatpush1.xpose.msra.mxu0 0.0
    %3471 = vmatprep.subr.mxu0 0.0
    %3472 = vmatpush1.xpose.msra.mxu0 0.0
    %3473 = vmatprep.subr.mxu0 0.0
    %3474 = vmatpush1.xpose.msra.mxu0 0.0
    %3475 = vmatprep.subr.mxu0 0.0
    %3476 = vmatpush1.xpose.msra.mxu0 0.0
    %3477 = vmatprep.subr.mxu0 0.0
    %3478 = vmatpush1.xpose.msra.mxu0 0.0
    %3479 = vmatprep.subr.mxu0 0.0
    %3480 = vmatpush1.xpose.msra.mxu0 0.0
    %3481 = vmatprep.subr.mxu0 0.0
    %3482 = vmatpush1.xpose.msra.mxu0 0.0
    %3483 = vmatprep.subr.mxu0 0.0
    %3484 = vmatpush1.xpose.msra.mxu0 0.0
    %3485 = vmatprep.subr.mxu0 0.0
    %3486 = vmatpush1.xpose.msra.mxu0 0.0
    %3487 = vmatprep.subr.mxu0 0.0
    %3488 = vmatpush1.xpose.msra.mxu0 0.0
    %3489 = vmatprep.subr.mxu0 0.0
    %3490 = vmatpush1.xpose.msra.mxu0 0.0
    %3491 = vmatprep.subr.mxu0 0.0
    %3492 = vmatpush1.xpose.msra.mxu0 0.0
    %3493 = vmatprep.subr.mxu0 0.0
    %3494 = vmatpush1.xpose.msra.mxu0 0.0
    %3495 = vmatprep.subr.mxu0 0.0
    %3496 = vmatpush1.xpose.msra.mxu0 0.0
    %3497 = vmatprep.subr.mxu0 0.0
    %3498 = vmatpush1.xpose.msra.mxu0 0.0
    %3499 = vmatprep.subr.mxu0 0.0
    %3500 = vmatpush1.xpose.msra.mxu0 0.0
    %3501 = vmatprep.subr.mxu0 0.0
    %3502 = vmatpush1.xpose.msra.mxu0 0.0
    %3503 = vmatprep.subr.mxu0 0.0
    %3504 = vmatpush1.xpose.msra.mxu0 0.0
    %3505 = vmatprep.subr.mxu0 0.0
    %3506 = vmatpush1.xpose.msra.mxu0 0.0
    %3507 = vmatprep.subr.mxu0 0.0
    %3508 = vmatpush1.xpose.msra.mxu0 0.0
    %3509 = vmatprep.subr.mxu0 0.0
    %3510 = vmatpush1.xpose.msra.mxu0 0.0
    %3511 = vmatprep.subr.mxu0 0.0
    %3512 = vmatpush1.xpose.msra.mxu0 0.0
    %3513 = vmatprep.subr.mxu0 0.0
    %3514 = vmatpush1.xpose.msra.mxu0 0.0
    %3515 = vmatprep.subr.mxu0 0.0
    %3516 = vmatpush1.xpose.msra.mxu0 0.0
    %3517 = vmatprep.subr.mxu0 0.0
    %3518 = vmatpush1.xpose.msra.mxu0 0.0
    %3519 = vmatprep.subr.mxu0 0.0
    %3520 = vmatpush1.xpose.msra.mxu0 0.0
    %3521 = vmatprep.subr.mxu0 0.0
    %3522 = vmatpush1.xpose.msra.mxu0 0.0
    %3523 = vmatprep.subr.mxu0 0.0
    %3524 = vmatpush1.xpose.msra.mxu0 0.0
    %3525 = vmatprep.subr.mxu0 0.0
    %3526 = vmatpush1.xpose.msra.mxu0 0.0
    %3527 = vmatprep.subr.mxu0 0.0
    %3528 = vmatpush1.xpose.msra.mxu0 0.0
    %3529 = vmatprep.mubr.f32.mxu0 0.0
    %3530 = vmatmul.mubr.f32.gmra.mrb[0].mxu0 %v3457
    %v3531 = vpop.f32.mrb[0].mxu0
    %v3532 = vadd.f32 %v41, %v3531
    %v3533 = vpop.f32.mrb[0].mxu0
    %3534 = vmatprep.mubr.f32.mxu0 0.0
    %3535 = vmatmul.mubr.f32.gmra.mrb[0].mxu0 %v3459
    %v3536 = vpop.f32.mrb[0].mxu0
    %v3537 = vadd.f32 %v42, %v3536
    %v3538 = vpop.f32.mrb[0].mxu0
    %3539 = vdwg.mxu0
    %v3540 = vsel %vm404, %v3532, -inf
    %3541 = vmax.xlane.f32.xlu0 %v3540
    %v3542 = vpop.xlane.xlu0 %3541
    %v3543 = vsel %vm404, %v3537, -inf
    %3544 = vmax.xlane.f32.xlu0 %v3543
    %v3545 = vpop.xlane.xlu0 %3544
    %v3546 = vsub.f32 %v3532, %v3542
    %v3547 = vsub.f32 %v3537, %v3545
    %v3548 = vmul.f32 %v3546, 1.442695
    %v3549 = vpow.pop %v3548
    %v3550 = vmul.f32 %v3547, 1.442695
    %v3551 = vpow.pop %v3550
    %v3552 = vsel %vm404, %v3549, 0.0
    %3553 = vadd.xlane.f32.xlu0 %v3552
    %v3554 = vpop.xlane.xlu0 %3553
    %v3555 = vsel %vm404, %v3551, 0.0
    %3556 = vadd.xlane.f32.xlu0 %v3555
    %v3557 = vpop.xlane.xlu0 %3556
    %v3558 = vrcp.pop %v3554
    %v3559 = vmul.f32 %v3549, %v3558
    %v3560 = vrcp.pop %v3557
    %v3561 = vmul.f32 %v3551, %v3560
    %3562 = vrot.lane.b32.xlu0 %v2851, 104
    %v3563 = vpop.permute.xlu0 %3562
    %3564 = vrot.lane.b32.xlu0 %v2854, 104
    %v3565 = vpop.permute.xlu0 %3564
    %v3569 = vsel %vm404, %v3559, 0
    %v3572 = vsel %vm404, %v3561, 0
    %3574 = vmatprep.subr.mxu0 0.0
    %3575 = vmatpush1.msra.mxu0 %v3563
    %3576 = vmatprep.subr.mxu0 0.0
    %3577 = vmatpush1.msra.mxu0 %v3565
    %3578 = vmatprep.subr.mxu0 0.0
    %3579 = vmatpush1.msra.mxu0 0.0
    %3580 = vmatprep.subr.mxu0 0.0
    %3581 = vmatpush1.msra.mxu0 0.0
    %3582 = vmatprep.subr.mxu0 0.0
    %3583 = vmatpush1.msra.mxu0 0.0
    %3584 = vmatprep.subr.mxu0 0.0
    %3585 = vmatpush1.msra.mxu0 0.0
    %3586 = vmatprep.subr.mxu0 0.0
    %3587 = vmatpush1.msra.mxu0 0.0
    %3588 = vmatprep.subr.mxu0 0.0
    %3589 = vmatpush1.msra.mxu0 0.0
    %3590 = vmatprep.subr.mxu0 0.0
    %3591 = vmatpush1.msra.mxu0 0.0
    %3592 = vmatprep.subr.mxu0 0.0
    %3593 = vmatpush1.msra.mxu0 0.0
    %3594 = vmatprep.subr.mxu0 0.0
    %3595 = vmatpush1.msra.mxu0 0.0
    %3596 = vmatprep.subr.mxu0 0.0
    %3597 = vmatpush1.msra.mxu0 0.0
    %3598 = vmatprep.subr.mxu0 0.0
    %3599 = vmatpush1.msra.mxu0 0.0
    %3600 = vmatprep.subr.mxu0 0.0
    %3601 = vmatpush1.msra.mxu0 0.0
    %3602 = vmatprep.subr.mxu0 0.0
    %3603 = vmatpush1.msra.mxu0 0.0
    %3604 = vmatprep.subr.mxu0 0.0
    %3605 = vmatpush1.msra.mxu0 0.0
    %3606 = vmatprep.subr.mxu0 0.0
    %3607 = vmatpush1.msra.mxu0 0.0
    %3608 = vmatprep.subr.mxu0 0.0
    %3609 = vmatpush1.msra.mxu0 0.0
    %3610 = vmatprep.subr.mxu0 0.0
    %3611 = vmatpush1.msra.mxu0 0.0
    %3612 = vmatprep.subr.mxu0 0.0
    %3613 = vmatpush1.msra.mxu0 0.0
    %3614 = vmatprep.subr.mxu0 0.0
    %3615 = vmatpush1.msra.mxu0 0.0
    %3616 = vmatprep.subr.mxu0 0.0
    %3617 = vmatpush1.msra.mxu0 0.0
    %3618 = vmatprep.subr.mxu0 0.0
    %3619 = vmatpush1.msra.mxu0 0.0
    %3620 = vmatprep.subr.mxu0 0.0
    %3621 = vmatpush1.msra.mxu0 0.0
    %3622 = vmatprep.subr.mxu0 0.0
    %3623 = vmatpush1.msra.mxu0 0.0
    %3624 = vmatprep.subr.mxu0 0.0
    %3625 = vmatpush1.msra.mxu0 0.0
    %3626 = vmatprep.subr.mxu0 0.0
    %3627 = vmatpush1.msra.mxu0 0.0
    %3628 = vmatprep.subr.mxu0 0.0
    %3629 = vmatpush1.msra.mxu0 0.0
    %3630 = vmatprep.subr.mxu0 0.0
    %3631 = vmatpush1.msra.mxu0 0.0
    %3632 = vmatprep.subr.mxu0 0.0
    %3633 = vmatpush1.msra.mxu0 0.0
    %3634 = vmatprep.subr.mxu0 0.0
    %3635 = vmatpush1.msra.mxu0 0.0
    %3636 = vmatprep.subr.mxu0 0.0
    %3637 = vmatpush1.msra.mxu0 0.0
    %3638 = vmatprep.mubr.f32.mxu0 0.0
    %3639 = vmatmul.mubr.f32.gmra.mrb[0].mxu0 %v3569
    %v3640 = vpop.f32.mrb[0].mxu0
    %v3641 = vadd.f32 0.0, %v3640
    %v3642 = vpop.f32.mrb[0].mxu0
    %3643 = vmatprep.mubr.f32.mxu0 0.0
    %3644 = vmatmul.mubr.f32.gmra.mrb[0].mxu0 %v3572
    %v3645 = vpop.f32.mrb[0].mxu0
    %v3646 = vadd.f32 0.0, %v3645
    %v3647 = vpop.f32.mrb[0].mxu0
    %3648 = vdwg.mxu0
    %3651 = vrot.lane.b32.xlu0 %v3241, 8
    %v3652 = vpop.permute.xlu0 %3651
    %3653 = vrot.lane.b32.xlu0 %v3246, 8
    %v3654 = vpop.permute.xlu0 %3653
    %3659 = vrot.lane.b32.xlu0 %v3441, 16
    %v3660 = vpop.permute.xlu0 %3659
    %3661 = vrot.lane.b32.xlu0 %v3446, 16
    %v3662 = vpop.permute.xlu0 %3661
    %3667 = vrot.lane.b32.xlu0 %v3641, 24
    %v3668 = vpop.permute.xlu0 %3667
    %3669 = vrot.lane.b32.xlu0 %v3646, 24
    %v3670 = vpop.permute.xlu0 %3669
    %v3673 = vsel %vm316, %v3039, %v3652
    %v3674 = vsel %vm316, %v3044, %v3654
    %v3675 = vsel %vm404, %v3673, %v3660
    %v3676 = vsel %vm404, %v3674, %v3662
    %v3677 = vsel %vm1138, %v3675, %v3668
    %v3678 = vsel %vm1138, %v3676, %v3670
    %v3679 = vpack.c.bf16 %v3678, %v3677
    %v3680 = vld [vmem:[#allocation2 + $0x120] sm:$0xf]
    %v3681 = vld [vmem:[#allocation2 + $0x124] sm:$0xf]
    %v3682 = vld [vmem:[#allocation2 + $0x128] sm:$0xf]
    %v3683 = vld [vmem:[#allocation2 + $0x12c] sm:$0xf]
    %v3684 = vld [vmem:[%s6 + $0x8] sm:$0x1]
    %v3685 = vlaneseq
    %v3686 = vshrl.u32 %v3685, 7
    %v3687 = vsub.s32 0, %v3686
    %v3688 = vrot.slane %v3684, %v3687
    %v3693 = vunpack.c.l.b16 %v3680
    %v3694 = vunpack.c.l.b16 %v3681
    %v3695 = vunpack.c.l.b16 %v3682
    %v3696 = vunpack.c.l.b16 %v3683
    %v3697 = vpack.c.b16 %v3694, %v3693
    %v3698 = vpack.c.b16 %v3696, %v3695
    %v3702 = vsel %vm157, %v3679, 0
    %3704 = vmatprep.subr.bf16.mxu0 0
    %3705 = vmatpush1.bf16.msra.mxu0 %v3697
    %3706 = vmatprep.subr.bf16.mxu0 0
    %3707 = vmatpush1.bf16.msra.mxu0 %v3698
    %3708 = vmatprep.subr.bf16.mxu0 0
    %3709 = vmatpush1.bf16.msra.mxu0 0
    %3710 = vmatprep.subr.bf16.mxu0 0
    %3711 = vmatpush1.bf16.msra.mxu0 0
    %3712 = vmatprep.subr.bf16.mxu0 0
    %3713 = vmatpush1.bf16.msra.mxu0 0
    %3714 = vmatprep.subr.bf16.mxu0 0
    %3715 = vmatpush1.bf16.msra.mxu0 0
    %3716 = vmatprep.subr.bf16.mxu0 0
    %3717 = vmatpush1.bf16.msra.mxu0 0
    %3718 = vmatprep.subr.bf16.mxu0 0
    %3719 = vmatpush1.bf16.msra.mxu0 0
    %3720 = vmatprep.subr.bf16.mxu0 0
    %3721 = vmatpush1.bf16.msra.mxu0 0
    %3722 = vmatprep.subr.bf16.mxu0 0
    %3723 = vmatpush1.bf16.msra.mxu0 0
    %3724 = vmatprep.subr.bf16.mxu0 0
    %3725 = vmatpush1.bf16.msra.mxu0 0
    %3726 = vmatprep.subr.bf16.mxu0 0
    %3727 = vmatpush1.bf16.msra.mxu0 0
    %3728 = vmatprep.subr.bf16.mxu0 0
    %3729 = vmatpush1.bf16.msra.mxu0 0
    %3730 = vmatprep.subr.bf16.mxu0 0
    %3731 = vmatpush1.bf16.msra.mxu0 0
    %3732 = vmatprep.subr.bf16.mxu0 0
    %3733 = vmatpush1.bf16.msra.mxu0 0
    %3734 = vmatprep.subr.bf16.mxu0 0
    %3735 = vmatpush1.bf16.msra.mxu0 0
    %3736 = vmatprep.mubr.bf16.mxu0 0
    %3737 = vmatmul.mubr.bf16.gmra.mrb[0].mxu0 %v3702
    %v3738 = vpop.f32.mrb[0].mxu0
    %v3739 = vadd.f32 %v3688, %v3738
    %v3740 = vpop.f32.mrb[0].mxu0
    %v3741 = vpop.f32.mrb[0].mxu0
    %v3742 = vadd.f32 %v3688, %v3741
    %v3743 = vpop.f32.mrb[0].mxu0
    %3744 = vdwg.mxu0
    %v3745 = vsel %vm157, %v3739, 0.0
    %3746 = vadd.xlane.f32.xlu0 %v3745
    %v3747 = vpop.xlane.xlu0 %3746
    %v3748 = vsel %vm157, %v3742, 0.0
    %3749 = vadd.xlane.f32.xlu0 %v3748
    %v3750 = vpop.xlane.xlu0 %3749
    %v3751 = vmul.f32 %v3747, %v1213
    %v3752 = vmul.f32 %v3750, %v1213
    %v3753 = vsub.f32 %v3739, %v3751
    %v3754 = vsub.f32 %v3742, %v3752
    %v3755 = vmul.f32 %v3753, %v3753
    %v3756 = vmul.f32 %v3754, %v3754
    %v3757 = vsel %vm157, %v3755, 0.0
    %3758 = vadd.xlane.f32.xlu0 %v3757
    %v3759 = vpop.xlane.xlu0 %3758
    %v3760 = vsel %vm157, %v3756, 0.0
    %3761 = vadd.xlane.f32.xlu0 %v3760
    %v3762 = vpop.xlane.xlu0 %3761
    %v3763 = vmul.f32 %v3759, 0.032258064
    %v3764 = vmul.f32 %v3762, 0.032258064
    %v3765 = vld [vmem:[%s6 + $0xd] sm:$0x1]
    %s3767 = vtos %v3765
    %v3768 = vstv %s3767
    %v3770 = vmul.f32 %v3768, %v3753
    %v3771 = vmul.f32 %v3768, %v3754
    %v3772 = vadd.f32 %v3763, 1e-06
    %v3773 = vadd.f32 %v3764, 1e-06
    %v3774 = vrsqrt.pop %v3772
    %v3775 = vrsqrt.pop %v3773
    %v3776 = vmul.f32 %v3770, %v3774
    %v3777 = vmul.f32 %v3771, %v3775
    %v3778 = vld [vmem:[%s6 + $0xe] sm:$0x1]
    %s3780 = vtos %v3778
    %v3781 = vstv %s3780
    %v3783 = vadd.f32 %v3776, %v3781
    %v3784 = vadd.f32 %v3777, %v3781
    %v3785 = vadd.f32 %v2676, %v3783
    %v3786 = vadd.f32 %v2677, %v3784
    %v3787 = vpack.c.bf16 %v3786, %v3785
    %v3788 = vld [vmem:[#allocation2 + $0x130] sm:$0xf]
    %v3789 = vld [vmem:[#allocation2 + $0x134] sm:$0xf]
    %v3790 = vld [vmem:[#allocation2 + $0x138] sm:$0xf]
    %v3791 = vld [vmem:[#allocation2 + $0x13c] sm:$0xf]
    %v3792 = vld [vmem:[%s6 + $0x9] sm:$0x1]
    %v3793 = vlaneseq
    %v3794 = vshrl.u32 %v3793, 7
    %v3795 = vsub.s32 0, %v3794
    %v3796 = vrot.slane %v3792, %v3795
    %v3801 = vunpack.c.l.b16 %v3788
    %v3802 = vunpack.c.l.b16 %v3789
    %v3803 = vunpack.c.l.b16 %v3790
    %v3804 = vunpack.c.l.b16 %v3791
    %v3805 = vpack.c.b16 %v3802, %v3801
    %v3806 = vpack.c.b16 %v3804, %v3803
    %v3810 = vsel %vm157, %v3787, 0
    %3812 = vmatprep.subr.bf16.mxu0 0
    %3813 = vmatpush1.bf16.msra.mxu0 %v3805
    %3814 = vmatprep.subr.bf16.mxu0 0
    %3815 = vmatpush1.bf16.msra.mxu0 %v3806
    %3816 = vmatprep.subr.bf16.mxu0 0
    %3817 = vmatpush1.bf16.msra.mxu0 0
    %3818 = vmatprep.subr.bf16.mxu0 0
    %3819 = vmatpush1.bf16.msra.mxu0 0
    %3820 = vmatprep.subr.bf16.mxu0 0
    %3821 = vmatpush1.bf16.msra.mxu0 0
    %3822 = vmatprep.subr.bf16.mxu0 0
    %3823 = vmatpush1.bf16.msra.mxu0 0
    %3824 = vmatprep.subr.bf16.mxu0 0
    %3825 = vmatpush1.bf16.msra.mxu0 0
    %3826 = vmatprep.subr.bf16.mxu0 0
    %3827 = vmatpush1.bf16.msra.mxu0 0
    %3828 = vmatprep.subr.bf16.mxu0 0
    %3829 = vmatpush1.bf16.msra.mxu0 0
    %3830 = vmatprep.subr.bf16.mxu0 0
    %3831 = vmatpush1.bf16.msra.mxu0 0
    %3832 = vmatprep.subr.bf16.mxu0 0
    %3833 = vmatpush1.bf16.msra.mxu0 0
    %3834 = vmatprep.subr.bf16.mxu0 0
    %3835 = vmatpush1.bf16.msra.mxu0 0
    %3836 = vmatprep.subr.bf16.mxu0 0
    %3837 = vmatpush1.bf16.msra.mxu0 0
    %3838 = vmatprep.subr.bf16.mxu0 0
    %3839 = vmatpush1.bf16.msra.mxu0 0
    %3840 = vmatprep.subr.bf16.mxu0 0
    %3841 = vmatpush1.bf16.msra.mxu0 0
    %3842 = vmatprep.subr.bf16.mxu0 0
    %3843 = vmatpush1.bf16.msra.mxu0 0
    %3844 = vmatprep.mubr.bf16.mxu0 0
    %3845 = vmatmul.mubr.bf16.gmra.mrb[0].mxu0 %v3810
    %v3846 = vpop.f32.mrb[0].mxu0
    %v3847 = vadd.f32 %v3796, %v3846
    %v3848 = vpop.f32.mrb[0].mxu0
    %v3849 = vpop.f32.mrb[0].mxu0
    %v3850 = vadd.f32 %v3796, %v3849
    %v3851 = vpop.f32.mrb[0].mxu0
    %3852 = vdwg.mxu0
    %v3853 = vmax.f32 %v3847, 0.0
    %v3854 = vmax.f32 %v3850, 0.0
    %v3855 = vpack.c.bf16 %v3854, %v3853
    %v3856 = vld [vmem:[#allocation2 + $0x140] sm:$0xf]
    %v3857 = vld [vmem:[#allocation2 + $0x144] sm:$0xf]
    %v3858 = vld [vmem:[#allocation2 + $0x148] sm:$0xf]
    %v3859 = vld [vmem:[#allocation2 + $0x14c] sm:$0xf]
    %v3860 = vld [vmem:[#allocation2 + $0x150] sm:$0xf]
    %v3861 = vld [vmem:[#allocation2 + $0x154] sm:$0xf]
    %v3862 = vld [vmem:[#allocation2 + $0x158] sm:$0xf]
    %v3863 = vld [vmem:[#allocation2 + $0x15c] sm:$0xf]
    %v3864 = vld [vmem:[%s6 + $0xa] sm:$0x1]
    %v3865 = vlaneseq
    %v3866 = vshrl.u32 %v3865, 7
    %v3867 = vsub.s32 0, %v3866
    %v3868 = vrot.slane %v3864, %v3867
    %v3877 = vunpack.c.l.b16 %v3856
    %v3878 = vunpack.c.l.b16 %v3857
    %v3879 = vunpack.c.l.b16 %v3858
    %v3880 = vunpack.c.l.b16 %v3859
    %v3881 = vunpack.c.l.b16 %v3860
    %v3882 = vunpack.c.l.b16 %v3861
    %v3883 = vunpack.c.l.b16 %v3862
    %v3884 = vunpack.c.l.b16 %v3863
    %v3885 = vpack.c.b16 %v3878, %v3877
    %v3886 = vpack.c.b16 %v3880, %v3879
    %v3887 = vpack.c.b16 %v3882, %v3881
    %v3888 = vpack.c.b16 %v3884, %v3883
    %v3894 = vsel %vm95, %v3855, 0
    %3896 = vmatprep.subr.bf16.mxu0 0
    %3897 = vmatpush1.bf16.msra.mxu0 %v3885
    %3898 = vmatprep.subr.bf16.mxu0 0
    %3899 = vmatpush1.bf16.msra.mxu0 %v3886
    %3900 = vmatprep.subr.bf16.mxu0 0
    %3901 = vmatpush1.bf16.msra.mxu0 %v3887
    %3902 = vmatprep.subr.bf16.mxu0 0
    %3903 = vmatpush1.bf16.msra.mxu0 %v3888
    %3904 = vmatprep.subr.bf16.mxu0 0
    %3905 = vmatpush1.bf16.msra.mxu0 0
    %3906 = vmatprep.subr.bf16.mxu0 0
    %3907 = vmatpush1.bf16.msra.mxu0 0
    %3908 = vmatprep.subr.bf16.mxu0 0
    %3909 = vmatpush1.bf16.msra.mxu0 0
    %3910 = vmatprep.subr.bf16.mxu0 0
    %3911 = vmatpush1.bf16.msra.mxu0 0
    %3912 = vmatprep.subr.bf16.mxu0 0
    %3913 = vmatpush1.bf16.msra.mxu0 0
    %3914 = vmatprep.subr.bf16.mxu0 0
    %3915 = vmatpush1.bf16.msra.mxu0 0
    %3916 = vmatprep.subr.bf16.mxu0 0
    %3917 = vmatpush1.bf16.msra.mxu0 0
    %3918 = vmatprep.subr.bf16.mxu0 0
    %3919 = vmatpush1.bf16.msra.mxu0 0
    %3920 = vmatprep.subr.bf16.mxu0 0
    %3921 = vmatpush1.bf16.msra.mxu0 0
    %3922 = vmatprep.subr.bf16.mxu0 0
    %3923 = vmatpush1.bf16.msra.mxu0 0
    %3924 = vmatprep.subr.bf16.mxu0 0
    %3925 = vmatpush1.bf16.msra.mxu0 0
    %3926 = vmatprep.subr.bf16.mxu0 0
    %3927 = vmatpush1.bf16.msra.mxu0 0
    %3928 = vmatprep.mubr.bf16.mxu0 0
    %3929 = vmatmul.mubr.bf16.gmra.mrb[0].mxu0 %v3894
    %v3930 = vpop.f32.mrb[0].mxu0
    %v3931 = vadd.f32 %v3868, %v3930
    %v3932 = vpop.f32.mrb[0].mxu0
    %v3933 = vpop.f32.mrb[0].mxu0
    %v3934 = vadd.f32 %v3868, %v3933
    %v3935 = vpop.f32.mrb[0].mxu0
    %3936 = vdwg.mxu0
    %v3937 = vsel %vm157, %v3931, 0.0
    %3938 = vadd.xlane.f32.xlu0 %v3937
    %v3939 = vpop.xlane.xlu0 %3938
    %v3940 = vsel %vm157, %v3934, 0.0
    %3941 = vadd.xlane.f32.xlu0 %v3940
    %v3942 = vpop.xlane.xlu0 %3941
    %v3943 = vmul.f32 %v3939, %v1213
    %v3944 = vmul.f32 %v3942, %v1213
    %v3945 = vsub.f32 %v3931, %v3943
    %v3946 = vsub.f32 %v3934, %v3944
    %v3947 = vmul.f32 %v3945, %v3945
    %v3948 = vmul.f32 %v3946, %v3946
    %v3949 = vsel %vm157, %v3947, 0.0
    %3950 = vadd.xlane.f32.xlu0 %v3949
    %v3951 = vpop.xlane.xlu0 %3950
    %v3952 = vsel %vm157, %v3948, 0.0
    %3953 = vadd.xlane.f32.xlu0 %v3952
    %v3954 = vpop.xlane.xlu0 %3953
    %v3955 = vmul.f32 %v3951, 0.032258064
    %v3956 = vmul.f32 %v3954, 0.032258064
    %v3957 = vld [vmem:[%s6 + $0xf] sm:$0x1]
    %s3959 = vtos %v3957
    %v3960 = vstv %s3959
    %v3962 = vmul.f32 %v3960, %v3945
    %v3963 = vmul.f32 %v3960, %v3946
    %v3964 = vadd.f32 %v3955, 1e-06
    %v3965 = vadd.f32 %v3956, 1e-06
    %v3966 = vrsqrt.pop %v3964
    %v3967 = vrsqrt.pop %v3965
    %v3968 = vmul.f32 %v3962, %v3966
    %v3969 = vmul.f32 %v3963, %v3967
    %v3970 = vld [vmem:[%s6 + $0x10] sm:$0x1]
    %s3972 = vtos %v3970
    %v3973 = vstv %s3972
    %v3975 = vadd.f32 %v3968, %v3973
    %v3976 = vadd.f32 %v3969, %v3973
    %v3977 = vadd.f32 %v3785, %v3975
    %v3978 = vadd.f32 %v3786, %v3976
    %v3979 = vsel %vm157, %v3977, 0.0
    %3980 = vadd.xlane.f32.xlu0 %v3979
    %v3981 = vpop.xlane.xlu0 %3980
    %v3982 = vsel %vm157, %v3978, 0.0
    %3983 = vadd.xlane.f32.xlu0 %v3982
    %v3984 = vpop.xlane.xlu0 %3983
    %v3985 = vmul.f32 %v3981, %v1213
    %v3986 = vmul.f32 %v3984, %v1213
    %v3987 = vsub.f32 %v3977, %v3985
    %v3988 = vsub.f32 %v3978, %v3986
    %v3989 = vmul.f32 %v3987, %v3987
    %v3990 = vmul.f32 %v3988, %v3988
    %v3991 = vsel %vm157, %v3989, 0.0
    %3992 = vadd.xlane.f32.xlu0 %v3991
    %v3993 = vpop.xlane.xlu0 %3992
    %v3994 = vsel %vm157, %v3990, 0.0
    %3995 = vadd.xlane.f32.xlu0 %v3994
    %v3996 = vpop.xlane.xlu0 %3995
    %v3997 = vmul.f32 %v3993, 0.032258064
    %v3998 = vmul.f32 %v3996, 0.032258064
    %v3999 = vld [vmem:[%s6 + $0x13] sm:$0x1]
    %s4001 = vtos %v3999
    %v4002 = vstv %s4001
    %v4004 = vmul.f32 %v4002, %v3987
    %v4005 = vmul.f32 %v4002, %v3988
    %v4006 = vadd.f32 %v3997, 1e-06
    %v4007 = vadd.f32 %v3998, 1e-06
    %v4008 = vrsqrt.pop %v4006
    %v4009 = vrsqrt.pop %v4007
    %v4010 = vmul.f32 %v4004, %v4008
    %v4011 = vmul.f32 %v4005, %v4009
    %v4012 = vld [vmem:[%s6 + $0x14] sm:$0x1]
    %s4014 = vtos %v4012
    %v4015 = vstv %s4014
    %v4017 = vadd.f32 %v4010, %v4015
    %v4018 = vadd.f32 %v4011, %v4015
    %v4019 = vpack.c.bf16 %v4018, %v4017
    %v4020 = vld [vmem:[#allocation2 + $0x160] sm:$0xf]
    %v4021 = vld [vmem:[#allocation2 + $0x164] sm:$0xf]
    %v4022 = vld [vmem:[#allocation2 + $0x168] sm:$0xf]
    %v4023 = vld [vmem:[#allocation2 + $0x16c] sm:$0xf]
    %v4024 = vld [vmem:[%s6 + $0x15] sm:$0x1]
    %v4025 = vlaneseq
    %v4026 = vshrl.u32 %v4025, 7
    %v4027 = vsub.s32 0, %v4026
    %v4028 = vrot.slane %v4024, %v4027
    %v4033 = vunpack.c.l.b16 %v4020
    %v4034 = vunpack.c.l.b16 %v4021
    %v4035 = vunpack.c.l.b16 %v4022
    %v4036 = vunpack.c.l.b16 %v4023
    %v4037 = vpack.c.b16 %v4034, %v4033
    %v4038 = vpack.c.b16 %v4036, %v4035
    %v4042 = vsel %vm157, %v4019, 0
    %4044 = vmatprep.subr.bf16.mxu0 0
    %4045 = vmatpush1.bf16.msra.mxu0 %v4037
    %4046 = vmatprep.subr.bf16.mxu0 0
    %4047 = vmatpush1.bf16.msra.mxu0 %v4038
    %4048 = vmatprep.subr.bf16.mxu0 0
    %4049 = vmatpush1.bf16.msra.mxu0 0
    %4050 = vmatprep.subr.bf16.mxu0 0
    %4051 = vmatpush1.bf16.msra.mxu0 0
    %4052 = vmatprep.subr.bf16.mxu0 0
    %4053 = vmatpush1.bf16.msra.mxu0 0
    %4054 = vmatprep.subr.bf16.mxu0 0
    %4055 = vmatpush1.bf16.msra.mxu0 0
    %4056 = vmatprep.subr.bf16.mxu0 0
    %4057 = vmatpush1.bf16.msra.mxu0 0
    %4058 = vmatprep.subr.bf16.mxu0 0
    %4059 = vmatpush1.bf16.msra.mxu0 0
    %4060 = vmatprep.subr.bf16.mxu0 0
    %4061 = vmatpush1.bf16.msra.mxu0 0
    %4062 = vmatprep.subr.bf16.mxu0 0
    %4063 = vmatpush1.bf16.msra.mxu0 0
    %4064 = vmatprep.subr.bf16.mxu0 0
    %4065 = vmatpush1.bf16.msra.mxu0 0
    %4066 = vmatprep.subr.bf16.mxu0 0
    %4067 = vmatpush1.bf16.msra.mxu0 0
    %4068 = vmatprep.subr.bf16.mxu0 0
    %4069 = vmatpush1.bf16.msra.mxu0 0
    %4070 = vmatprep.subr.bf16.mxu0 0
    %4071 = vmatpush1.bf16.msra.mxu0 0
    %4072 = vmatprep.subr.bf16.mxu0 0
    %4073 = vmatpush1.bf16.msra.mxu0 0
    %4074 = vmatprep.subr.bf16.mxu0 0
    %4075 = vmatpush1.bf16.msra.mxu0 0
    %4076 = vmatprep.mubr.bf16.mxu0 0
    %4077 = vmatmul.mubr.bf16.gmra.mrb[0].mxu0 %v4042
    %v4078 = vpop.f32.mrb[0].mxu0
    %v4079 = vadd.f32 %v4028, %v4078
    %v4080 = vpop.f32.mrb[0].mxu0
    %v4081 = vpop.f32.mrb[0].mxu0
    %v4082 = vadd.f32 %v4028, %v4081
    %v4083 = vpop.f32.mrb[0].mxu0
    %4084 = vdwg.mxu0
    %4085 = vmax.xlane.f32.xlu0 %v4079
    %v4086 = vpop.xlane.xlu0 %4085
    %4087 = vmax.xlane.f32.xlu0 %v4082
    %v4088 = vpop.xlane.xlu0 %4087
    %v4089 = vsub.f32 %v4079, %v4086
    %v4090 = vsub.f32 %v4082, %v4088
    %v4091 = vmul.f32 %v4089, 1.442695
    %v4092 = vpow.pop %v4091
    %v4093 = vmul.f32 %v4090, 1.442695
    %v4094 = vpow.pop %v4093
    %4095 = vadd.xlane.f32.xlu0 %v4092
    %v4096 = vpop.xlane.xlu0 %4095
    %4097 = vadd.xlane.f32.xlu0 %v4094
    %v4098 = vpop.xlane.xlu0 %4097
    %v4099 = vlog2.pop %v4096
    %v4100 = vmul.f32 %v4099, 0.6931472
    %v4101 = vlog2.pop %v4098
    %v4102 = vmul.f32 %v4101, 0.6931472
    %v4103 = vadd.f32 %v4086, %v4100
    %v4104 = vadd.f32 %v4088, %v4102
    %v4105 = vsub.f32 %v4079, %v4103
    %v4106 = vsub.f32 %v4082, %v4104
    %4107 = vst [vmem:[%s7] sm:$0xff] %v4105
    %4108 = vst [vmem:[%s7 + $0x8] sm:$0xff] %v4106
    // Predicated region
    $region34: #{forward.1} parent=1 // pred_check
      _
    $region35: #{forward.1} parent=1 // pred_check_branch
      %4110 = sbr.rel (0) target = $region37
    $region36: #{forward.1} parent=1 // pred_region
      _
    $region37: #{forward.1} parent=1 // pred_fallthru
      _
    // Predicated region
    $region38: #{forward.1} parent=1 // pred_check
      _
    $region39: #{forward.1} parent=1 // pred_check_branch
      %4112 = sbr.rel (0) target = $region41
    $region40: #{forward.1} parent=1 // pred_region
      _
    $region41: #{forward.1} parent=1 // pred_fallthru
      _
    %4113 = vsyncpa [#allocation3], 1

</llo_original>
